<compile_context>
chip_gen: v7x
topology: tpu7x:2x2x1
jax: 0.10.0
libtpu: 0.0.40
codegen_flags: <defaults>
</compile_context>

<pallas_src>
import jax
import jax.numpy as jnp
from jax.experimental import pallas as pl
from jax.experimental.pallas import tpu as pltpu

N_DIM = 3
XT_COLS = 8            # packed input columns: [x0, x1, x2, t, 0, 0, 0, 0]
TE_HID = 128           # time-embed hidden, zero-padded 64 -> 128 (lane-dense)
OUT_PAD = 128          # lane-dense padded width of the final layer

# Offsets into the packed bias slab [1, 1792] (all multiples of 128).
_B1, _B2, _B3, _B4, _B5, _B6, _B7, _BEND = 0, 128, 256, 384, 896, 1408, 1664, 1792


def _round_up(n, m):
    return ((n + m - 1) // m) * m


# Packed-operand unpackers (work on both Refs and arrays; all slice boundaries
# are multiples of 128 lanes, so loads stay unmasked).
def _unpack_wxt(w):        # [8, 640]   -> w1p [8,128], w4x [8,512]
    return w[:, 0:128], w[:, 128:640]


def _unpack_w128(w):       # [128, 768] -> w2p [128,128], w3 [128,128], w4t [128,512]
    return w[:, 0:128], w[:, 128:256], w[:, 256:768]


def _unpack_w512(w):       # [512, 768] -> w5 [512,512], w6 [512,256]
    return w[:, 0:512], w[:, 512:768]


def _unpack_bias(b):       # [1, 1792]  -> b1..b7
    return (b[:, _B1:_B2], b[:, _B2:_B3], b[:, _B3:_B4], b[:, _B4:_B5],
            b[:, _B5:_B6], b[:, _B6:_B7], b[:, _B7:_BEND])


def ddpm_kernel(xt_ref, wxt_ref, w128_ref, w512_ref, w7_ref, bias_ref, out_ref):
    bf16 = jnp.bfloat16

    xt = xt_ref[...].astype(bf16)                        # [TB, 8]
    w1, w4x = _unpack_wxt(wxt_ref)
    w2, w3, w4t = _unpack_w128(w128_ref)
    w5, w6 = _unpack_w512(w512_ref)
    b1, b2, b3, b4, b5, b6, b7 = _unpack_bias(bias_ref)

    def dot(a, b):
        return jnp.dot(a, b, preferred_element_type=jnp.float32)

    def relu_bf16(v):
        # relu∘cast == cast∘relu for bf16: do the ReLU in bf16 so it processes
        # 2x elements per vreg and no separate f32->bf16 convert pass remains.
        return jnp.maximum(v.astype(bf16), 0)

    # ---- time_embed: Linear(1,64) -> ReLU -> Linear(64,128) -> ReLU -> Linear(128,128)
    # (hidden zero-padded to 128 lanes; the K=8 first layer runs on the MXU).
    h = relu_bf16(dot(xt, w1) + b1)                      # [TB, 128]
    h = relu_bf16(dot(h, w2) + b2)                       # [TB, 128]
    temb = (dot(h, w3) + b3).astype(bf16)                # [TB, 128]

    # ---- model: Linear(n_dim+128, 512) on cat([x, temb]) == x@W4x + temb@W4t + b4
    h = relu_bf16(dot(xt, w4x) + dot(temb, w4t) + b4)    # [TB, 512]
    h = relu_bf16(dot(h, w5) + b5)                       # [TB, 512]
    h = relu_bf16(dot(h, w6) + b6)                       # [TB, 256]
    out = dot(h, w7_ref[...]) + b7                       # [TB, 128] f32
    out_ref[...] = out.astype(out_ref.dtype)             # bf16 store (half writeback)


def ddpm_forward(x, t, params, *, block_b=512):
    """x: [B, n_dim] f32, t: [B] (any numeric dtype) -> [B, n_dim] f32."""
    B = x.shape[0]
    x = x.astype(jnp.float32)
    t2d = t.astype(jnp.float32).reshape(B, 1)            # t.unsqueeze(-1).float()
    pad = jnp.zeros((B, XT_COLS - N_DIM - 1), jnp.float32)
    xt = jnp.concatenate([x, t2d, pad], axis=1)          # [B, 8]

    # Batch tile: multiple of 8 sublanes; force >= 2 grid steps whenever B
    # allows so the "parallel" axis can shard across v7x's two TensorCores.
    B8 = _round_up(B, 8)
    TB = B8 if B8 < 16 else min(block_b, _round_up(B8 // 2, 8))
    B_pad = _round_up(B, TB)
    if B_pad != B:
        xt = jnp.pad(xt, ((0, B_pad - B), (0, 0)))

    weights = (params["w_xt"], params["w_128"], params["w_512"],
               params["w7"], params["bias"])

    def const_spec(a):        # DMA'd HBM->VMEM once, resident across the grid
        return pl.BlockSpec(a.shape, lambda i: (0, 0))

    in_specs = [pl.BlockSpec((TB, XT_COLS), lambda i: (i, 0))]
    in_specs += [const_spec(w) for w in weights]

    # Advisory cost estimate (per-row MACs * 2, weight + activation bytes).
    macs_per_row = (XT_COLS * TE_HID + TE_HID * 128 + 128 * 128
                    + XT_COLS * 512 + 128 * 512 + 512 * 512
                    + 512 * 256 + 256 * OUT_PAD)
    weight_bytes = sum(int(w.size) * w.dtype.itemsize for w in weights)
    bytes_accessed = weight_bytes + int(xt.size) * 4 + int(B_pad * OUT_PAD) * 2

    out = pl.pallas_call(
        ddpm_kernel,
        out_shape=jax.ShapeDtypeStruct((B_pad, OUT_PAD), jnp.bfloat16),
        grid=(B_pad // TB,),
        in_specs=in_specs,
        out_specs=pl.BlockSpec((TB, OUT_PAD), lambda i: (i, 0)),
        compiler_params=pltpu.CompilerParams(
            dimension_semantics=("parallel",),
            vmem_limit_bytes=32 << 20),
        cost_estimate=pl.CostEstimate(
            flops=2 * macs_per_row * B_pad,
            transcendentals=0,
            bytes_accessed=bytes_accessed),
    )(xt, *weights)

    return out[:B, :N_DIM].astype(jnp.float32)


def init_params(key, n_dim=N_DIM):
    """torch.nn.Linear-style U(-1/sqrt(fan_in), +) init, packed for the kernel."""
    def linear(key, fan_in, fan_out):
        kw, kb = jax.random.split(key)
        bound = 1.0 / jnp.sqrt(fan_in)
        w = jax.random.uniform(kw, (fan_in, fan_out), jnp.float32, -bound, bound)
        b = jax.random.uniform(kb, (fan_out,), jnp.float32, -bound, bound)
        return w, b

    keys = jax.random.split(key, 7)
    w1, b1 = linear(keys[0], 1, 64)              # time_embed[0]
    w2, b2 = linear(keys[1], 64, 128)            # time_embed[2]
    w3, b3 = linear(keys[2], 128, 128)           # time_embed[4]
    w4, b4 = linear(keys[3], n_dim + 128, 512)   # model[0]   (input = [x | temb])
    w5, b5 = linear(keys[4], 512, 512)           # model[2]
    w6, b6 = linear(keys[5], 512, 256)           # model[4]
    w7, b7 = linear(keys[6], 256, n_dim)         # model[6]

    # Lane-dense zero padding: time-embed hidden 64 -> 128, final output
    # n_dim -> 128; the tiny-K inputs (t and x) share one 8-column slab whose
    # unused rows are zero so both tiny contractions can run on the MXU.
    w1p = jnp.zeros((XT_COLS, TE_HID), jnp.float32).at[n_dim, :64].set(w1[0])
    b1p = jnp.zeros((TE_HID,), jnp.float32).at[:64].set(b1)
    w2p = jnp.zeros((TE_HID, 128), jnp.float32).at[:64, :].set(w2)
    w4x = jnp.zeros((XT_COLS, 512), jnp.float32).at[:n_dim, :].set(w4[:n_dim])
    w4t = w4[n_dim:]
    w7p = jnp.zeros((256, OUT_PAD), jnp.float32).at[:, :n_dim].set(w7)
    b7p = jnp.zeros((OUT_PAD,), jnp.float32).at[:n_dim].set(b7)

    bf16 = lambda a: a.astype(jnp.bfloat16)
    return {
        "w_xt": bf16(jnp.concatenate([w1p, w4x], axis=1)),        # [8, 640]
        "w_128": bf16(jnp.concatenate([w2p, w3, w4t], axis=1)),   # [128, 768]
        "w_512": bf16(jnp.concatenate([w5, w6], axis=1)),         # [512, 768]
        "w7": bf16(w7p),                                          # [256, 128]
        "bias": jnp.concatenate([b1p, b2, b3, b4, b5, b6, b7p]).reshape(1, -1),
    }


def ddpm_reference(x, t, params):
    """Pure-JAX f32 reference (bf16 weights upcast) for correctness checking."""
    f32 = lambda a: a.astype(jnp.float32)
    w1, w4x = _unpack_wxt(f32(params["w_xt"]))
    w2, w3, w4t = _unpack_w128(f32(params["w_128"]))
    w5, w6 = _unpack_w512(f32(params["w_512"]))
    w7 = f32(params["w7"])
    b1, b2, b3, b4, b5, b6, b7 = _unpack_bias(params["bias"])

    B = x.shape[0]
    t2d = t.astype(jnp.float32).reshape(B, 1)
    xt = jnp.concatenate(
        [x.astype(jnp.float32), t2d,
         jnp.zeros((B, XT_COLS - N_DIM - 1), jnp.float32)], axis=1)

    h = jax.nn.relu(xt @ w1 + b1)
    h = jax.nn.relu(h @ w2 + b2)
    temb = h @ w3 + b3
    h = jax.nn.relu(xt @ w4x + temb @ w4t + b4)
    h = jax.nn.relu(h @ w5 + b5)
    h = jax.nn.relu(h @ w6 + b6)
    out = h @ w7 + b7
    return out[:, :N_DIM]


if __name__ == "__main__":
    key = jax.random.PRNGKey(0)
    kp, kx, kt = jax.random.split(key, 3)

    B = 512                     # exercises a 2-tile batch grid (TB = 256)
    params = init_params(kp, N_DIM)
    x = jax.random.normal(kx, (B, N_DIM), jnp.float32)
    t = jax.random.randint(kt, (B,), 0, 200, jnp.int32)   # timesteps in [0, n_steps)

    out = jax.block_until_ready(ddpm_forward(x, t, params))
    ref = ddpm_reference(x, t, params)

    assert out.shape == (B, N_DIM)
    # Kernel rounds activations (and the stored output) to bf16; compare
    # against the f32-activation reference with a max-normalized error bound.
    rel_err = float(jnp.max(jnp.abs(out - ref)) / (jnp.max(jnp.abs(ref)) + 1e-6))
    assert rel_err < 3e-2, f"mismatch vs reference: rel_err={rel_err}"

    print("KERNEL_OK")
</pallas_src>

<mosaic_0001>
module attributes {stable_mosaic.version = 11 : i64} {
  func.func @ddpm_kernel(%arg0: i32, %arg1: memref<256x8xf32, #tpu.memory_space<vmem>>, %arg2: memref<8x640xbf16, #tpu.memory_space<vmem>>, %arg3: memref<128x768xbf16, #tpu.memory_space<vmem>>, %arg4: memref<512x768xbf16, #tpu.memory_space<vmem>>, %arg5: memref<256x128xbf16, #tpu.memory_space<vmem>>, %arg6: memref<1x1792xf32, #tpu.memory_space<vmem>>, %arg7: memref<256x128xbf16, #tpu.memory_space<vmem>>) attributes {dimension_semantics = [#tpu.dimension_semantics<parallel>], iteration_bounds = array<i64: 2>, scalar_prefetch = 0 : i64, scratch_operands = 0 : i64, tpu.core_type = #tpu.core_type<tc>, window_params = [{transform_indices = @transform_0, window_bounds = array<i64: 256, 8>}, {pipeline_mode = #tpu.pipeline_mode<synchronous>, transform_indices = @transform_1, window_bounds = array<i64: 8, 640>}, {pipeline_mode = #tpu.pipeline_mode<synchronous>, transform_indices = @transform_2, window_bounds = array<i64: 128, 768>}, {pipeline_mode = #tpu.pipeline_mode<synchronous>, transform_indices = @transform_3, window_bounds = array<i64: 512, 768>}, {pipeline_mode = #tpu.pipeline_mode<synchronous>, transform_indices = @transform_4, window_bounds = array<i64: 256, 128>}, {pipeline_mode = #tpu.pipeline_mode<synchronous>, transform_indices = @transform_5, window_bounds = array<i64: 1, 1792>}, {transform_indices = @transform_6, window_bounds = array<i64: 256, 128>}]} {
    %c0 = arith.constant 0 : index
    %c0_0 = arith.constant 0 : index
    %0 = vector.load %arg1[%c0, %c0_0] : memref<256x8xf32, #tpu.memory_space<vmem>>, vector<256x8xf32>
    %1 = arith.truncf %0 : vector<256x8xf32> to vector<256x8xbf16>
    %c0_1 = arith.constant 0 : index
    %c0_2 = arith.constant 0 : index
    %2 = vector.load %arg2[%c0_1, %c0_2] : memref<8x640xbf16, #tpu.memory_space<vmem>>, vector<8x128xbf16>
    %c0_3 = arith.constant 0 : index
    %c128 = arith.constant 128 : index
    %3 = vector.load %arg2[%c0_3, %c128] : memref<8x640xbf16, #tpu.memory_space<vmem>>, vector<8x512xbf16>
    %c0_4 = arith.constant 0 : index
    %c0_5 = arith.constant 0 : index
    %4 = vector.load %arg3[%c0_4, %c0_5] : memref<128x768xbf16, #tpu.memory_space<vmem>>, vector<128x128xbf16>
    %c0_6 = arith.constant 0 : index
    %c128_7 = arith.constant 128 : index
    %5 = vector.load %arg3[%c0_6, %c128_7] : memref<128x768xbf16, #tpu.memory_space<vmem>>, vector<128x128xbf16>
    %c0_8 = arith.constant 0 : index
    %c256 = arith.constant 256 : index
    %6 = vector.load %arg3[%c0_8, %c256] : memref<128x768xbf16, #tpu.memory_space<vmem>>, vector<128x512xbf16>
    %c0_9 = arith.constant 0 : index
    %c0_10 = arith.constant 0 : index
    %7 = vector.load %arg4[%c0_9, %c0_10] : memref<512x768xbf16, #tpu.memory_space<vmem>>, vector<512x512xbf16>
    %c0_11 = arith.constant 0 : index
    %c512 = arith.constant 512 : index
    %8 = vector.load %arg4[%c0_11, %c512] : memref<512x768xbf16, #tpu.memory_space<vmem>>, vector<512x256xbf16>
    %c0_12 = arith.constant 0 : index
    %c0_13 = arith.constant 0 : index
    %9 = vector.load %arg6[%c0_12, %c0_13] : memref<1x1792xf32, #tpu.memory_space<vmem>>, vector<1x128xf32>
    %c0_14 = arith.constant 0 : index
    %c128_15 = arith.constant 128 : index
    %10 = vector.load %arg6[%c0_14, %c128_15] : memref<1x1792xf32, #tpu.memory_space<vmem>>, vector<1x128xf32>
    %c0_16 = arith.constant 0 : index
    %c256_17 = arith.constant 256 : index
    %11 = vector.load %arg6[%c0_16, %c256_17] : memref<1x1792xf32, #tpu.memory_space<vmem>>, vector<1x128xf32>
    %c0_18 = arith.constant 0 : index
    %c384 = arith.constant 384 : index
    %12 = vector.load %arg6[%c0_18, %c384] : memref<1x1792xf32, #tpu.memory_space<vmem>>, vector<1x512xf32>
    %c0_19 = arith.constant 0 : index
    %c896 = arith.constant 896 : index
    %13 = vector.load %arg6[%c0_19, %c896] : memref<1x1792xf32, #tpu.memory_space<vmem>>, vector<1x512xf32>
    %c0_20 = arith.constant 0 : index
    %c1408 = arith.constant 1408 : index
    %14 = vector.load %arg6[%c0_20, %c1408] : memref<1x1792xf32, #tpu.memory_space<vmem>>, vector<1x256xf32>
    %c0_21 = arith.constant 0 : index
    %c1664 = arith.constant 1664 : index
    %15 = vector.load %arg6[%c0_21, %c1664] : memref<1x1792xf32, #tpu.memory_space<vmem>>, vector<1x128xf32>
    %cst = arith.constant dense<0.000000e+00> : vector<256x128xf32>
    %16 = tpu.matmul %1, %2, %cst {dimension_numbers = #tpu.dot_dimension_numbers<[1], [0], [0], [1], [0, 0, 1, 1], [], []>} : vector<256x8xbf16>, vector<8x128xbf16>, vector<256x128xf32> -> vector<256x128xf32>
    %17 = vector.broadcast %9 : vector<1x128xf32> to vector<256x128xf32>
    %18 = arith.addf %16, %17 : vector<256x128xf32>
    %19 = arith.truncf %18 : vector<256x128xf32> to vector<256x128xbf16>
    %cst_22 = arith.constant 0.000000e+00 : bf16
    %20 = vector.broadcast %cst_22 : bf16 to vector<256x128xbf16>
    %21 = arith.maximumf %19, %20 : vector<256x128xbf16>
    %cst_23 = arith.constant dense<0.000000e+00> : vector<256x128xf32>
    %22 = tpu.matmul %21, %4, %cst_23 {dimension_numbers = #tpu.dot_dimension_numbers<[1], [0], [0], [1], [0, 0, 1, 1], [], []>} : vector<256x128xbf16>, vector<128x128xbf16>, vector<256x128xf32> -> vector<256x128xf32>
    %23 = vector.broadcast %10 : vector<1x128xf32> to vector<256x128xf32>
    %24 = arith.addf %22, %23 : vector<256x128xf32>
    %25 = arith.truncf %24 : vector<256x128xf32> to vector<256x128xbf16>
    %cst_24 = arith.constant 0.000000e+00 : bf16
    %26 = vector.broadcast %cst_24 : bf16 to vector<256x128xbf16>
    %27 = arith.maximumf %25, %26 : vector<256x128xbf16>
    %cst_25 = arith.constant dense<0.000000e+00> : vector<256x128xf32>
    %28 = tpu.matmul %27, %5, %cst_25 {dimension_numbers = #tpu.dot_dimension_numbers<[1], [0], [0], [1], [0, 0, 1, 1], [], []>} : vector<256x128xbf16>, vector<128x128xbf16>, vector<256x128xf32> -> vector<256x128xf32>
    %29 = vector.broadcast %11 : vector<1x128xf32> to vector<256x128xf32>
    %30 = arith.addf %28, %29 : vector<256x128xf32>
    %31 = arith.truncf %30 : vector<256x128xf32> to vector<256x128xbf16>
    %cst_26 = arith.constant dense<0.000000e+00> : vector<256x512xf32>
    %32 = tpu.matmul %1, %3, %cst_26 {dimension_numbers = #tpu.dot_dimension_numbers<[1], [0], [0], [1], [0, 0, 1, 1], [], []>} : vector<256x8xbf16>, vector<8x512xbf16>, vector<256x512xf32> -> vector<256x512xf32>
    %cst_27 = arith.constant dense<0.000000e+00> : vector<256x512xf32>
    %33 = tpu.matmul %31, %6, %cst_27 {dimension_numbers = #tpu.dot_dimension_numbers<[1], [0], [0], [1], [0, 0, 1, 1], [], []>} : vector<256x128xbf16>, vector<128x512xbf16>, vector<256x512xf32> -> vector<256x512xf32>
    %34 = arith.addf %32, %33 : vector<256x512xf32>
    %35 = vector.broadcast %12 : vector<1x512xf32> to vector<256x512xf32>
    %36 = arith.addf %34, %35 : vector<256x512xf32>
    %37 = arith.truncf %36 : vector<256x512xf32> to vector<256x512xbf16>
    %cst_28 = arith.constant 0.000000e+00 : bf16
    %38 = vector.broadcast %cst_28 : bf16 to vector<256x512xbf16>
    %39 = arith.maximumf %37, %38 : vector<256x512xbf16>
    %cst_29 = arith.constant dense<0.000000e+00> : vector<256x512xf32>
    %40 = tpu.matmul %39, %7, %cst_29 {dimension_numbers = #tpu.dot_dimension_numbers<[1], [0], [0], [1], [0, 0, 1, 1], [], []>} : vector<256x512xbf16>, vector<512x512xbf16>, vector<256x512xf32> -> vector<256x512xf32>
    %41 = vector.broadcast %13 : vector<1x512xf32> to vector<256x512xf32>
    %42 = arith.addf %40, %41 : vector<256x512xf32>
    %43 = arith.truncf %42 : vector<256x512xf32> to vector<256x512xbf16>
    %cst_30 = arith.constant 0.000000e+00 : bf16
    %44 = vector.broadcast %cst_30 : bf16 to vector<256x512xbf16>
    %45 = arith.maximumf %43, %44 : vector<256x512xbf16>
    %cst_31 = arith.constant dense<0.000000e+00> : vector<256x256xf32>
    %46 = tpu.matmul %45, %8, %cst_31 {dimension_numbers = #tpu.dot_dimension_numbers<[1], [0], [0], [1], [0, 0, 1, 1], [], []>} : vector<256x512xbf16>, vector<512x256xbf16>, vector<256x256xf32> -> vector<256x256xf32>
    %47 = vector.broadcast %14 : vector<1x256xf32> to vector<256x256xf32>
    %48 = arith.addf %46, %47 : vector<256x256xf32>
    %49 = arith.truncf %48 : vector<256x256xf32> to vector<256x256xbf16>
    %cst_32 = arith.constant 0.000000e+00 : bf16
    %50 = vector.broadcast %cst_32 : bf16 to vector<256x256xbf16>
    %51 = arith.maximumf %49, %50 : vector<256x256xbf16>
    %c0_33 = arith.constant 0 : index
    %c0_34 = arith.constant 0 : index
    %52 = vector.load %arg5[%c0_33, %c0_34] : memref<256x128xbf16, #tpu.memory_space<vmem>>, vector<256x128xbf16>
    %cst_35 = arith.constant dense<0.000000e+00> : vector<256x128xf32>
    %53 = tpu.matmul %51, %52, %cst_35 {dimension_numbers = #tpu.dot_dimension_numbers<[1], [0], [0], [1], [0, 0, 1, 1], [], []>} : vector<256x256xbf16>, vector<256x128xbf16>, vector<256x128xf32> -> vector<256x128xf32>
    %54 = vector.broadcast %15 : vector<1x128xf32> to vector<256x128xf32>
    %55 = arith.addf %53, %54 : vector<256x128xf32>
    %56 = arith.truncf %55 : vector<256x128xf32> to vector<256x128xbf16>
    %c0_36 = arith.constant 0 : index
    %c0_37 = arith.constant 0 : index
    %57 = vector.load %arg7[%c0_36, %c0_37] : memref<256x128xbf16, #tpu.memory_space<vmem>>, vector<256x128xbf16>
    tpu.vector_store %arg7[%c0_36, %c0_37], %56 {strides = array<i32>} : memref<256x128xbf16, #tpu.memory_space<vmem>>, vector<256x128xbf16>,
    return
  }
  func.func @transform_0(%arg0: i32) -> (i32, i32) {
    %c0_i32 = arith.constant 0 : i32
    %c0_i32_0 = arith.constant 0 : i32
    return %arg0, %c0_i32 : i32, i32
  }
  func.func @transform_1(%arg0: i32) -> (i32, i32) {
    %c0_i32 = arith.constant 0 : i32
    %c0_i32_0 = arith.constant 0 : i32
    %c0_i32_1 = arith.constant 0 : i32
    return %c0_i32, %c0_i32_0 : i32, i32
  }
  func.func @transform_2(%arg0: i32) -> (i32, i32) {
    %c0_i32 = arith.constant 0 : i32
    %c0_i32_0 = arith.constant 0 : i32
    %c0_i32_1 = arith.constant 0 : i32
    return %c0_i32, %c0_i32_0 : i32, i32
  }
  func.func @transform_3(%arg0: i32) -> (i32, i32) {
    %c0_i32 = arith.constant 0 : i32
    %c0_i32_0 = arith.constant 0 : i32
    %c0_i32_1 = arith.constant 0 : i32
    return %c0_i32, %c0_i32_0 : i32, i32
  }
  func.func @transform_4(%arg0: i32) -> (i32, i32) {
    %c0_i32 = arith.constant 0 : i32
    %c0_i32_0 = arith.constant 0 : i32
    %c0_i32_1 = arith.constant 0 : i32
    return %c0_i32, %c0_i32_0 : i32, i32
  }
  func.func @transform_5(%arg0: i32) -> (i32, i32) {
    %c0_i32 = arith.constant 0 : i32
    %c0_i32_0 = arith.constant 0 : i32
    %c0_i32_1 = arith.constant 0 : i32
    return %c0_i32, %c0_i32_0 : i32, i32
  }
  func.func @transform_6(%arg0: i32) -> (i32, i32) {
    %c0_i32 = arith.constant 0 : i32
    %c0_i32_0 = arith.constant 0 : i32
    return %arg0, %c0_i32 : i32, i32
  }
}

</mosaic_0001>

<llo_original>
// kernel: tpu_custom_call.1
$region0: #{tpu_custom_call.1}
  #allocation0 [shape = 'u32[]', space=smem, size = 0x4, offset = 0x4, fixed_abs, tag = 'smem constant byte address 0x4 - core index']
  #allocation1 [shape = 'u32[144,128]{1,0:T(1,128)}', space=vmem, size = 0x12000, scoped, tag = 'internal scratch']
  %s0 = inlined_call_operand.vmem [shape: f32[512,8], index: 0, kind: input, shape index: {}]
  %s1 = inlined_call_operand.vmem [shape: bf16[8,640], index: 1, kind: input, shape index: {}]
  %s2 = inlined_call_operand.vmem [shape: bf16[128,768], index: 2, kind: input, shape index: {}]
  %s3 = inlined_call_operand.hbm [shape: bf16[512,768], index: 3, kind: input, shape index: {}]
  %s4 = inlined_call_operand.vmem [shape: bf16[256,128], index: 4, kind: input, shape index: {}]
  %s5 = inlined_call_operand.vmem [shape: f32[1,1792], index: 5, kind: input, shape index: {}]
  %s6 = inlined_call_operand.hbm [shape: bf16[512,128], index: 6, kind: output, shape index: {}]
  %s7 = sld [smem:[#allocation0]]
  $region61: #{tpu_custom_call.1} parent=0
    _
  %s9 = ssub.s32 1, %s7
  %s10 = scalar_select 0, %s9, %s7
  $region1: #{tpu_custom_call.1} parent=0
    #allocation2 [shape = 'u8[786432]{0}', space=vmem, size = 0xc0000, scoped, tag = 'input window, operand 3, single buffered']
    #allocation3 [shape = 's32[2]{0}', space=sflag, size = 0x8, scoped, tag = 'scoped memory for tpu_custom_call.1']
    #allocation4 [shape = 's32[2]{0}', space=sflag, size = 0x8, scoped, tag = 'scoped memory for tpu_custom_call.1']
    #allocation5 [shape = 'u8[131072]{0}', space=vmem, size = 0x20000, scoped, tag = 'output window, operand 0']
    %11 = vsyncpa [#allocation3], 0
    %12 = vsyncpa [#allocation4], 0
    %s13 = scalar_lea.sflag [#allocation4], 1
    %14 = vsyncpa %s13, 0
    loop: start=0, step=1, limit=4
    $region2: #{tpu_custom_call.1} parent=1 // loop_pre_header
      _
    $region3: #{tpu_custom_call.1} parent=1 // loop_header
      %s16 = sphi 0, %s20
      %p17 = scmp.ge.s32.totalorder %s16, 4
      %s26 = sphi 0, %s28
      %s29 = sphi 0, %s26
      %s30 = sphi 0, %s29
      %s46 = sphi 0, %s30
      %s50 = sphi 0, %s50
      %s52 = sphi 0, %s50
      %s53 = sphi 0, %s52
      %s67 = sphi 0, %s53
      %s71 = sphi 0, %s71
      %s73 = sphi 0, %s71
      %s74 = sphi 0, %s73
      %s88 = sphi 0, %s74
      %s92 = sphi 0, %s92
      %s94 = sphi 0, %s92
      %s95 = sphi 0, %s94
      %s109 = sphi 0, %s95
      %s113 = sphi 0, %s113
      %s115 = sphi 0, %s113
      %s116 = sphi 0, %s115
      %s130 = sphi 0, %s116
      %s134 = sphi 0, %s134
      %s136 = sphi 0, %s134
      %s137 = sphi 0, %s136
      %s151 = sphi 0, %s137
      %s157 = sphi 0, %s159
      %s160 = sphi 0, %s157
      %s161 = sphi 0, %s160
      %s177 = sphi 0, %s161
    $region4: #{tpu_custom_call.1} parent=1 // loop_header_branch
      %19 = sbr.rel (%p17) target = $region8
    $region5: #{tpu_custom_call.1} parent=1 // loop_body
      %s21 = ssub.s32 %s16, 1
      %s22 = ssub.s32 %s16, 2
      %s23 = sadd.s32 %s16, 1
      %s24 = ssub.s32 %s16, %s23
      %p25 = scmp.eq.s32.totalorder %s24, 0
      %s27 = sadd.s32 %s26, 1
      %s28 = scalar_select %p25, %s26, %s27
      %p31 = pneg %p25
      %p32 = scmp.eq.s32.totalorder %s16, 1
      %p33 = por %p31, %p32
      %p34 = scmp.ne.s32.totalorder %s26, %s29
      %p35 = scmp.eq.s32.totalorder %s16, 0
      %p36 = por %p34, %p35
      %p37 = scmp.ne.s32.totalorder %s26, %s29
      %p38 = scmp.eq.s32.totalorder %s21, 1
      %p39 = por %p37, %p38
      %p40 = scmp.ne.s32.totalorder %s29, %s30
      %p41 = scmp.eq.s32.totalorder %s21, 0
      %p42 = por %p40, %p41
      %p43 = scmp.ne.s32.totalorder %s29, %s30
      %p44 = scmp.eq.s32.totalorder %s22, 1
      %p45 = por %p43, %p44
      %p47 = scmp.ne.s32.totalorder %s30, %s46
      %p48 = scmp.eq.s32.totalorder %s22, 0
      %p49 = por %p47, %p48
      %s51 = sadd.s32 %s50, 1
      %p54 = scmp.eq.s32.totalorder %s16, 1
      %p55 = scmp.ne.s32.totalorder %s50, %s52
      %p56 = scmp.eq.s32.totalorder %s16, 0
      %p57 = por %p55, %p56
      %p58 = scmp.ne.s32.totalorder %s50, %s52
      %p59 = scmp.eq.s32.totalorder %s21, 1
      %p60 = por %p58, %p59
      %p61 = scmp.ne.s32.totalorder %s52, %s53
      %p62 = scmp.eq.s32.totalorder %s21, 0
      %p63 = por %p61, %p62
      %p64 = scmp.ne.s32.totalorder %s52, %s53
      %p65 = scmp.eq.s32.totalorder %s22, 1
      %p66 = por %p64, %p65
      %p68 = scmp.ne.s32.totalorder %s53, %s67
      %p69 = scmp.eq.s32.totalorder %s22, 0
      %p70 = por %p68, %p69
      %s72 = sadd.s32 %s71, 1
      %p75 = scmp.eq.s32.totalorder %s16, 1
      %p76 = scmp.ne.s32.totalorder %s71, %s73
      %p77 = scmp.eq.s32.totalorder %s16, 0
      %p78 = por %p76, %p77
      %p79 = scmp.ne.s32.totalorder %s71, %s73
      %p80 = scmp.eq.s32.totalorder %s21, 1
      %p81 = por %p79, %p80
      %p82 = scmp.ne.s32.totalorder %s73, %s74
      %p83 = scmp.eq.s32.totalorder %s21, 0
      %p84 = por %p82, %p83
      %p85 = scmp.ne.s32.totalorder %s73, %s74
      %p86 = scmp.eq.s32.totalorder %s22, 1
      %p87 = por %p85, %p86
      %p89 = scmp.ne.s32.totalorder %s74, %s88
      %p90 = scmp.eq.s32.totalorder %s22, 0
      %p91 = por %p89, %p90
      %s93 = sadd.s32 %s92, 1
      %p96 = scmp.eq.s32.totalorder %s16, 1
      %p97 = scmp.ne.s32.totalorder %s92, %s94
      %p98 = scmp.eq.s32.totalorder %s16, 0
      %p99 = por %p97, %p98
      %p100 = scmp.ne.s32.totalorder %s92, %s94
      %p101 = scmp.eq.s32.totalorder %s21, 1
      %p102 = por %p100, %p101
      %p103 = scmp.ne.s32.totalorder %s94, %s95
      %p104 = scmp.eq.s32.totalorder %s21, 0
      %p105 = por %p103, %p104
      %p106 = scmp.ne.s32.totalorder %s94, %s95
      %p107 = scmp.eq.s32.totalorder %s22, 1
      %p108 = por %p106, %p107
      %p110 = scmp.ne.s32.totalorder %s95, %s109
      %p111 = scmp.eq.s32.totalorder %s22, 0
      %p112 = por %p110, %p111
      %s114 = sadd.s32 %s113, 1
      %p117 = scmp.eq.s32.totalorder %s16, 1
      %p118 = scmp.ne.s32.totalorder %s113, %s115
      %p119 = scmp.eq.s32.totalorder %s16, 0
      %p120 = por %p118, %p119
      %p121 = scmp.ne.s32.totalorder %s113, %s115
      %p122 = scmp.eq.s32.totalorder %s21, 1
      %p123 = por %p121, %p122
      %p124 = scmp.ne.s32.totalorder %s115, %s116
      %p125 = scmp.eq.s32.totalorder %s21, 0
      %p126 = por %p124, %p125
      %p127 = scmp.ne.s32.totalorder %s115, %s116
      %p128 = scmp.eq.s32.totalorder %s22, 1
      %p129 = por %p127, %p128
      %p131 = scmp.ne.s32.totalorder %s116, %s130
      %p132 = scmp.eq.s32.totalorder %s22, 0
      %p133 = por %p131, %p132
      %s135 = sadd.s32 %s134, 1
      %p138 = scmp.eq.s32.totalorder %s16, 1
      %p139 = scmp.ne.s32.totalorder %s134, %s136
      %p140 = scmp.eq.s32.totalorder %s16, 0
      %p141 = por %p139, %p140
      %p142 = scmp.ne.s32.totalorder %s134, %s136
      %p143 = scmp.eq.s32.totalorder %s21, 1
      %p144 = por %p142, %p143
      %p145 = scmp.ne.s32.totalorder %s136, %s137
      %p146 = scmp.eq.s32.totalorder %s21, 0
      %p147 = por %p145, %p146
      %p148 = scmp.ne.s32.totalorder %s136, %s137
      %p149 = scmp.eq.s32.totalorder %s22, 1
      %p150 = por %p148, %p149
      %p152 = scmp.ne.s32.totalorder %s137, %s151
      %p153 = scmp.eq.s32.totalorder %s22, 0
      %p154 = por %p152, %p153
      %s155 = ssub.s32 %s16, %s23
      %p156 = scmp.eq.s32.totalorder %s155, 0
      %s158 = sadd.s32 %s157, 1
      %s159 = scalar_select %p156, %s157, %s158
      %p162 = pneg %p156
      %p163 = scmp.eq.s32.totalorder %s16, 1
      %p164 = por %p162, %p163
      %p165 = scmp.ne.s32.totalorder %s157, %s160
      %p166 = scmp.eq.s32.totalorder %s16, 0
      %p167 = por %p165, %p166
      %p168 = scmp.ne.s32.totalorder %s157, %s160
      %p169 = scmp.eq.s32.totalorder %s21, 1
      %p170 = por %p168, %p169
      %p171 = scmp.ne.s32.totalorder %s160, %s161
      %p172 = scmp.eq.s32.totalorder %s21, 0
      %p173 = por %p171, %p172
      %p174 = scmp.ne.s32.totalorder %s160, %s161
      %p175 = scmp.eq.s32.totalorder %s22, 1
      %p176 = por %p174, %p175
      %p178 = scmp.ne.s32.totalorder %s161, %s177
      %p179 = scmp.eq.s32.totalorder %s22, 0
      %p180 = por %p178, %p179
      %p181 = scmp.le.s32.totalorder 1, %s16
      %p182 = scmp.lt.s32.totalorder %s16, 3
      %p183 = pnand %p181, %p182
      %p184 = pneg %p183
      // Predicated region
      $region9: #{tpu_custom_call.1} parent=5 // pred_check
        _
      $region10: #{tpu_custom_call.1} parent=5 // pred_check_branch
        %186 = sbr.rel (%p183) target = $region12
      $region11: #{tpu_custom_call.1} parent=5 // pred_region
        %s187 = ssub.s32 %s16, 1
        // Predicated region
        $region13: #{tpu_custom_call.1} parent=11 // pred_check
          %p188 = pneg %p63
        $region14: #{tpu_custom_call.1} parent=11 // pred_check_branch
          %190 = sbr.rel (%p188) target = $region16
        $region15: #{tpu_custom_call.1} parent=11 // pred_region
          _
        $region16: #{tpu_custom_call.1} parent=11 // pred_fallthru
          _
        // Predicated region
        $region17: #{tpu_custom_call.1} parent=11 // pred_check
          %p191 = pneg %p84
        $region18: #{tpu_custom_call.1} parent=11 // pred_check_branch
          %193 = sbr.rel (%p191) target = $region20
        $region19: #{tpu_custom_call.1} parent=11 // pred_region
          _
        $region20: #{tpu_custom_call.1} parent=11 // pred_fallthru
          _
        // Predicated region
        $region21: #{tpu_custom_call.1} parent=11 // pred_check
          %p194 = pneg %p105
        $region22: #{tpu_custom_call.1} parent=11 // pred_check_branch
          %196 = sbr.rel (%p194) target = $region24
        $region23: #{tpu_custom_call.1} parent=11 // pred_region
          %s198 = ssub.s32 24576, 24576
          %199 = vsyncadd [#allocation3], %s198
          %s200 = sshll.u32 [#allocation2], 4
          %s201 = int_to_ptr.vmem [resolvable:$true] %s200
          %206 = dma.hbm_to_vmem [thread:$0]  %s3, 24576, %s201, [#allocation3], 384, 384, 24
        $region24: #{tpu_custom_call.1} parent=11 // pred_fallthru
          _
        // Predicated region
        $region25: #{tpu_custom_call.1} parent=11 // pred_check
          %p207 = pneg %p126
        $region26: #{tpu_custom_call.1} parent=11 // pred_check_branch
          %209 = sbr.rel (%p207) target = $region28
        $region27: #{tpu_custom_call.1} parent=11 // pred_region
          _
        $region28: #{tpu_custom_call.1} parent=11 // pred_fallthru
          _
        // Predicated region
        $region29: #{tpu_custom_call.1} parent=11 // pred_check
          %p210 = pneg %p147
        $region30: #{tpu_custom_call.1} parent=11 // pred_check_branch
          %212 = sbr.rel (%p210) target = $region32
        $region31: #{tpu_custom_call.1} parent=11 // pred_region
          _
        $region32: #{tpu_custom_call.1} parent=11 // pred_fallthru
          _
      $region12: #{tpu_custom_call.1} parent=5 // pred_fallthru
        _
      %p213 = scmp.lt.s32.totalorder %s16, 2
      // Predicated region
      $region33: #{tpu_custom_call.1} parent=5 // pred_check
        %p214 = pneg %p213
      $region34: #{tpu_custom_call.1} parent=5 // pred_check_branch
        %216 = sbr.rel (%p214) target = $region36
      $region35: #{tpu_custom_call.1} parent=5 // pred_region
        // Predicated region
        $region37: #{tpu_custom_call.1} parent=35 // pred_check
          %p217 = pneg %p36
        $region38: #{tpu_custom_call.1} parent=35 // pred_check_branch
          %219 = sbr.rel (%p217) target = $region40
        $region39: #{tpu_custom_call.1} parent=35 // pred_region
          %s220 = smul.u32 32, %s16
          %p221 = scmp.lt.s32.totalorder %s220, 63
          %s222 = scalar_select %p221, %s220, 63
          %s223 = smul.addr %s222, 8
          %s224 = scalar_lea.vmem %s0, %s223
          %s225 = smul.u32 32, %s16
        $region40: #{tpu_custom_call.1} parent=35 // pred_fallthru
          _
      $region36: #{tpu_custom_call.1} parent=5 // pred_fallthru
        _
      %p226 = scmp.le.s32.totalorder 1, %s16
      %p227 = scmp.lt.s32.totalorder %s16, 3
      %p228 = pnand %p226, %p227
      %p229 = pneg %p228
      // Predicated region
      $region41: #{tpu_custom_call.1} parent=5 // pred_check
        _
      $region42: #{tpu_custom_call.1} parent=5 // pred_check_branch
        %231 = sbr.rel (%p228) target = $region44
      $region43: #{tpu_custom_call.1} parent=5 // pred_region
        %s232 = ssub.s32 %s16, 1
        // Predicated region
        $region45: #{tpu_custom_call.1} parent=43 // pred_check
          %p233 = pneg %p105
        $region46: #{tpu_custom_call.1} parent=43 // pred_check_branch
          %235 = sbr.rel (%p233) target = $region48
        $region47: #{tpu_custom_call.1} parent=43 // pred_region
          %236 = dma.done [#allocation3], 24576
        $region48: #{tpu_custom_call.1} parent=43 // pred_fallthru
          _
        %s237 = smul.u32 32, %s21
        %p238 = scmp.lt.s32.totalorder %s237, 63
        %s239 = scalar_select %p238, %s237, 63
        %s240 = smul.addr %s239, 8
        %s241 = scalar_lea.vmem %s0, %s240
        %p242 = pneg %p42
        %p243 = pneg %p39
        %p244 = pneg %p63
        %p245 = pneg %p60
        %p246 = pneg %p84
        %p247 = pneg %p81
        %p248 = pneg %p105
        %p249 = pneg %p102
        %p250 = pneg %p126
        %p251 = pneg %p123
        %p252 = pneg %p147
        %p253 = pneg %p144
        %p254 = pneg %p173
        %p255 = pneg %p170
        %s256 = sand.u32 %s160, 1
        %s257 = scalar_lea.sflag [#allocation4], %s256
        %s258 = sand.u32 %s160, 1
        %s259 = smul.addr %s258, 128
        %s260 = scalar_lea.vmem [#allocation5], %s259
        %s261 = smul.u32 32, %s21
        %p262 = scmp.lt.s32.totalorder %s261, 63
        %s263 = scalar_select %p262, %s261, 63
        %s264 = smul.addr %s263, 8
        %s265 = scalar_lea.vmem %s0, %s264
        %s266 = smul.u32 32, %s21
        %s267 = smul.u32 32, %s21
        %v269 = vld [vmem:[%s265] sm:$0xff]
        %v270 = vld [vmem:[%s265 + $0x8] sm:$0xff]
        %v271 = vld [vmem:[%s265 + $0x10] sm:$0xff]
        %v272 = vld [vmem:[%s265 + $0x18] sm:$0xff]
        %v273 = vld [vmem:[%s265 + $0x20] sm:$0xff]
        %v274 = vld [vmem:[%s265 + $0x28] sm:$0xff]
        %v275 = vld [vmem:[%s265 + $0x30] sm:$0xff]
        %v276 = vld [vmem:[%s265 + $0x38] sm:$0xff]
        %v277 = vld [vmem:[%s265 + $0x40] sm:$0xff]
        %v278 = vld [vmem:[%s265 + $0x48] sm:$0xff]
        %v279 = vld [vmem:[%s265 + $0x50] sm:$0xff]
        %v280 = vld [vmem:[%s265 + $0x58] sm:$0xff]
        %v281 = vld [vmem:[%s265 + $0x60] sm:$0xff]
        %v282 = vld [vmem:[%s265 + $0x68] sm:$0xff]
        %v283 = vld [vmem:[%s265 + $0x70] sm:$0xff]
        %v284 = vld [vmem:[%s265 + $0x78] sm:$0xff]
        %v285 = vld [vmem:[%s265 + $0x80] sm:$0xff]
        %v286 = vld [vmem:[%s265 + $0x88] sm:$0xff]
        %v287 = vld [vmem:[%s265 + $0x90] sm:$0xff]
        %v288 = vld [vmem:[%s265 + $0x98] sm:$0xff]
        %v289 = vld [vmem:[%s265 + $0xa0] sm:$0xff]
        %v290 = vld [vmem:[%s265 + $0xa8] sm:$0xff]
        %v291 = vld [vmem:[%s265 + $0xb0] sm:$0xff]
        %v292 = vld [vmem:[%s265 + $0xb8] sm:$0xff]
        %v293 = vld [vmem:[%s265 + $0xc0] sm:$0xff]
        %v294 = vld [vmem:[%s265 + $0xc8] sm:$0xff]
        %v295 = vld [vmem:[%s265 + $0xd0] sm:$0xff]
        %v296 = vld [vmem:[%s265 + $0xd8] sm:$0xff]
        %v297 = vld [vmem:[%s265 + $0xe0] sm:$0xff]
        %v298 = vld [vmem:[%s265 + $0xe8] sm:$0xff]
        %v299 = vld [vmem:[%s265 + $0xf0] sm:$0xff]
        %v300 = vld [vmem:[%s265 + $0xf8] sm:$0xff]
        %v301 = vpack.c.bf16 %v270, %v269
        %v302 = vpack.c.bf16 %v272, %v271
        %v303 = vpack.c.bf16 %v274, %v273
        %v304 = vpack.c.bf16 %v276, %v275
        %v305 = vpack.c.bf16 %v278, %v277
        %v306 = vpack.c.bf16 %v280, %v279
        %v307 = vpack.c.bf16 %v282, %v281
        %v308 = vpack.c.bf16 %v284, %v283
        %v309 = vpack.c.bf16 %v286, %v285
        %v310 = vpack.c.bf16 %v288, %v287
        %v311 = vpack.c.bf16 %v290, %v289
        %v312 = vpack.c.bf16 %v292, %v291
        %v313 = vpack.c.bf16 %v294, %v293
        %v314 = vpack.c.bf16 %v296, %v295
        %v315 = vpack.c.bf16 %v298, %v297
        %v316 = vpack.c.bf16 %v300, %v299
        %v317 = vld [vmem:[%s1] sm:$0xf]
        %v318 = vld [vmem:[%s1 + $0x4] sm:$0xff]
        %v319 = vld [vmem:[%s1 + $0xc] sm:$0xff]
        %v320 = vld [vmem:[%s2] sm:$0xf]
        %v321 = vld [vmem:[%s2 + $0x18] sm:$0xf]
        %v322 = vld [vmem:[%s2 + $0x30] sm:$0xf]
        %v323 = vld [vmem:[%s2 + $0x48] sm:$0xf]
        %v324 = vld [vmem:[%s2 + $0x60] sm:$0xf]
        %v325 = vld [vmem:[%s2 + $0x78] sm:$0xf]
        %v326 = vld [vmem:[%s2 + $0x90] sm:$0xf]
        %v327 = vld [vmem:[%s2 + $0xa8] sm:$0xf]
        %v328 = vld [vmem:[%s2 + $0xc0] sm:$0xf]
        %v329 = vld [vmem:[%s2 + $0xd8] sm:$0xf]
        %v330 = vld [vmem:[%s2 + $0xf0] sm:$0xf]
        %v331 = vld [vmem:[%s2 + $0x108] sm:$0xf]
        %v332 = vld [vmem:[%s2 + $0x120] sm:$0xf]
        %v333 = vld [vmem:[%s2 + $0x138] sm:$0xf]
        %v334 = vld [vmem:[%s2 + $0x150] sm:$0xf]
        %v335 = vld [vmem:[%s2 + $0x168] sm:$0xf]
        %v336 = vld [vmem:[%s2 + $0x4] sm:$0xf]
        %v337 = vld [vmem:[%s2 + $0x1c] sm:$0xf]
        %v338 = vld [vmem:[%s2 + $0x34] sm:$0xf]
        %v339 = vld [vmem:[%s2 + $0x4c] sm:$0xf]
        %v340 = vld [vmem:[%s2 + $0x64] sm:$0xf]
        %v341 = vld [vmem:[%s2 + $0x7c] sm:$0xf]
        %v342 = vld [vmem:[%s2 + $0x94] sm:$0xf]
        %v343 = vld [vmem:[%s2 + $0xac] sm:$0xf]
        %v344 = vld [vmem:[%s2 + $0xc4] sm:$0xf]
        %v345 = vld [vmem:[%s2 + $0xdc] sm:$0xf]
        %v346 = vld [vmem:[%s2 + $0xf4] sm:$0xf]
        %v347 = vld [vmem:[%s2 + $0x10c] sm:$0xf]
        %v348 = vld [vmem:[%s2 + $0x124] sm:$0xf]
        %v349 = vld [vmem:[%s2 + $0x13c] sm:$0xf]
        %v350 = vld [vmem:[%s2 + $0x154] sm:$0xf]
        %v351 = vld [vmem:[%s2 + $0x16c] sm:$0xf]
        %v352 = vld [vmem:[%s2 + $0x8] sm:$0xff]
        %v353 = vld [vmem:[%s2 + $0x10] sm:$0xff]
        %v354 = vld [vmem:[%s2 + $0x20] sm:$0xff]
        %v355 = vld [vmem:[%s2 + $0x28] sm:$0xff]
        %v356 = vld [vmem:[%s2 + $0x38] sm:$0xff]
        %v357 = vld [vmem:[%s2 + $0x40] sm:$0xff]
        %v358 = vld [vmem:[%s2 + $0x50] sm:$0xff]
        %v359 = vld [vmem:[%s2 + $0x58] sm:$0xff]
        %v360 = vld [vmem:[%s2 + $0x68] sm:$0xff]
        %v361 = vld [vmem:[%s2 + $0x70] sm:$0xff]
        %v362 = vld [vmem:[%s2 + $0x80] sm:$0xff]
        %v363 = vld [vmem:[%s2 + $0x88] sm:$0xff]
        %v364 = vld [vmem:[%s2 + $0x98] sm:$0xff]
        %v365 = vld [vmem:[%s2 + $0xa0] sm:$0xff]
        %v366 = vld [vmem:[%s2 + $0xb0] sm:$0xff]
        %v367 = vld [vmem:[%s2 + $0xb8] sm:$0xff]
        %v368 = vld [vmem:[%s2 + $0xc8] sm:$0xff]
        %v369 = vld [vmem:[%s2 + $0xd0] sm:$0xff]
        %v370 = vld [vmem:[%s2 + $0xe0] sm:$0xff]
        %v371 = vld [vmem:[%s2 + $0xe8] sm:$0xff]
        %v372 = vld [vmem:[%s2 + $0xf8] sm:$0xff]
        %v373 = vld [vmem:[%s2 + $0x100] sm:$0xff]
        %v374 = vld [vmem:[%s2 + $0x110] sm:$0xff]
        %v375 = vld [vmem:[%s2 + $0x118] sm:$0xff]
        %v376 = vld [vmem:[%s2 + $0x128] sm:$0xff]
        %v377 = vld [vmem:[%s2 + $0x130] sm:$0xff]
        %v378 = vld [vmem:[%s2 + $0x140] sm:$0xff]
        %v379 = vld [vmem:[%s2 + $0x148] sm:$0xff]
        %v380 = vld [vmem:[%s2 + $0x158] sm:$0xff]
        %v381 = vld [vmem:[%s2 + $0x160] sm:$0xff]
        %v382 = vld [vmem:[%s2 + $0x170] sm:$0xff]
        %v383 = vld [vmem:[%s2 + $0x178] sm:$0xff]
        %v384 = vld [vmem:[#allocation2] sm:$0xff]
        %v385 = vld [vmem:[#allocation2 + $0x8] sm:$0xff]
        %v386 = vld [vmem:[#allocation2 + $0x18] sm:$0xff]
        %v387 = vld [vmem:[#allocation2 + $0x20] sm:$0xff]
        %v388 = vld [vmem:[#allocation2 + $0x30] sm:$0xff]
        %v389 = vld [vmem:[#allocation2 + $0x38] sm:$0xff]
        %v390 = vld [vmem:[#allocation2 + $0x48] sm:$0xff]
        %v391 = vld [vmem:[#allocation2 + $0x50] sm:$0xff]
        %v392 = vld [vmem:[#allocation2 + $0x60] sm:$0xff]
        %v393 = vld [vmem:[#allocation2 + $0x68] sm:$0xff]
        %v394 = vld [vmem:[#allocation2 + $0x78] sm:$0xff]
        %v395 = vld [vmem:[#allocation2 + $0x80] sm:$0xff]
        %v396 = vld [vmem:[#allocation2 + $0x90] sm:$0xff]
        %v397 = vld [vmem:[#allocation2 + $0x98] sm:$0xff]
        %v398 = vld [vmem:[#allocation2 + $0xa8] sm:$0xff]
        %v399 = vld [vmem:[#allocation2 + $0xb0] sm:$0xff]
        %v400 = vld [vmem:[#allocation2 + $0xc0] sm:$0xff]
        %v401 = vld [vmem:[#allocation2 + $0xc8] sm:$0xff]
        %v402 = vld [vmem:[#allocation2 + $0xd8] sm:$0xff]
        %v403 = vld [vmem:[#allocation2 + $0xe0] sm:$0xff]
        %v404 = vld [vmem:[#allocation2 + $0xf0] sm:$0xff]
        %v405 = vld [vmem:[#allocation2 + $0xf8] sm:$0xff]
        %v406 = vld [vmem:[#allocation2 + $0x108] sm:$0xff]
        %v407 = vld [vmem:[#allocation2 + $0x110] sm:$0xff]
        %v408 = vld [vmem:[#allocation2 + $0x120] sm:$0xff]
        %v409 = vld [vmem:[#allocation2 + $0x128] sm:$0xff]
        %v410 = vld [vmem:[#allocation2 + $0x138] sm:$0xff]
        %v411 = vld [vmem:[#allocation2 + $0x140] sm:$0xff]
        %v412 = vld [vmem:[#allocation2 + $0x150] sm:$0xff]
        %v413 = vld [vmem:[#allocation2 + $0x158] sm:$0xff]
        %v414 = vld [vmem:[#allocation2 + $0x168] sm:$0xff]
        %v415 = vld [vmem:[#allocation2 + $0x170] sm:$0xff]
        %v416 = vld [vmem:[#allocation2 + $0x180] sm:$0xff]
        %v417 = vld [vmem:[#allocation2 + $0x188] sm:$0xff]
        %v418 = vld [vmem:[#allocation2 + $0x198] sm:$0xff]
        %v419 = vld [vmem:[#allocation2 + $0x1a0] sm:$0xff]
        %v420 = vld [vmem:[#allocation2 + $0x1b0] sm:$0xff]
        %v421 = vld [vmem:[#allocation2 + $0x1b8] sm:$0xff]
        %v422 = vld [vmem:[#allocation2 + $0x1c8] sm:$0xff]
        %v423 = vld [vmem:[#allocation2 + $0x1d0] sm:$0xff]
        %v424 = vld [vmem:[#allocation2 + $0x1e0] sm:$0xff]
        %v425 = vld [vmem:[#allocation2 + $0x1e8] sm:$0xff]
        %v426 = vld [vmem:[#allocation2 + $0x1f8] sm:$0xff]
        %v427 = vld [vmem:[#allocation2 + $0x200] sm:$0xff]
        %v428 = vld [vmem:[#allocation2 + $0x210] sm:$0xff]
        %v429 = vld [vmem:[#allocation2 + $0x218] sm:$0xff]
        %v430 = vld [vmem:[#allocation2 + $0x228] sm:$0xff]
        %v431 = vld [vmem:[#allocation2 + $0x230] sm:$0xff]
        %v432 = vld [vmem:[#allocation2 + $0x240] sm:$0xff]
        %v433 = vld [vmem:[#allocation2 + $0x248] sm:$0xff]
        %v434 = vld [vmem:[#allocation2 + $0x258] sm:$0xff]
        %v435 = vld [vmem:[#allocation2 + $0x260] sm:$0xff]
        %v436 = vld [vmem:[#allocation2 + $0x270] sm:$0xff]
        %v437 = vld [vmem:[#allocation2 + $0x278] sm:$0xff]
        %v438 = vld [vmem:[#allocation2 + $0x288] sm:$0xff]
        %v439 = vld [vmem:[#allocation2 + $0x290] sm:$0xff]
        %v440 = vld [vmem:[#allocation2 + $0x2a0] sm:$0xff]
        %v441 = vld [vmem:[#allocation2 + $0x2a8] sm:$0xff]
        %v442 = vld [vmem:[#allocation2 + $0x2b8] sm:$0xff]
        %v443 = vld [vmem:[#allocation2 + $0x2c0] sm:$0xff]
        %v444 = vld [vmem:[#allocation2 + $0x2d0] sm:$0xff]
        %v445 = vld [vmem:[#allocation2 + $0x2d8] sm:$0xff]
        %v446 = vld [vmem:[#allocation2 + $0x2e8] sm:$0xff]
        %v447 = vld [vmem:[#allocation2 + $0x2f0] sm:$0xff]
        %v448 = vld [vmem:[#allocation2 + $0x300] sm:$0xff]
        %v449 = vld [vmem:[#allocation2 + $0x308] sm:$0xff]
        %v450 = vld [vmem:[#allocation2 + $0x318] sm:$0xff]
        %v451 = vld [vmem:[#allocation2 + $0x320] sm:$0xff]
        %v452 = vld [vmem:[#allocation2 + $0x330] sm:$0xff]
        %v453 = vld [vmem:[#allocation2 + $0x338] sm:$0xff]
        %v454 = vld [vmem:[#allocation2 + $0x348] sm:$0xff]
        %v455 = vld [vmem:[#allocation2 + $0x350] sm:$0xff]
        %v456 = vld [vmem:[#allocation2 + $0x360] sm:$0xff]
        %v457 = vld [vmem:[#allocation2 + $0x368] sm:$0xff]
        %v458 = vld [vmem:[#allocation2 + $0x378] sm:$0xff]
        %v459 = vld [vmem:[#allocation2 + $0x380] sm:$0xff]
        %v460 = vld [vmem:[#allocation2 + $0x390] sm:$0xff]
        %v461 = vld [vmem:[#allocation2 + $0x398] sm:$0xff]
        %v462 = vld [vmem:[#allocation2 + $0x3a8] sm:$0xff]
        %v463 = vld [vmem:[#allocation2 + $0x3b0] sm:$0xff]
        %v464 = vld [vmem:[#allocation2 + $0x3c0] sm:$0xff]
        %v465 = vld [vmem:[#allocation2 + $0x3c8] sm:$0xff]
        %v466 = vld [vmem:[#allocation2 + $0x3d8] sm:$0xff]
        %v467 = vld [vmem:[#allocation2 + $0x3e0] sm:$0xff]
        %v468 = vld [vmem:[#allocation2 + $0x3f0] sm:$0xff]
        %v469 = vld [vmem:[#allocation2 + $0x3f8] sm:$0xff]
        %v470 = vld [vmem:[#allocation2 + $0x408] sm:$0xff]
        %v471 = vld [vmem:[#allocation2 + $0x410] sm:$0xff]
        %v472 = vld [vmem:[#allocation2 + $0x420] sm:$0xff]
        %v473 = vld [vmem:[#allocation2 + $0x428] sm:$0xff]
        %v474 = vld [vmem:[#allocation2 + $0x438] sm:$0xff]
        %v475 = vld [vmem:[#allocation2 + $0x440] sm:$0xff]
        %v476 = vld [vmem:[#allocation2 + $0x450] sm:$0xff]
        %v477 = vld [vmem:[#allocation2 + $0x458] sm:$0xff]
        %v478 = vld [vmem:[#allocation2 + $0x468] sm:$0xff]
        %v479 = vld [vmem:[#allocation2 + $0x470] sm:$0xff]
        %v480 = vld [vmem:[#allocation2 + $0x480] sm:$0xff]
        %v481 = vld [vmem:[#allocation2 + $0x488] sm:$0xff]
        %v482 = vld [vmem:[#allocation2 + $0x498] sm:$0xff]
        %v483 = vld [vmem:[#allocation2 + $0x4a0] sm:$0xff]
        %v484 = vld [vmem:[#allocation2 + $0x4b0] sm:$0xff]
        %v485 = vld [vmem:[#allocation2 + $0x4b8] sm:$0xff]
        %v486 = vld [vmem:[#allocation2 + $0x4c8] sm:$0xff]
        %v487 = vld [vmem:[#allocation2 + $0x4d0] sm:$0xff]
        %v488 = vld [vmem:[#allocation2 + $0x4e0] sm:$0xff]
        %v489 = vld [vmem:[#allocation2 + $0x4e8] sm:$0xff]
        %v490 = vld [vmem:[#allocation2 + $0x4f8] sm:$0xff]
        %v491 = vld [vmem:[#allocation2 + $0x500] sm:$0xff]
        %v492 = vld [vmem:[#allocation2 + $0x510] sm:$0xff]
        %v493 = vld [vmem:[#allocation2 + $0x518] sm:$0xff]
        %v494 = vld [vmem:[#allocation2 + $0x528] sm:$0xff]
        %v495 = vld [vmem:[#allocation2 + $0x530] sm:$0xff]
        %v496 = vld [vmem:[#allocation2 + $0x540] sm:$0xff]
        %v497 = vld [vmem:[#allocation2 + $0x548] sm:$0xff]
        %v498 = vld [vmem:[#allocation2 + $0x558] sm:$0xff]
        %v499 = vld [vmem:[#allocation2 + $0x560] sm:$0xff]
        %v500 = vld [vmem:[#allocation2 + $0x570] sm:$0xff]
        %v501 = vld [vmem:[#allocation2 + $0x578] sm:$0xff]
        %v502 = vld [vmem:[#allocation2 + $0x588] sm:$0xff]
        %v503 = vld [vmem:[#allocation2 + $0x590] sm:$0xff]
        %v504 = vld [vmem:[#allocation2 + $0x5a0] sm:$0xff]
        %v505 = vld [vmem:[#allocation2 + $0x5a8] sm:$0xff]
        %v506 = vld [vmem:[#allocation2 + $0x5b8] sm:$0xff]
        %v507 = vld [vmem:[#allocation2 + $0x5c0] sm:$0xff]
        %v508 = vld [vmem:[#allocation2 + $0x5d0] sm:$0xff]
        %v509 = vld [vmem:[#allocation2 + $0x5d8] sm:$0xff]
        %v510 = vld [vmem:[#allocation2 + $0x5e8] sm:$0xff]
        %v511 = vld [vmem:[#allocation2 + $0x5f0] sm:$0xff]
        %v512 = vld [vmem:[#allocation2 + $0x10] sm:$0xff]
        %v513 = vld [vmem:[#allocation2 + $0x28] sm:$0xff]
        %v514 = vld [vmem:[#allocation2 + $0x40] sm:$0xff]
        %v515 = vld [vmem:[#allocation2 + $0x58] sm:$0xff]
        %v516 = vld [vmem:[#allocation2 + $0x70] sm:$0xff]
        %v517 = vld [vmem:[#allocation2 + $0x88] sm:$0xff]
        %v518 = vld [vmem:[#allocation2 + $0xa0] sm:$0xff]
        %v519 = vld [vmem:[#allocation2 + $0xb8] sm:$0xff]
        %v520 = vld [vmem:[#allocation2 + $0xd0] sm:$0xff]
        %v521 = vld [vmem:[#allocation2 + $0xe8] sm:$0xff]
        %v522 = vld [vmem:[#allocation2 + $0x100] sm:$0xff]
        %v523 = vld [vmem:[#allocation2 + $0x118] sm:$0xff]
        %v524 = vld [vmem:[#allocation2 + $0x130] sm:$0xff]
        %v525 = vld [vmem:[#allocation2 + $0x148] sm:$0xff]
        %v526 = vld [vmem:[#allocation2 + $0x160] sm:$0xff]
        %v527 = vld [vmem:[#allocation2 + $0x178] sm:$0xff]
        %v528 = vld [vmem:[#allocation2 + $0x190] sm:$0xff]
        %v529 = vld [vmem:[#allocation2 + $0x1a8] sm:$0xff]
        %v530 = vld [vmem:[#allocation2 + $0x1c0] sm:$0xff]
        %v531 = vld [vmem:[#allocation2 + $0x1d8] sm:$0xff]
        %v532 = vld [vmem:[#allocation2 + $0x1f0] sm:$0xff]
        %v533 = vld [vmem:[#allocation2 + $0x208] sm:$0xff]
        %v534 = vld [vmem:[#allocation2 + $0x220] sm:$0xff]
        %v535 = vld [vmem:[#allocation2 + $0x238] sm:$0xff]
        %v536 = vld [vmem:[#allocation2 + $0x250] sm:$0xff]
        %v537 = vld [vmem:[#allocation2 + $0x268] sm:$0xff]
        %v538 = vld [vmem:[#allocation2 + $0x280] sm:$0xff]
        %v539 = vld [vmem:[#allocation2 + $0x298] sm:$0xff]
        %v540 = vld [vmem:[#allocation2 + $0x2b0] sm:$0xff]
        %v541 = vld [vmem:[#allocation2 + $0x2c8] sm:$0xff]
        %v542 = vld [vmem:[#allocation2 + $0x2e0] sm:$0xff]
        %v543 = vld [vmem:[#allocation2 + $0x2f8] sm:$0xff]
        %v544 = vld [vmem:[#allocation2 + $0x310] sm:$0xff]
        %v545 = vld [vmem:[#allocation2 + $0x328] sm:$0xff]
        %v546 = vld [vmem:[#allocation2 + $0x340] sm:$0xff]
        %v547 = vld [vmem:[#allocation2 + $0x358] sm:$0xff]
        %v548 = vld [vmem:[#allocation2 + $0x370] sm:$0xff]
        %v549 = vld [vmem:[#allocation2 + $0x388] sm:$0xff]
        %v550 = vld [vmem:[#allocation2 + $0x3a0] sm:$0xff]
        %v551 = vld [vmem:[#allocation2 + $0x3b8] sm:$0xff]
        %v552 = vld [vmem:[#allocation2 + $0x3d0] sm:$0xff]
        %v553 = vld [vmem:[#allocation2 + $0x3e8] sm:$0xff]
        %v554 = vld [vmem:[#allocation2 + $0x400] sm:$0xff]
        %v555 = vld [vmem:[#allocation2 + $0x418] sm:$0xff]
        %v556 = vld [vmem:[#allocation2 + $0x430] sm:$0xff]
        %v557 = vld [vmem:[#allocation2 + $0x448] sm:$0xff]
        %v558 = vld [vmem:[#allocation2 + $0x460] sm:$0xff]
        %v559 = vld [vmem:[#allocation2 + $0x478] sm:$0xff]
        %v560 = vld [vmem:[#allocation2 + $0x490] sm:$0xff]
        %v561 = vld [vmem:[#allocation2 + $0x4a8] sm:$0xff]
        %v562 = vld [vmem:[#allocation2 + $0x4c0] sm:$0xff]
        %v563 = vld [vmem:[#allocation2 + $0x4d8] sm:$0xff]
        %v564 = vld [vmem:[#allocation2 + $0x4f0] sm:$0xff]
        %v565 = vld [vmem:[#allocation2 + $0x508] sm:$0xff]
        %v566 = vld [vmem:[#allocation2 + $0x520] sm:$0xff]
        %v567 = vld [vmem:[#allocation2 + $0x538] sm:$0xff]
        %v568 = vld [vmem:[#allocation2 + $0x550] sm:$0xff]
        %v569 = vld [vmem:[#allocation2 + $0x568] sm:$0xff]
        %v570 = vld [vmem:[#allocation2 + $0x580] sm:$0xff]
        %v571 = vld [vmem:[#allocation2 + $0x598] sm:$0xff]
        %v572 = vld [vmem:[#allocation2 + $0x5b0] sm:$0xff]
        %v573 = vld [vmem:[#allocation2 + $0x5c8] sm:$0xff]
        %v574 = vld [vmem:[#allocation2 + $0x5e0] sm:$0xff]
        %v575 = vld [vmem:[#allocation2 + $0x5f8] sm:$0xff]
        %v576 = vld [vmem:[%s5] sm:$0x1]
        %v577 = vld [vmem:[%s5 + $0x1] sm:$0x1]
        %v578 = vld [vmem:[%s5 + $0x2] sm:$0x1]
        %v579 = vld [vmem:[%s5 + $0x3] sm:$0xf]
        %v580 = vld [vmem:[%s5 + $0x7] sm:$0xf]
        %v581 = vld [vmem:[%s5 + $0xb] sm:$0x3]
        %v582 = vld [vmem:[%s5 + $0xd] sm:$0x1]
        %v584 = vlaneseq
        %v585 = vshrl.u32 %v584, 7
        %v586 = vsub.s32 0, %v585
        %v587 = vrot.slane %v576, %v586
        %vm589 = vcmask 64512
        %v591 = vsel %vm589, %v301, 0
        %v594 = vsel %vm589, %v302, 0
        %v597 = vsel %vm589, %v303, 0
        %v600 = vsel %vm589, %v304, 0
        %v603 = vsel %vm589, %v305, 0
        %v606 = vsel %vm589, %v306, 0
        %v609 = vsel %vm589, %v307, 0
        %v612 = vsel %vm589, %v308, 0
        %v615 = vsel %vm589, %v309, 0
        %v618 = vsel %vm589, %v310, 0
        %v621 = vsel %vm589, %v311, 0
        %v624 = vsel %vm589, %v312, 0
        %v627 = vsel %vm589, %v313, 0
        %v630 = vsel %vm589, %v314, 0
        %v633 = vsel %vm589, %v315, 0
        %v636 = vsel %vm589, %v316, 0
        %vm638 = vcmask 1043456
        %v640 = vsel %vm638, %v317, 0
        %642 = vmatprep.subr.bf16.mxu0 0
        %643 = vmatpush1.bf16.msra.mxu0 %v640
        %644 = vmatprep.subr.bf16.mxu0 0
        %645 = vmatpush1.bf16.msra.mxu0 0
        %646 = vmatprep.subr.bf16.mxu0 0
        %647 = vmatpush1.bf16.msra.mxu0 0
        %648 = vmatprep.subr.bf16.mxu0 0
        %649 = vmatpush1.bf16.msra.mxu0 0
        %650 = vmatprep.subr.bf16.mxu0 0
        %651 = vmatpush1.bf16.msra.mxu0 0
        %652 = vmatprep.subr.bf16.mxu0 0
        %653 = vmatpush1.bf16.msra.mxu0 0
        %654 = vmatprep.subr.bf16.mxu0 0
        %655 = vmatpush1.bf16.msra.mxu0 0
        %656 = vmatprep.subr.bf16.mxu0 0
        %657 = vmatpush1.bf16.msra.mxu0 0
        %658 = vmatprep.subr.bf16.mxu0 0
        %659 = vmatpush1.bf16.msra.mxu0 0
        %660 = vmatprep.subr.bf16.mxu0 0
        %661 = vmatpush1.bf16.msra.mxu0 0
        %662 = vmatprep.subr.bf16.mxu0 0
        %663 = vmatpush1.bf16.msra.mxu0 0
        %664 = vmatprep.subr.bf16.mxu0 0
        %665 = vmatpush1.bf16.msra.mxu0 0
        %666 = vmatprep.subr.bf16.mxu0 0
        %667 = vmatpush1.bf16.msra.mxu0 0
        %668 = vmatprep.subr.bf16.mxu0 0
        %669 = vmatpush1.bf16.msra.mxu0 0
        %670 = vmatprep.subr.bf16.mxu0 0
        %671 = vmatpush1.bf16.msra.mxu0 0
        %672 = vmatprep.subr.bf16.mxu0 0
        %673 = vmatpush1.bf16.msra.mxu0 0
        %674 = vmatprep.mubr.bf16.mxu0 0
        %675 = vmatmul.mubr.bf16.gmra.mrb[0].mxu0 %v591
        %v676 = vpop.f32.mrb[0].mxu0
        %v677 = vadd.f32 %v587, %v676
        %v678 = vpop.f32.mrb[0].mxu0
        %v679 = vpop.f32.mrb[0].mxu0
        %v680 = vadd.f32 %v587, %v679
        %v681 = vpop.f32.mrb[0].mxu0
        %682 = vmatprep.mubr.bf16.mxu0 0
        %683 = vmatmul.mubr.bf16.gmra.mrb[0].mxu0 %v594
        %v684 = vpop.f32.mrb[0].mxu0
        %v685 = vadd.f32 %v587, %v684
        %v686 = vpop.f32.mrb[0].mxu0
        %v687 = vpop.f32.mrb[0].mxu0
        %v688 = vadd.f32 %v587, %v687
        %v689 = vpop.f32.mrb[0].mxu0
        %690 = vmatprep.mubr.bf16.mxu0 0
        %691 = vmatmul.mubr.bf16.gmra.mrb[0].mxu0 %v597
        %v692 = vpop.f32.mrb[0].mxu0
        %v693 = vadd.f32 %v587, %v692
        %v694 = vpop.f32.mrb[0].mxu0
        %v695 = vpop.f32.mrb[0].mxu0
        %v696 = vadd.f32 %v587, %v695
        %v697 = vpop.f32.mrb[0].mxu0
        %698 = vmatprep.mubr.bf16.mxu0 0
        %699 = vmatmul.mubr.bf16.gmra.mrb[0].mxu0 %v600
        %v700 = vpop.f32.mrb[0].mxu0
        %v701 = vadd.f32 %v587, %v700
        %v702 = vpop.f32.mrb[0].mxu0
        %v703 = vpop.f32.mrb[0].mxu0
        %v704 = vadd.f32 %v587, %v703
        %v705 = vpop.f32.mrb[0].mxu0
        %706 = vmatprep.mubr.bf16.mxu0 0
        %707 = vmatmul.mubr.bf16.gmra.mrb[0].mxu0 %v603
        %v708 = vpop.f32.mrb[0].mxu0
        %v709 = vadd.f32 %v587, %v708
        %v710 = vpop.f32.mrb[0].mxu0
        %v711 = vpop.f32.mrb[0].mxu0
        %v712 = vadd.f32 %v587, %v711
        %v713 = vpop.f32.mrb[0].mxu0
        %714 = vmatprep.mubr.bf16.mxu0 0
        %715 = vmatmul.mubr.bf16.gmra.mrb[0].mxu0 %v606
        %v716 = vpop.f32.mrb[0].mxu0
        %v717 = vadd.f32 %v587, %v716
        %v718 = vpop.f32.mrb[0].mxu0
        %v719 = vpop.f32.mrb[0].mxu0
        %v720 = vadd.f32 %v587, %v719
        %v721 = vpop.f32.mrb[0].mxu0
        %722 = vmatprep.mubr.bf16.mxu0 0
        %723 = vmatmul.mubr.bf16.gmra.mrb[0].mxu0 %v609
        %v724 = vpop.f32.mrb[0].mxu0
        %v725 = vadd.f32 %v587, %v724
        %v726 = vpop.f32.mrb[0].mxu0
        %v727 = vpop.f32.mrb[0].mxu0
        %v728 = vadd.f32 %v587, %v727
        %v729 = vpop.f32.mrb[0].mxu0
        %730 = vmatprep.mubr.bf16.mxu0 0
        %731 = vmatmul.mubr.bf16.gmra.mrb[0].mxu0 %v612
        %v732 = vpop.f32.mrb[0].mxu0
        %v733 = vadd.f32 %v587, %v732
        %v734 = vpop.f32.mrb[0].mxu0
        %v735 = vpop.f32.mrb[0].mxu0
        %v736 = vadd.f32 %v587, %v735
        %v737 = vpop.f32.mrb[0].mxu0
        %738 = vmatprep.mubr.bf16.mxu0 0
        %739 = vmatmul.mubr.bf16.gmra.mrb[0].mxu0 %v615
        %v740 = vpop.f32.mrb[0].mxu0
        %v741 = vadd.f32 %v587, %v740
        %v742 = vpop.f32.mrb[0].mxu0
        %v743 = vpop.f32.mrb[0].mxu0
        %v744 = vadd.f32 %v587, %v743
        %v745 = vpop.f32.mrb[0].mxu0
        %746 = vmatprep.mubr.bf16.mxu0 0
        %747 = vmatmul.mubr.bf16.gmra.mrb[0].mxu0 %v618
        %v748 = vpop.f32.mrb[0].mxu0
        %v749 = vadd.f32 %v587, %v748
        %v750 = vpop.f32.mrb[0].mxu0
        %v751 = vpop.f32.mrb[0].mxu0
        %v752 = vadd.f32 %v587, %v751
        %v753 = vpop.f32.mrb[0].mxu0
        %754 = vmatprep.mubr.bf16.mxu0 0
        %755 = vmatmul.mubr.bf16.gmra.mrb[0].mxu0 %v621
        %v756 = vpop.f32.mrb[0].mxu0
        %v757 = vadd.f32 %v587, %v756
        %v758 = vpop.f32.mrb[0].mxu0
        %v759 = vpop.f32.mrb[0].mxu0
        %v760 = vadd.f32 %v587, %v759
        %v761 = vpop.f32.mrb[0].mxu0
        %762 = vmatprep.mubr.bf16.mxu0 0
        %763 = vmatmul.mubr.bf16.gmra.mrb[0].mxu0 %v624
        %v764 = vpop.f32.mrb[0].mxu0
        %v765 = vadd.f32 %v587, %v764
        %v766 = vpop.f32.mrb[0].mxu0
        %v767 = vpop.f32.mrb[0].mxu0
        %v768 = vadd.f32 %v587, %v767
        %v769 = vpop.f32.mrb[0].mxu0
        %770 = vmatprep.mubr.bf16.mxu0 0
        %771 = vmatmul.mubr.bf16.gmra.mrb[0].mxu0 %v627
        %v772 = vpop.f32.mrb[0].mxu0
        %v773 = vadd.f32 %v587, %v772
        %v774 = vpop.f32.mrb[0].mxu0
        %v775 = vpop.f32.mrb[0].mxu0
        %v776 = vadd.f32 %v587, %v775
        %v777 = vpop.f32.mrb[0].mxu0
        %778 = vmatprep.mubr.bf16.mxu0 0
        %779 = vmatmul.mubr.bf16.gmra.mrb[0].mxu0 %v630
        %v780 = vpop.f32.mrb[0].mxu0
        %v781 = vadd.f32 %v587, %v780
        %v782 = vpop.f32.mrb[0].mxu0
        %v783 = vpop.f32.mrb[0].mxu0
        %v784 = vadd.f32 %v587, %v783
        %v785 = vpop.f32.mrb[0].mxu0
        %786 = vmatprep.mubr.bf16.mxu0 0
        %787 = vmatmul.mubr.bf16.gmra.mrb[0].mxu0 %v633
        %v788 = vpop.f32.mrb[0].mxu0
        %v789 = vadd.f32 %v587, %v788
        %v790 = vpop.f32.mrb[0].mxu0
        %v791 = vpop.f32.mrb[0].mxu0
        %v792 = vadd.f32 %v587, %v791
        %v793 = vpop.f32.mrb[0].mxu0
        %794 = vmatprep.mubr.bf16.mxu0 0
        %795 = vmatmul.mubr.bf16.gmra.mrb[0].mxu0 %v636
        %v796 = vpop.f32.mrb[0].mxu0
        %v797 = vadd.f32 %v587, %v796
        %v798 = vpop.f32.mrb[0].mxu0
        %v799 = vpop.f32.mrb[0].mxu0
        %v800 = vadd.f32 %v587, %v799
        %v801 = vpop.f32.mrb[0].mxu0
        %802 = vdwg.mxu0
        %v803 = vpack.c.bf16 %v680, %v677
        %v804 = vpack.c.bf16 %v688, %v685
        %v805 = vpack.c.bf16 %v696, %v693
        %v806 = vpack.c.bf16 %v704, %v701
        %v807 = vpack.c.bf16 %v712, %v709
        %v808 = vpack.c.bf16 %v720, %v717
        %v809 = vpack.c.bf16 %v728, %v725
        %v810 = vpack.c.bf16 %v736, %v733
        %v811 = vpack.c.bf16 %v744, %v741
        %v812 = vpack.c.bf16 %v752, %v749
        %v813 = vpack.c.bf16 %v760, %v757
        %v814 = vpack.c.bf16 %v768, %v765
        %v815 = vpack.c.bf16 %v776, %v773
        %v816 = vpack.c.bf16 %v784, %v781
        %v817 = vpack.c.bf16 %v792, %v789
        %v818 = vpack.c.bf16 %v800, %v797
        %v819 = vmax.bf16 %v803, 0
        %v820 = vmax.bf16 %v804, 0
        %v821 = vmax.bf16 %v805, 0
        %v822 = vmax.bf16 %v806, 0
        %v823 = vmax.bf16 %v807, 0
        %v824 = vmax.bf16 %v808, 0
        %v825 = vmax.bf16 %v809, 0
        %v826 = vmax.bf16 %v810, 0
        %v827 = vmax.bf16 %v811, 0
        %v828 = vmax.bf16 %v812, 0
        %v829 = vmax.bf16 %v813, 0
        %v830 = vmax.bf16 %v814, 0
        %v831 = vmax.bf16 %v815, 0
        %v832 = vmax.bf16 %v816, 0
        %v833 = vmax.bf16 %v817, 0
        %v834 = vmax.bf16 %v818, 0
        %v836 = vlaneseq
        %v837 = vshrl.u32 %v836, 7
        %v838 = vsub.s32 0, %v837
        %v839 = vrot.slane %v577, %v838
        %v857 = vunpack.c.l.b16 %v320
        %v858 = vunpack.c.l.b16 %v321
        %v859 = vunpack.c.l.b16 %v322
        %v860 = vunpack.c.l.b16 %v323
        %v861 = vunpack.c.l.b16 %v324
        %v862 = vunpack.c.l.b16 %v325
        %v863 = vunpack.c.l.b16 %v326
        %v864 = vunpack.c.l.b16 %v327
        %v865 = vunpack.c.l.b16 %v328
        %v866 = vunpack.c.l.b16 %v329
        %v867 = vunpack.c.l.b16 %v330
        %v868 = vunpack.c.l.b16 %v331
        %v869 = vunpack.c.l.b16 %v332
        %v870 = vunpack.c.l.b16 %v333
        %v871 = vunpack.c.l.b16 %v334
        %v872 = vunpack.c.l.b16 %v335
        %v873 = vpack.c.b16 %v858, %v857
        %v874 = vpack.c.b16 %v860, %v859
        %v875 = vpack.c.b16 %v862, %v861
        %v876 = vpack.c.b16 %v864, %v863
        %v877 = vpack.c.b16 %v866, %v865
        %v878 = vpack.c.b16 %v868, %v867
        %v879 = vpack.c.b16 %v870, %v869
        %v880 = vpack.c.b16 %v872, %v871
        %889 = vmatprep.subr.bf16.mxu0 0
        %890 = vmatpush1.bf16.msra.mxu0 %v873
        %891 = vmatprep.subr.bf16.mxu0 0
        %892 = vmatpush1.bf16.msra.mxu0 %v874
        %893 = vmatprep.subr.bf16.mxu0 0
        %894 = vmatpush1.bf16.msra.mxu0 %v875
        %895 = vmatprep.subr.bf16.mxu0 0
        %896 = vmatpush1.bf16.msra.mxu0 %v876
        %897 = vmatprep.subr.bf16.mxu0 0
        %898 = vmatpush1.bf16.msra.mxu0 %v877
        %899 = vmatprep.subr.bf16.mxu0 0
        %900 = vmatpush1.bf16.msra.mxu0 %v878
        %901 = vmatprep.subr.bf16.mxu0 0
        %902 = vmatpush1.bf16.msra.mxu0 %v879
        %903 = vmatprep.subr.bf16.mxu0 0
        %904 = vmatpush1.bf16.msra.mxu0 %v880
        %905 = vmatprep.subr.bf16.mxu0 0
        %906 = vmatpush1.bf16.msra.mxu0 0
        %907 = vmatprep.subr.bf16.mxu0 0
        %908 = vmatpush1.bf16.msra.mxu0 0
        %909 = vmatprep.subr.bf16.mxu0 0
        %910 = vmatpush1.bf16.msra.mxu0 0
        %911 = vmatprep.subr.bf16.mxu0 0
        %912 = vmatpush1.bf16.msra.mxu0 0
        %913 = vmatprep.subr.bf16.mxu0 0
        %914 = vmatpush1.bf16.msra.mxu0 0
        %915 = vmatprep.subr.bf16.mxu0 0
        %916 = vmatpush1.bf16.msra.mxu0 0
        %917 = vmatprep.subr.bf16.mxu0 0
        %918 = vmatpush1.bf16.msra.mxu0 0
        %919 = vmatprep.subr.bf16.mxu0 0
        %920 = vmatpush1.bf16.msra.mxu0 0
        %921 = vmatprep.mubr.bf16.mxu0 0
        %922 = vmatmul.mubr.bf16.gmra.mrb[0].mxu0 %v819
        %v923 = vpop.f32.mrb[0].mxu0
        %v924 = vadd.f32 %v839, %v923
        %v925 = vpop.f32.mrb[0].mxu0
        %v926 = vpop.f32.mrb[0].mxu0
        %v927 = vadd.f32 %v839, %v926
        %v928 = vpop.f32.mrb[0].mxu0
        %929 = vmatprep.mubr.bf16.mxu0 0
        %930 = vmatmul.mubr.bf16.gmra.mrb[0].mxu0 %v820
        %v931 = vpop.f32.mrb[0].mxu0
        %v932 = vadd.f32 %v839, %v931
        %v933 = vpop.f32.mrb[0].mxu0
        %v934 = vpop.f32.mrb[0].mxu0
        %v935 = vadd.f32 %v839, %v934
        %v936 = vpop.f32.mrb[0].mxu0
        %937 = vmatprep.mubr.bf16.mxu0 0
        %938 = vmatmul.mubr.bf16.gmra.mrb[0].mxu0 %v821
        %v939 = vpop.f32.mrb[0].mxu0
        %v940 = vadd.f32 %v839, %v939
        %v941 = vpop.f32.mrb[0].mxu0
        %v942 = vpop.f32.mrb[0].mxu0
        %v943 = vadd.f32 %v839, %v942
        %v944 = vpop.f32.mrb[0].mxu0
        %945 = vmatprep.mubr.bf16.mxu0 0
        %946 = vmatmul.mubr.bf16.gmra.mrb[0].mxu0 %v822
        %v947 = vpop.f32.mrb[0].mxu0
        %v948 = vadd.f32 %v839, %v947
        %v949 = vpop.f32.mrb[0].mxu0
        %v950 = vpop.f32.mrb[0].mxu0
        %v951 = vadd.f32 %v839, %v950
        %v952 = vpop.f32.mrb[0].mxu0
        %953 = vmatprep.mubr.bf16.mxu0 0
        %954 = vmatmul.mubr.bf16.gmra.mrb[0].mxu0 %v823
        %v955 = vpop.f32.mrb[0].mxu0
        %v956 = vadd.f32 %v839, %v955
        %v957 = vpop.f32.mrb[0].mxu0
        %v958 = vpop.f32.mrb[0].mxu0
        %v959 = vadd.f32 %v839, %v958
        %v960 = vpop.f32.mrb[0].mxu0
        %961 = vmatprep.mubr.bf16.mxu0 0
        %962 = vmatmul.mubr.bf16.gmra.mrb[0].mxu0 %v824
        %v963 = vpop.f32.mrb[0].mxu0
        %v964 = vadd.f32 %v839, %v963
        %v965 = vpop.f32.mrb[0].mxu0
        %v966 = vpop.f32.mrb[0].mxu0
        %v967 = vadd.f32 %v839, %v966
        %v968 = vpop.f32.mrb[0].mxu0
        %969 = vmatprep.mubr.bf16.mxu0 0
        %970 = vmatmul.mubr.bf16.gmra.mrb[0].mxu0 %v825
        %v971 = vpop.f32.mrb[0].mxu0
        %v972 = vadd.f32 %v839, %v971
        %v973 = vpop.f32.mrb[0].mxu0
        %v974 = vpop.f32.mrb[0].mxu0
        %v975 = vadd.f32 %v839, %v974
        %v976 = vpop.f32.mrb[0].mxu0
        %977 = vmatprep.mubr.bf16.mxu0 0
        %978 = vmatmul.mubr.bf16.gmra.mrb[0].mxu0 %v826
        %v979 = vpop.f32.mrb[0].mxu0
        %v980 = vadd.f32 %v839, %v979
        %v981 = vpop.f32.mrb[0].mxu0
        %v982 = vpop.f32.mrb[0].mxu0
        %v983 = vadd.f32 %v839, %v982
        %v984 = vpop.f32.mrb[0].mxu0
        %985 = vmatprep.mubr.bf16.mxu0 0
        %986 = vmatmul.mubr.bf16.gmra.mrb[0].mxu0 %v827
        %v987 = vpop.f32.mrb[0].mxu0
        %v988 = vadd.f32 %v839, %v987
        %v989 = vpop.f32.mrb[0].mxu0
        %v990 = vpop.f32.mrb[0].mxu0
        %v991 = vadd.f32 %v839, %v990
        %v992 = vpop.f32.mrb[0].mxu0
        %993 = vmatprep.mubr.bf16.mxu0 0
        %994 = vmatmul.mubr.bf16.gmra.mrb[0].mxu0 %v828
        %v995 = vpop.f32.mrb[0].mxu0
        %v996 = vadd.f32 %v839, %v995
        %v997 = vpop.f32.mrb[0].mxu0
        %v998 = vpop.f32.mrb[0].mxu0
        %v999 = vadd.f32 %v839, %v998
        %v1000 = vpop.f32.mrb[0].mxu0
        %1001 = vmatprep.mubr.bf16.mxu0 0
        %1002 = vmatmul.mubr.bf16.gmra.mrb[0].mxu0 %v829
        %v1003 = vpop.f32.mrb[0].mxu0
        %v1004 = vadd.f32 %v839, %v1003
        %v1005 = vpop.f32.mrb[0].mxu0
        %v1006 = vpop.f32.mrb[0].mxu0
        %v1007 = vadd.f32 %v839, %v1006
        %v1008 = vpop.f32.mrb[0].mxu0
        %1009 = vmatprep.mubr.bf16.mxu0 0
        %1010 = vmatmul.mubr.bf16.gmra.mrb[0].mxu0 %v830
        %v1011 = vpop.f32.mrb[0].mxu0
        %v1012 = vadd.f32 %v839, %v1011
        %v1013 = vpop.f32.mrb[0].mxu0
        %v1014 = vpop.f32.mrb[0].mxu0
        %v1015 = vadd.f32 %v839, %v1014
        %v1016 = vpop.f32.mrb[0].mxu0
        %1017 = vmatprep.mubr.bf16.mxu0 0
        %1018 = vmatmul.mubr.bf16.gmra.mrb[0].mxu0 %v831
        %v1019 = vpop.f32.mrb[0].mxu0
        %v1020 = vadd.f32 %v839, %v1019
        %v1021 = vpop.f32.mrb[0].mxu0
        %v1022 = vpop.f32.mrb[0].mxu0
        %v1023 = vadd.f32 %v839, %v1022
        %v1024 = vpop.f32.mrb[0].mxu0
        %1025 = vmatprep.mubr.bf16.mxu0 0
        %1026 = vmatmul.mubr.bf16.gmra.mrb[0].mxu0 %v832
        %v1027 = vpop.f32.mrb[0].mxu0
        %v1028 = vadd.f32 %v839, %v1027
        %v1029 = vpop.f32.mrb[0].mxu0
        %v1030 = vpop.f32.mrb[0].mxu0
        %v1031 = vadd.f32 %v839, %v1030
        %v1032 = vpop.f32.mrb[0].mxu0
        %1033 = vmatprep.mubr.bf16.mxu0 0
        %1034 = vmatmul.mubr.bf16.gmra.mrb[0].mxu0 %v833
        %v1035 = vpop.f32.mrb[0].mxu0
        %v1036 = vadd.f32 %v839, %v1035
        %v1037 = vpop.f32.mrb[0].mxu0
        %v1038 = vpop.f32.mrb[0].mxu0
        %v1039 = vadd.f32 %v839, %v1038
        %v1040 = vpop.f32.mrb[0].mxu0
        %1041 = vmatprep.mubr.bf16.mxu0 0
        %1042 = vmatmul.mubr.bf16.gmra.mrb[0].mxu0 %v834
        %v1043 = vpop.f32.mrb[0].mxu0
        %v1044 = vadd.f32 %v839, %v1043
        %v1045 = vpop.f32.mrb[0].mxu0
        %v1046 = vpop.f32.mrb[0].mxu0
        %v1047 = vadd.f32 %v839, %v1046
        %v1048 = vpop.f32.mrb[0].mxu0
        %1049 = vdwg.mxu0
        %v1050 = vpack.c.bf16 %v927, %v924
        %v1051 = vpack.c.bf16 %v935, %v932
        %v1052 = vpack.c.bf16 %v943, %v940
        %v1053 = vpack.c.bf16 %v951, %v948
        %v1054 = vpack.c.bf16 %v959, %v956
        %v1055 = vpack.c.bf16 %v967, %v964
        %v1056 = vpack.c.bf16 %v975, %v972
        %v1057 = vpack.c.bf16 %v983, %v980
        %v1058 = vpack.c.bf16 %v991, %v988
        %v1059 = vpack.c.bf16 %v999, %v996
        %v1060 = vpack.c.bf16 %v1007, %v1004
        %v1061 = vpack.c.bf16 %v1015, %v1012
        %v1062 = vpack.c.bf16 %v1023, %v1020
        %v1063 = vpack.c.bf16 %v1031, %v1028
        %v1064 = vpack.c.bf16 %v1039, %v1036
        %v1065 = vpack.c.bf16 %v1047, %v1044
        %v1066 = vmax.bf16 %v1050, 0
        %v1067 = vmax.bf16 %v1051, 0
        %v1068 = vmax.bf16 %v1052, 0
        %v1069 = vmax.bf16 %v1053, 0
        %v1070 = vmax.bf16 %v1054, 0
        %v1071 = vmax.bf16 %v1055, 0
        %v1072 = vmax.bf16 %v1056, 0
        %v1073 = vmax.bf16 %v1057, 0
        %v1074 = vmax.bf16 %v1058, 0
        %v1075 = vmax.bf16 %v1059, 0
        %v1076 = vmax.bf16 %v1060, 0
        %v1077 = vmax.bf16 %v1061, 0
        %v1078 = vmax.bf16 %v1062, 0
        %v1079 = vmax.bf16 %v1063, 0
        %v1080 = vmax.bf16 %v1064, 0
        %v1081 = vmax.bf16 %v1065, 0
        %v1083 = vlaneseq
        %v1084 = vshrl.u32 %v1083, 7
        %v1085 = vsub.s32 0, %v1084
        %v1086 = vrot.slane %v578, %v1085
        %v1104 = vunpack.c.l.b16 %v336
        %v1105 = vunpack.c.l.b16 %v337
        %v1106 = vunpack.c.l.b16 %v338
        %v1107 = vunpack.c.l.b16 %v339
        %v1108 = vunpack.c.l.b16 %v340
        %v1109 = vunpack.c.l.b16 %v341
        %v1110 = vunpack.c.l.b16 %v342
        %v1111 = vunpack.c.l.b16 %v343
        %v1112 = vunpack.c.l.b16 %v344
        %v1113 = vunpack.c.l.b16 %v345
        %v1114 = vunpack.c.l.b16 %v346
        %v1115 = vunpack.c.l.b16 %v347
        %v1116 = vunpack.c.l.b16 %v348
        %v1117 = vunpack.c.l.b16 %v349
        %v1118 = vunpack.c.l.b16 %v350
        %v1119 = vunpack.c.l.b16 %v351
        %v1120 = vpack.c.b16 %v1105, %v1104
        %v1121 = vpack.c.b16 %v1107, %v1106
        %v1122 = vpack.c.b16 %v1109, %v1108
        %v1123 = vpack.c.b16 %v1111, %v1110
        %v1124 = vpack.c.b16 %v1113, %v1112
        %v1125 = vpack.c.b16 %v1115, %v1114
        %v1126 = vpack.c.b16 %v1117, %v1116
        %v1127 = vpack.c.b16 %v1119, %v1118
        %1136 = vmatprep.subr.bf16.mxu0 0
        %1137 = vmatpush1.bf16.msra.mxu0 %v1120
        %1138 = vmatprep.subr.bf16.mxu0 0
        %1139 = vmatpush1.bf16.msra.mxu0 %v1121
        %1140 = vmatprep.subr.bf16.mxu0 0
        %1141 = vmatpush1.bf16.msra.mxu0 %v1122
        %1142 = vmatprep.subr.bf16.mxu0 0
        %1143 = vmatpush1.bf16.msra.mxu0 %v1123
        %1144 = vmatprep.subr.bf16.mxu0 0
        %1145 = vmatpush1.bf16.msra.mxu0 %v1124
        %1146 = vmatprep.subr.bf16.mxu0 0
        %1147 = vmatpush1.bf16.msra.mxu0 %v1125
        %1148 = vmatprep.subr.bf16.mxu0 0
        %1149 = vmatpush1.bf16.msra.mxu0 %v1126
        %1150 = vmatprep.subr.bf16.mxu0 0
        %1151 = vmatpush1.bf16.msra.mxu0 %v1127
        %1152 = vmatprep.subr.bf16.mxu0 0
        %1153 = vmatpush1.bf16.msra.mxu0 0
        %1154 = vmatprep.subr.bf16.mxu0 0
        %1155 = vmatpush1.bf16.msra.mxu0 0
        %1156 = vmatprep.subr.bf16.mxu0 0
        %1157 = vmatpush1.bf16.msra.mxu0 0
        %1158 = vmatprep.subr.bf16.mxu0 0
        %1159 = vmatpush1.bf16.msra.mxu0 0
        %1160 = vmatprep.subr.bf16.mxu0 0
        %1161 = vmatpush1.bf16.msra.mxu0 0
        %1162 = vmatprep.subr.bf16.mxu0 0
        %1163 = vmatpush1.bf16.msra.mxu0 0
        %1164 = vmatprep.subr.bf16.mxu0 0
        %1165 = vmatpush1.bf16.msra.mxu0 0
        %1166 = vmatprep.subr.bf16.mxu0 0
        %1167 = vmatpush1.bf16.msra.mxu0 0
        %1168 = vmatprep.mubr.bf16.mxu0 0
        %1169 = vmatmul.mubr.bf16.gmra.mrb[0].mxu0 %v1066
        %v1170 = vpop.f32.mrb[0].mxu0
        %v1171 = vadd.f32 %v1086, %v1170
        %v1172 = vpop.f32.mrb[0].mxu0
        %v1173 = vpop.f32.mrb[0].mxu0
        %v1174 = vadd.f32 %v1086, %v1173
        %v1175 = vpop.f32.mrb[0].mxu0
        %1176 = vmatprep.mubr.bf16.mxu0 0
        %1177 = vmatmul.mubr.bf16.gmra.mrb[0].mxu0 %v1067
        %v1178 = vpop.f32.mrb[0].mxu0
        %v1179 = vadd.f32 %v1086, %v1178
        %v1180 = vpop.f32.mrb[0].mxu0
        %v1181 = vpop.f32.mrb[0].mxu0
        %v1182 = vadd.f32 %v1086, %v1181
        %v1183 = vpop.f32.mrb[0].mxu0
        %1184 = vmatprep.mubr.bf16.mxu0 0
        %1185 = vmatmul.mubr.bf16.gmra.mrb[0].mxu0 %v1068
        %v1186 = vpop.f32.mrb[0].mxu0
        %v1187 = vadd.f32 %v1086, %v1186
        %v1188 = vpop.f32.mrb[0].mxu0
        %v1189 = vpop.f32.mrb[0].mxu0
        %v1190 = vadd.f32 %v1086, %v1189
        %v1191 = vpop.f32.mrb[0].mxu0
        %1192 = vmatprep.mubr.bf16.mxu0 0
        %1193 = vmatmul.mubr.bf16.gmra.mrb[0].mxu0 %v1069
        %v1194 = vpop.f32.mrb[0].mxu0
        %v1195 = vadd.f32 %v1086, %v1194
        %v1196 = vpop.f32.mrb[0].mxu0
        %v1197 = vpop.f32.mrb[0].mxu0
        %v1198 = vadd.f32 %v1086, %v1197
        %v1199 = vpop.f32.mrb[0].mxu0
        %1200 = vmatprep.mubr.bf16.mxu0 0
        %1201 = vmatmul.mubr.bf16.gmra.mrb[0].mxu0 %v1070
        %v1202 = vpop.f32.mrb[0].mxu0
        %v1203 = vadd.f32 %v1086, %v1202
        %v1204 = vpop.f32.mrb[0].mxu0
        %v1205 = vpop.f32.mrb[0].mxu0
        %v1206 = vadd.f32 %v1086, %v1205
        %v1207 = vpop.f32.mrb[0].mxu0
        %1208 = vmatprep.mubr.bf16.mxu0 0
        %1209 = vmatmul.mubr.bf16.gmra.mrb[0].mxu0 %v1071
        %v1210 = vpop.f32.mrb[0].mxu0
        %v1211 = vadd.f32 %v1086, %v1210
        %v1212 = vpop.f32.mrb[0].mxu0
        %v1213 = vpop.f32.mrb[0].mxu0
        %v1214 = vadd.f32 %v1086, %v1213
        %v1215 = vpop.f32.mrb[0].mxu0
        %1216 = vmatprep.mubr.bf16.mxu0 0
        %1217 = vmatmul.mubr.bf16.gmra.mrb[0].mxu0 %v1072
        %v1218 = vpop.f32.mrb[0].mxu0
        %v1219 = vadd.f32 %v1086, %v1218
        %v1220 = vpop.f32.mrb[0].mxu0
        %v1221 = vpop.f32.mrb[0].mxu0
        %v1222 = vadd.f32 %v1086, %v1221
        %v1223 = vpop.f32.mrb[0].mxu0
        %1224 = vmatprep.mubr.bf16.mxu0 0
        %1225 = vmatmul.mubr.bf16.gmra.mrb[0].mxu0 %v1073
        %v1226 = vpop.f32.mrb[0].mxu0
        %v1227 = vadd.f32 %v1086, %v1226
        %v1228 = vpop.f32.mrb[0].mxu0
        %v1229 = vpop.f32.mrb[0].mxu0
        %v1230 = vadd.f32 %v1086, %v1229
        %v1231 = vpop.f32.mrb[0].mxu0
        %1232 = vmatprep.mubr.bf16.mxu0 0
        %1233 = vmatmul.mubr.bf16.gmra.mrb[0].mxu0 %v1074
        %v1234 = vpop.f32.mrb[0].mxu0
        %v1235 = vadd.f32 %v1086, %v1234
        %v1236 = vpop.f32.mrb[0].mxu0
        %v1237 = vpop.f32.mrb[0].mxu0
        %v1238 = vadd.f32 %v1086, %v1237
        %v1239 = vpop.f32.mrb[0].mxu0
        %1240 = vmatprep.mubr.bf16.mxu0 0
        %1241 = vmatmul.mubr.bf16.gmra.mrb[0].mxu0 %v1075
        %v1242 = vpop.f32.mrb[0].mxu0
        %v1243 = vadd.f32 %v1086, %v1242
        %v1244 = vpop.f32.mrb[0].mxu0
        %v1245 = vpop.f32.mrb[0].mxu0
        %v1246 = vadd.f32 %v1086, %v1245
        %v1247 = vpop.f32.mrb[0].mxu0
        %1248 = vmatprep.mubr.bf16.mxu0 0
        %1249 = vmatmul.mubr.bf16.gmra.mrb[0].mxu0 %v1076
        %v1250 = vpop.f32.mrb[0].mxu0
        %v1251 = vadd.f32 %v1086, %v1250
        %v1252 = vpop.f32.mrb[0].mxu0
        %v1253 = vpop.f32.mrb[0].mxu0
        %v1254 = vadd.f32 %v1086, %v1253
        %v1255 = vpop.f32.mrb[0].mxu0
        %1256 = vmatprep.mubr.bf16.mxu0 0
        %1257 = vmatmul.mubr.bf16.gmra.mrb[0].mxu0 %v1077
        %v1258 = vpop.f32.mrb[0].mxu0
        %v1259 = vadd.f32 %v1086, %v1258
        %v1260 = vpop.f32.mrb[0].mxu0
        %v1261 = vpop.f32.mrb[0].mxu0
        %v1262 = vadd.f32 %v1086, %v1261
        %v1263 = vpop.f32.mrb[0].mxu0
        %1264 = vmatprep.mubr.bf16.mxu0 0
        %1265 = vmatmul.mubr.bf16.gmra.mrb[0].mxu0 %v1078
        %v1266 = vpop.f32.mrb[0].mxu0
        %v1267 = vadd.f32 %v1086, %v1266
        %v1268 = vpop.f32.mrb[0].mxu0
        %v1269 = vpop.f32.mrb[0].mxu0
        %v1270 = vadd.f32 %v1086, %v1269
        %v1271 = vpop.f32.mrb[0].mxu0
        %1272 = vmatprep.mubr.bf16.mxu0 0
        %1273 = vmatmul.mubr.bf16.gmra.mrb[0].mxu0 %v1079
        %v1274 = vpop.f32.mrb[0].mxu0
        %v1275 = vadd.f32 %v1086, %v1274
        %v1276 = vpop.f32.mrb[0].mxu0
        %v1277 = vpop.f32.mrb[0].mxu0
        %v1278 = vadd.f32 %v1086, %v1277
        %v1279 = vpop.f32.mrb[0].mxu0
        %1280 = vmatprep.mubr.bf16.mxu0 0
        %1281 = vmatmul.mubr.bf16.gmra.mrb[0].mxu0 %v1080
        %v1282 = vpop.f32.mrb[0].mxu0
        %v1283 = vadd.f32 %v1086, %v1282
        %v1284 = vpop.f32.mrb[0].mxu0
        %v1285 = vpop.f32.mrb[0].mxu0
        %v1286 = vadd.f32 %v1086, %v1285
        %v1287 = vpop.f32.mrb[0].mxu0
        %1288 = vmatprep.mubr.bf16.mxu0 0
        %1289 = vmatmul.mubr.bf16.gmra.mrb[0].mxu0 %v1081
        %v1290 = vpop.f32.mrb[0].mxu0
        %v1291 = vadd.f32 %v1086, %v1290
        %v1292 = vpop.f32.mrb[0].mxu0
        %v1293 = vpop.f32.mrb[0].mxu0
        %v1294 = vadd.f32 %v1086, %v1293
        %v1295 = vpop.f32.mrb[0].mxu0
        %1296 = vdwg.mxu0
        %v1297 = vpack.c.bf16 %v1174, %v1171
        %v1298 = vpack.c.bf16 %v1182, %v1179
        %v1299 = vpack.c.bf16 %v1190, %v1187
        %v1300 = vpack.c.bf16 %v1198, %v1195
        %v1301 = vpack.c.bf16 %v1206, %v1203
        %v1302 = vpack.c.bf16 %v1214, %v1211
        %v1303 = vpack.c.bf16 %v1222, %v1219
        %v1304 = vpack.c.bf16 %v1230, %v1227
        %v1305 = vpack.c.bf16 %v1238, %v1235
        %v1306 = vpack.c.bf16 %v1246, %v1243
        %v1307 = vpack.c.bf16 %v1254, %v1251
        %v1308 = vpack.c.bf16 %v1262, %v1259
        %v1309 = vpack.c.bf16 %v1270, %v1267
        %v1310 = vpack.c.bf16 %v1278, %v1275
        %v1311 = vpack.c.bf16 %v1286, %v1283
        %v1312 = vpack.c.bf16 %v1294, %v1291
        %v1345 = vunpack.c.l.b16 %v352
        %v1346 = vunpack.c.h.b16 %v352
        %v1347 = vunpack.c.l.b16 %v353
        %v1348 = vunpack.c.h.b16 %v353
        %v1349 = vunpack.c.l.b16 %v354
        %v1350 = vunpack.c.h.b16 %v354
        %v1351 = vunpack.c.l.b16 %v355
        %v1352 = vunpack.c.h.b16 %v355
        %v1353 = vunpack.c.l.b16 %v356
        %v1354 = vunpack.c.h.b16 %v356
        %v1355 = vunpack.c.l.b16 %v357
        %v1356 = vunpack.c.h.b16 %v357
        %v1357 = vunpack.c.l.b16 %v358
        %v1358 = vunpack.c.h.b16 %v358
        %v1359 = vunpack.c.l.b16 %v359
        %v1360 = vunpack.c.h.b16 %v359
        %v1361 = vunpack.c.l.b16 %v360
        %v1362 = vunpack.c.h.b16 %v360
        %v1363 = vunpack.c.l.b16 %v361
        %v1364 = vunpack.c.h.b16 %v361
        %v1365 = vunpack.c.l.b16 %v362
        %v1366 = vunpack.c.h.b16 %v362
        %v1367 = vunpack.c.l.b16 %v363
        %v1368 = vunpack.c.h.b16 %v363
        %v1369 = vunpack.c.l.b16 %v364
        %v1370 = vunpack.c.h.b16 %v364
        %v1371 = vunpack.c.l.b16 %v365
        %v1372 = vunpack.c.h.b16 %v365
        %v1373 = vunpack.c.l.b16 %v366
        %v1374 = vunpack.c.h.b16 %v366
        %v1375 = vunpack.c.l.b16 %v367
        %v1376 = vunpack.c.h.b16 %v367
        %v1377 = vunpack.c.l.b16 %v368
        %v1378 = vunpack.c.h.b16 %v368
        %v1379 = vunpack.c.l.b16 %v369
        %v1380 = vunpack.c.h.b16 %v369
        %v1381 = vunpack.c.l.b16 %v370
        %v1382 = vunpack.c.h.b16 %v370
        %v1383 = vunpack.c.l.b16 %v371
        %v1384 = vunpack.c.h.b16 %v371
        %v1385 = vunpack.c.l.b16 %v372
        %v1386 = vunpack.c.h.b16 %v372
        %v1387 = vunpack.c.l.b16 %v373
        %v1388 = vunpack.c.h.b16 %v373
        %v1389 = vunpack.c.l.b16 %v374
        %v1390 = vunpack.c.h.b16 %v374
        %v1391 = vunpack.c.l.b16 %v375
        %v1392 = vunpack.c.h.b16 %v375
        %v1393 = vunpack.c.l.b16 %v376
        %v1394 = vunpack.c.h.b16 %v376
        %v1395 = vunpack.c.l.b16 %v377
        %v1396 = vunpack.c.h.b16 %v377
        %v1397 = vunpack.c.l.b16 %v378
        %v1398 = vunpack.c.h.b16 %v378
        %v1399 = vunpack.c.l.b16 %v379
        %v1400 = vunpack.c.h.b16 %v379
        %v1401 = vunpack.c.l.b16 %v380
        %v1402 = vunpack.c.h.b16 %v380
        %v1403 = vunpack.c.l.b16 %v381
        %v1404 = vunpack.c.h.b16 %v381
        %v1405 = vunpack.c.l.b16 %v382
        %v1406 = vunpack.c.h.b16 %v382
        %v1407 = vunpack.c.l.b16 %v383
        %v1408 = vunpack.c.h.b16 %v383
        %v1409 = vpack.c.b16 %v1349, %v1345
        %v1410 = vpack.c.b16 %v1350, %v1346
        %v1411 = vpack.c.b16 %v1351, %v1347
        %v1412 = vpack.c.b16 %v1352, %v1348
        %v1413 = vpack.c.b16 %v1357, %v1353
        %v1414 = vpack.c.b16 %v1358, %v1354
        %v1415 = vpack.c.b16 %v1359, %v1355
        %v1416 = vpack.c.b16 %v1360, %v1356
        %v1417 = vpack.c.b16 %v1365, %v1361
        %v1418 = vpack.c.b16 %v1366, %v1362
        %v1419 = vpack.c.b16 %v1367, %v1363
        %v1420 = vpack.c.b16 %v1368, %v1364
        %v1421 = vpack.c.b16 %v1373, %v1369
        %v1422 = vpack.c.b16 %v1374, %v1370
        %v1423 = vpack.c.b16 %v1375, %v1371
        %v1424 = vpack.c.b16 %v1376, %v1372
        %v1425 = vpack.c.b16 %v1381, %v1377
        %v1426 = vpack.c.b16 %v1382, %v1378
        %v1427 = vpack.c.b16 %v1383, %v1379
        %v1428 = vpack.c.b16 %v1384, %v1380
        %v1429 = vpack.c.b16 %v1389, %v1385
        %v1430 = vpack.c.b16 %v1390, %v1386
        %v1431 = vpack.c.b16 %v1391, %v1387
        %v1432 = vpack.c.b16 %v1392, %v1388
        %v1433 = vpack.c.b16 %v1397, %v1393
        %v1434 = vpack.c.b16 %v1398, %v1394
        %v1435 = vpack.c.b16 %v1399, %v1395
        %v1436 = vpack.c.b16 %v1400, %v1396
        %v1437 = vpack.c.b16 %v1405, %v1401
        %v1438 = vpack.c.b16 %v1406, %v1402
        %v1439 = vpack.c.b16 %v1407, %v1403
        %v1440 = vpack.c.b16 %v1408, %v1404
        %1473 = vmatprep.subr.bf16.mxu0 %v1410
        %1474 = vmatpush1.bf16.msra.mxu0 %v1409
        %1475 = vmatprep.subr.bf16.mxu0 %v1414
        %1476 = vmatpush1.bf16.msra.mxu0 %v1413
        %1477 = vmatprep.subr.bf16.mxu0 %v1418
        %1478 = vmatpush1.bf16.msra.mxu0 %v1417
        %1479 = vmatprep.subr.bf16.mxu0 %v1422
        %1480 = vmatpush1.bf16.msra.mxu0 %v1421
        %1481 = vmatprep.subr.bf16.mxu0 %v1426
        %1482 = vmatpush1.bf16.msra.mxu0 %v1425
        %1483 = vmatprep.subr.bf16.mxu0 %v1430
        %1484 = vmatpush1.bf16.msra.mxu0 %v1429
        %1485 = vmatprep.subr.bf16.mxu0 %v1434
        %1486 = vmatpush1.bf16.msra.mxu0 %v1433
        %1487 = vmatprep.subr.bf16.mxu0 %v1438
        %1488 = vmatpush1.bf16.msra.mxu0 %v1437
        %1489 = vmatprep.subr.bf16.mxu0 0
        %1490 = vmatpush1.bf16.msra.mxu0 0
        %1491 = vmatprep.subr.bf16.mxu0 0
        %1492 = vmatpush1.bf16.msra.mxu0 0
        %1493 = vmatprep.subr.bf16.mxu0 0
        %1494 = vmatpush1.bf16.msra.mxu0 0
        %1495 = vmatprep.subr.bf16.mxu0 0
        %1496 = vmatpush1.bf16.msra.mxu0 0
        %1497 = vmatprep.subr.bf16.mxu0 0
        %1498 = vmatpush1.bf16.msra.mxu0 0
        %1499 = vmatprep.subr.bf16.mxu0 0
        %1500 = vmatpush1.bf16.msra.mxu0 0
        %1501 = vmatprep.subr.bf16.mxu0 0
        %1502 = vmatpush1.bf16.msra.mxu0 0
        %1503 = vmatprep.subr.bf16.mxu0 0
        %1504 = vmatpush1.bf16.msra.mxu0 0
        %1505 = vmatprep.mubr.bf16.mxu0 0
        %1506 = vmatmul.mubr.bf16.gmra.mrb[0].mxu0 %v1297
        %v1507 = vpop.f32.mrb[0].mxu0
        %v1508 = vadd.f32 0.0, %v1507
        %v1509 = vpop.f32.mrb[0].mxu0
        %v1510 = vadd.f32 0.0, %v1509
        %v1511 = vpop.f32.mrb[0].mxu0
        %v1512 = vadd.f32 0.0, %v1511
        %v1513 = vpop.f32.mrb[0].mxu0
        %v1514 = vadd.f32 0.0, %v1513
        %1515 = vmatprep.mubr.bf16.mxu0 0
        %1516 = vmatmul.mubr.bf16.gmra.mrb[0].mxu0 %v1298
        %v1517 = vpop.f32.mrb[0].mxu0
        %v1518 = vadd.f32 0.0, %v1517
        %v1519 = vpop.f32.mrb[0].mxu0
        %v1520 = vadd.f32 0.0, %v1519
        %v1521 = vpop.f32.mrb[0].mxu0
        %v1522 = vadd.f32 0.0, %v1521
        %v1523 = vpop.f32.mrb[0].mxu0
        %v1524 = vadd.f32 0.0, %v1523
        %1525 = vmatprep.mubr.bf16.mxu0 0
        %1526 = vmatmul.mubr.bf16.gmra.mrb[0].mxu0 %v1299
        %v1527 = vpop.f32.mrb[0].mxu0
        %v1528 = vadd.f32 0.0, %v1527
        %v1529 = vpop.f32.mrb[0].mxu0
        %v1530 = vadd.f32 0.0, %v1529
        %v1531 = vpop.f32.mrb[0].mxu0
        %v1532 = vadd.f32 0.0, %v1531
        %v1533 = vpop.f32.mrb[0].mxu0
        %v1534 = vadd.f32 0.0, %v1533
        %1535 = vmatprep.mubr.bf16.mxu0 0
        %1536 = vmatmul.mubr.bf16.gmra.mrb[0].mxu0 %v1300
        %v1537 = vpop.f32.mrb[0].mxu0
        %v1538 = vadd.f32 0.0, %v1537
        %v1539 = vpop.f32.mrb[0].mxu0
        %v1540 = vadd.f32 0.0, %v1539
        %v1541 = vpop.f32.mrb[0].mxu0
        %v1542 = vadd.f32 0.0, %v1541
        %v1543 = vpop.f32.mrb[0].mxu0
        %v1544 = vadd.f32 0.0, %v1543
        %1545 = vmatprep.mubr.bf16.mxu0 0
        %1546 = vmatmul.mubr.bf16.gmra.mrb[0].mxu0 %v1301
        %v1547 = vpop.f32.mrb[0].mxu0
        %v1548 = vadd.f32 0.0, %v1547
        %v1549 = vpop.f32.mrb[0].mxu0
        %v1550 = vadd.f32 0.0, %v1549
        %v1551 = vpop.f32.mrb[0].mxu0
        %v1552 = vadd.f32 0.0, %v1551
        %v1553 = vpop.f32.mrb[0].mxu0
        %v1554 = vadd.f32 0.0, %v1553
        %1555 = vmatprep.mubr.bf16.mxu0 0
        %1556 = vmatmul.mubr.bf16.gmra.mrb[0].mxu0 %v1302
        %v1557 = vpop.f32.mrb[0].mxu0
        %v1558 = vadd.f32 0.0, %v1557
        %v1559 = vpop.f32.mrb[0].mxu0
        %v1560 = vadd.f32 0.0, %v1559
        %v1561 = vpop.f32.mrb[0].mxu0
        %v1562 = vadd.f32 0.0, %v1561
        %v1563 = vpop.f32.mrb[0].mxu0
        %v1564 = vadd.f32 0.0, %v1563
        %1565 = vmatprep.mubr.bf16.mxu0 0
        %1566 = vmatmul.mubr.bf16.gmra.mrb[0].mxu0 %v1303
        %v1567 = vpop.f32.mrb[0].mxu0
        %v1568 = vadd.f32 0.0, %v1567
        %v1569 = vpop.f32.mrb[0].mxu0
        %v1570 = vadd.f32 0.0, %v1569
        %v1571 = vpop.f32.mrb[0].mxu0
        %v1572 = vadd.f32 0.0, %v1571
        %v1573 = vpop.f32.mrb[0].mxu0
        %v1574 = vadd.f32 0.0, %v1573
        %1575 = vmatprep.mubr.bf16.mxu0 0
        %1576 = vmatmul.mubr.bf16.gmra.mrb[0].mxu0 %v1304
        %v1577 = vpop.f32.mrb[0].mxu0
        %v1578 = vadd.f32 0.0, %v1577
        %v1579 = vpop.f32.mrb[0].mxu0
        %v1580 = vadd.f32 0.0, %v1579
        %v1581 = vpop.f32.mrb[0].mxu0
        %v1582 = vadd.f32 0.0, %v1581
        %v1583 = vpop.f32.mrb[0].mxu0
        %v1584 = vadd.f32 0.0, %v1583
        %1585 = vmatprep.mubr.bf16.mxu0 0
        %1586 = vmatmul.mubr.bf16.gmra.mrb[0].mxu0 %v1305
        %v1587 = vpop.f32.mrb[0].mxu0
        %v1588 = vadd.f32 0.0, %v1587
        %v1589 = vpop.f32.mrb[0].mxu0
        %v1590 = vadd.f32 0.0, %v1589
        %v1591 = vpop.f32.mrb[0].mxu0
        %v1592 = vadd.f32 0.0, %v1591
        %v1593 = vpop.f32.mrb[0].mxu0
        %v1594 = vadd.f32 0.0, %v1593
        %1595 = vmatprep.mubr.bf16.mxu0 0
        %1596 = vmatmul.mubr.bf16.gmra.mrb[0].mxu0 %v1306
        %v1597 = vpop.f32.mrb[0].mxu0
        %v1598 = vadd.f32 0.0, %v1597
        %v1599 = vpop.f32.mrb[0].mxu0
        %v1600 = vadd.f32 0.0, %v1599
        %v1601 = vpop.f32.mrb[0].mxu0
        %v1602 = vadd.f32 0.0, %v1601
        %v1603 = vpop.f32.mrb[0].mxu0
        %v1604 = vadd.f32 0.0, %v1603
        %1605 = vmatprep.mubr.bf16.mxu0 0
        %1606 = vmatmul.mubr.bf16.gmra.mrb[0].mxu0 %v1307
        %v1607 = vpop.f32.mrb[0].mxu0
        %v1608 = vadd.f32 0.0, %v1607
        %v1609 = vpop.f32.mrb[0].mxu0
        %v1610 = vadd.f32 0.0, %v1609
        %v1611 = vpop.f32.mrb[0].mxu0
        %v1612 = vadd.f32 0.0, %v1611
        %v1613 = vpop.f32.mrb[0].mxu0
        %v1614 = vadd.f32 0.0, %v1613
        %1615 = vmatprep.mubr.bf16.mxu0 0
        %1616 = vmatmul.mubr.bf16.gmra.mrb[0].mxu0 %v1308
        %v1617 = vpop.f32.mrb[0].mxu0
        %v1618 = vadd.f32 0.0, %v1617
        %v1619 = vpop.f32.mrb[0].mxu0
        %v1620 = vadd.f32 0.0, %v1619
        %v1621 = vpop.f32.mrb[0].mxu0
        %v1622 = vadd.f32 0.0, %v1621
        %v1623 = vpop.f32.mrb[0].mxu0
        %v1624 = vadd.f32 0.0, %v1623
        %1625 = vmatprep.mubr.bf16.mxu0 0
        %1626 = vmatmul.mubr.bf16.gmra.mrb[0].mxu0 %v1309
        %v1627 = vpop.f32.mrb[0].mxu0
        %v1628 = vadd.f32 0.0, %v1627
        %v1629 = vpop.f32.mrb[0].mxu0
        %v1630 = vadd.f32 0.0, %v1629
        %v1631 = vpop.f32.mrb[0].mxu0
        %v1632 = vadd.f32 0.0, %v1631
        %v1633 = vpop.f32.mrb[0].mxu0
        %v1634 = vadd.f32 0.0, %v1633
        %1635 = vmatprep.mubr.bf16.mxu0 0
        %1636 = vmatmul.mubr.bf16.gmra.mrb[0].mxu0 %v1310
        %v1637 = vpop.f32.mrb[0].mxu0
        %v1638 = vadd.f32 0.0, %v1637
        %v1639 = vpop.f32.mrb[0].mxu0
        %v1640 = vadd.f32 0.0, %v1639
        %v1641 = vpop.f32.mrb[0].mxu0
        %v1642 = vadd.f32 0.0, %v1641
        %v1643 = vpop.f32.mrb[0].mxu0
        %v1644 = vadd.f32 0.0, %v1643
        %1645 = vmatprep.mubr.bf16.mxu0 0
        %1646 = vmatmul.mubr.bf16.gmra.mrb[0].mxu0 %v1311
        %v1647 = vpop.f32.mrb[0].mxu0
        %v1648 = vadd.f32 0.0, %v1647
        %v1649 = vpop.f32.mrb[0].mxu0
        %v1650 = vadd.f32 0.0, %v1649
        %v1651 = vpop.f32.mrb[0].mxu0
        %v1652 = vadd.f32 0.0, %v1651
        %v1653 = vpop.f32.mrb[0].mxu0
        %v1654 = vadd.f32 0.0, %v1653
        %1655 = vmatprep.mubr.bf16.mxu0 0
        %1656 = vmatmul.mubr.bf16.gmra.mrb[0].mxu0 %v1312
        %v1657 = vpop.f32.mrb[0].mxu0
        %v1658 = vadd.f32 0.0, %v1657
        %v1659 = vpop.f32.mrb[0].mxu0
        %v1660 = vadd.f32 0.0, %v1659
        %v1661 = vpop.f32.mrb[0].mxu0
        %v1662 = vadd.f32 0.0, %v1661
        %v1663 = vpop.f32.mrb[0].mxu0
        %v1664 = vadd.f32 0.0, %v1663
        %1665 = vdwg.mxu0
        %1666 = vmatprep.subr.bf16.mxu0 %v1412
        %1667 = vmatpush1.bf16.msra.mxu0 %v1411
        %1668 = vmatprep.subr.bf16.mxu0 %v1416
        %1669 = vmatpush1.bf16.msra.mxu0 %v1415
        %1670 = vmatprep.subr.bf16.mxu0 %v1420
        %1671 = vmatpush1.bf16.msra.mxu0 %v1419
        %1672 = vmatprep.subr.bf16.mxu0 %v1424
        %1673 = vmatpush1.bf16.msra.mxu0 %v1423
        %1674 = vmatprep.subr.bf16.mxu0 %v1428
        %1675 = vmatpush1.bf16.msra.mxu0 %v1427
        %1676 = vmatprep.subr.bf16.mxu0 %v1432
        %1677 = vmatpush1.bf16.msra.mxu0 %v1431
        %1678 = vmatprep.subr.bf16.mxu0 %v1436
        %1679 = vmatpush1.bf16.msra.mxu0 %v1435
        %1680 = vmatprep.subr.bf16.mxu0 %v1440
        %1681 = vmatpush1.bf16.msra.mxu0 %v1439
        %1682 = vmatprep.subr.bf16.mxu0 0
        %1683 = vmatpush1.bf16.msra.mxu0 0
        %1684 = vmatprep.subr.bf16.mxu0 0
        %1685 = vmatpush1.bf16.msra.mxu0 0
        %1686 = vmatprep.subr.bf16.mxu0 0
        %1687 = vmatpush1.bf16.msra.mxu0 0
        %1688 = vmatprep.subr.bf16.mxu0 0
        %1689 = vmatpush1.bf16.msra.mxu0 0
        %1690 = vmatprep.subr.bf16.mxu0 0
        %1691 = vmatpush1.bf16.msra.mxu0 0
        %1692 = vmatprep.subr.bf16.mxu0 0
        %1693 = vmatpush1.bf16.msra.mxu0 0
        %1694 = vmatprep.subr.bf16.mxu0 0
        %1695 = vmatpush1.bf16.msra.mxu0 0
        %1696 = vmatprep.subr.bf16.mxu0 0
        %1697 = vmatpush1.bf16.msra.mxu0 0
        %1698 = vmatprep.mubr.bf16.mxu0 0
        %1699 = vmatmul.mubr.bf16.gmra.mrb[0].mxu0 %v1297
        %v1700 = vpop.f32.mrb[0].mxu0
        %v1701 = vadd.f32 0.0, %v1700
        %v1702 = vpop.f32.mrb[0].mxu0
        %v1703 = vadd.f32 0.0, %v1702
        %v1704 = vpop.f32.mrb[0].mxu0
        %v1705 = vadd.f32 0.0, %v1704
        %v1706 = vpop.f32.mrb[0].mxu0
        %v1707 = vadd.f32 0.0, %v1706
        %1708 = vmatprep.mubr.bf16.mxu0 0
        %1709 = vmatmul.mubr.bf16.gmra.mrb[0].mxu0 %v1298
        %v1710 = vpop.f32.mrb[0].mxu0
        %v1711 = vadd.f32 0.0, %v1710
        %v1712 = vpop.f32.mrb[0].mxu0
        %v1713 = vadd.f32 0.0, %v1712
        %v1714 = vpop.f32.mrb[0].mxu0
        %v1715 = vadd.f32 0.0, %v1714
        %v1716 = vpop.f32.mrb[0].mxu0
        %v1717 = vadd.f32 0.0, %v1716
        %1718 = vmatprep.mubr.bf16.mxu0 0
        %1719 = vmatmul.mubr.bf16.gmra.mrb[0].mxu0 %v1299
        %v1720 = vpop.f32.mrb[0].mxu0
        %v1721 = vadd.f32 0.0, %v1720
        %v1722 = vpop.f32.mrb[0].mxu0
        %v1723 = vadd.f32 0.0, %v1722
        %v1724 = vpop.f32.mrb[0].mxu0
        %v1725 = vadd.f32 0.0, %v1724
        %v1726 = vpop.f32.mrb[0].mxu0
        %v1727 = vadd.f32 0.0, %v1726
        %1728 = vmatprep.mubr.bf16.mxu0 0
        %1729 = vmatmul.mubr.bf16.gmra.mrb[0].mxu0 %v1300
        %v1730 = vpop.f32.mrb[0].mxu0
        %v1731 = vadd.f32 0.0, %v1730
        %v1732 = vpop.f32.mrb[0].mxu0
        %v1733 = vadd.f32 0.0, %v1732
        %v1734 = vpop.f32.mrb[0].mxu0
        %v1735 = vadd.f32 0.0, %v1734
        %v1736 = vpop.f32.mrb[0].mxu0
        %v1737 = vadd.f32 0.0, %v1736
        %1738 = vmatprep.mubr.bf16.mxu0 0
        %1739 = vmatmul.mubr.bf16.gmra.mrb[0].mxu0 %v1301
        %v1740 = vpop.f32.mrb[0].mxu0
        %v1741 = vadd.f32 0.0, %v1740
        %v1742 = vpop.f32.mrb[0].mxu0
        %v1743 = vadd.f32 0.0, %v1742
        %v1744 = vpop.f32.mrb[0].mxu0
        %v1745 = vadd.f32 0.0, %v1744
        %v1746 = vpop.f32.mrb[0].mxu0
        %v1747 = vadd.f32 0.0, %v1746
        %1748 = vmatprep.mubr.bf16.mxu0 0
        %1749 = vmatmul.mubr.bf16.gmra.mrb[0].mxu0 %v1302
        %v1750 = vpop.f32.mrb[0].mxu0
        %v1751 = vadd.f32 0.0, %v1750
        %v1752 = vpop.f32.mrb[0].mxu0
        %v1753 = vadd.f32 0.0, %v1752
        %v1754 = vpop.f32.mrb[0].mxu0
        %v1755 = vadd.f32 0.0, %v1754
        %v1756 = vpop.f32.mrb[0].mxu0
        %v1757 = vadd.f32 0.0, %v1756
        %1758 = vmatprep.mubr.bf16.mxu0 0
        %1759 = vmatmul.mubr.bf16.gmra.mrb[0].mxu0 %v1303
        %v1760 = vpop.f32.mrb[0].mxu0
        %v1761 = vadd.f32 0.0, %v1760
        %v1762 = vpop.f32.mrb[0].mxu0
        %v1763 = vadd.f32 0.0, %v1762
        %v1764 = vpop.f32.mrb[0].mxu0
        %v1765 = vadd.f32 0.0, %v1764
        %v1766 = vpop.f32.mrb[0].mxu0
        %v1767 = vadd.f32 0.0, %v1766
        %1768 = vmatprep.mubr.bf16.mxu0 0
        %1769 = vmatmul.mubr.bf16.gmra.mrb[0].mxu0 %v1304
        %v1770 = vpop.f32.mrb[0].mxu0
        %v1771 = vadd.f32 0.0, %v1770
        %v1772 = vpop.f32.mrb[0].mxu0
        %v1773 = vadd.f32 0.0, %v1772
        %v1774 = vpop.f32.mrb[0].mxu0
        %v1775 = vadd.f32 0.0, %v1774
        %v1776 = vpop.f32.mrb[0].mxu0
        %v1777 = vadd.f32 0.0, %v1776
        %1778 = vmatprep.mubr.bf16.mxu0 0
        %1779 = vmatmul.mubr.bf16.gmra.mrb[0].mxu0 %v1305
        %v1780 = vpop.f32.mrb[0].mxu0
        %v1781 = vadd.f32 0.0, %v1780
        %v1782 = vpop.f32.mrb[0].mxu0
        %v1783 = vadd.f32 0.0, %v1782
        %v1784 = vpop.f32.mrb[0].mxu0
        %v1785 = vadd.f32 0.0, %v1784
        %v1786 = vpop.f32.mrb[0].mxu0
        %v1787 = vadd.f32 0.0, %v1786
        %1788 = vmatprep.mubr.bf16.mxu0 0
        %1789 = vmatmul.mubr.bf16.gmra.mrb[0].mxu0 %v1306
        %v1790 = vpop.f32.mrb[0].mxu0
        %v1791 = vadd.f32 0.0, %v1790
        %v1792 = vpop.f32.mrb[0].mxu0
        %v1793 = vadd.f32 0.0, %v1792
        %v1794 = vpop.f32.mrb[0].mxu0
        %v1795 = vadd.f32 0.0, %v1794
        %v1796 = vpop.f32.mrb[0].mxu0
        %v1797 = vadd.f32 0.0, %v1796
        %1798 = vmatprep.mubr.bf16.mxu0 0
        %1799 = vmatmul.mubr.bf16.gmra.mrb[0].mxu0 %v1307
        %v1800 = vpop.f32.mrb[0].mxu0
        %v1801 = vadd.f32 0.0, %v1800
        %v1802 = vpop.f32.mrb[0].mxu0
        %v1803 = vadd.f32 0.0, %v1802
        %v1804 = vpop.f32.mrb[0].mxu0
        %v1805 = vadd.f32 0.0, %v1804
        %v1806 = vpop.f32.mrb[0].mxu0
        %v1807 = vadd.f32 0.0, %v1806
        %1808 = vmatprep.mubr.bf16.mxu0 0
        %1809 = vmatmul.mubr.bf16.gmra.mrb[0].mxu0 %v1308
        %v1810 = vpop.f32.mrb[0].mxu0
        %v1811 = vadd.f32 0.0, %v1810
        %v1812 = vpop.f32.mrb[0].mxu0
        %v1813 = vadd.f32 0.0, %v1812
        %v1814 = vpop.f32.mrb[0].mxu0
        %v1815 = vadd.f32 0.0, %v1814
        %v1816 = vpop.f32.mrb[0].mxu0
        %v1817 = vadd.f32 0.0, %v1816
        %1818 = vmatprep.mubr.bf16.mxu0 0
        %1819 = vmatmul.mubr.bf16.gmra.mrb[0].mxu0 %v1309
        %v1820 = vpop.f32.mrb[0].mxu0
        %v1821 = vadd.f32 0.0, %v1820
        %v1822 = vpop.f32.mrb[0].mxu0
        %v1823 = vadd.f32 0.0, %v1822
        %v1824 = vpop.f32.mrb[0].mxu0
        %v1825 = vadd.f32 0.0, %v1824
        %v1826 = vpop.f32.mrb[0].mxu0
        %v1827 = vadd.f32 0.0, %v1826
        %1828 = vmatprep.mubr.bf16.mxu0 0
        %1829 = vmatmul.mubr.bf16.gmra.mrb[0].mxu0 %v1310
        %v1830 = vpop.f32.mrb[0].mxu0
        %v1831 = vadd.f32 0.0, %v1830
        %v1832 = vpop.f32.mrb[0].mxu0
        %v1833 = vadd.f32 0.0, %v1832
        %v1834 = vpop.f32.mrb[0].mxu0
        %v1835 = vadd.f32 0.0, %v1834
        %v1836 = vpop.f32.mrb[0].mxu0
        %v1837 = vadd.f32 0.0, %v1836
        %1838 = vmatprep.mubr.bf16.mxu0 0
        %1839 = vmatmul.mubr.bf16.gmra.mrb[0].mxu0 %v1311
        %v1840 = vpop.f32.mrb[0].mxu0
        %v1841 = vadd.f32 0.0, %v1840
        %v1842 = vpop.f32.mrb[0].mxu0
        %v1843 = vadd.f32 0.0, %v1842
        %v1844 = vpop.f32.mrb[0].mxu0
        %v1845 = vadd.f32 0.0, %v1844
        %v1846 = vpop.f32.mrb[0].mxu0
        %v1847 = vadd.f32 0.0, %v1846
        %1848 = vmatprep.mubr.bf16.mxu0 0
        %1849 = vmatmul.mubr.bf16.gmra.mrb[0].mxu0 %v1312
        %v1850 = vpop.f32.mrb[0].mxu0
        %v1851 = vadd.f32 0.0, %v1850
        %v1852 = vpop.f32.mrb[0].mxu0
        %v1853 = vadd.f32 0.0, %v1852
        %v1854 = vpop.f32.mrb[0].mxu0
        %v1855 = vadd.f32 0.0, %v1854
        %v1856 = vpop.f32.mrb[0].mxu0
        %v1857 = vadd.f32 0.0, %v1856
        %1858 = vdwg.mxu0
        %v1861 = vunpack.c.l.b16 %v318
        %v1862 = vunpack.c.h.b16 %v318
        %v1863 = vunpack.c.l.b16 %v319
        %v1864 = vunpack.c.h.b16 %v319
        %v1865 = vpack.c.b16 %v1861, %v1861
        %v1866 = vpack.c.b16 %v1862, %v1862
        %v1867 = vpack.c.b16 %v1863, %v1863
        %v1868 = vpack.c.b16 %v1864, %v1864
        %v1870 = vsel %vm638, %v1865, 0
        %v1873 = vsel %vm638, %v1866, 0
        %v1876 = vsel %vm638, %v1867, 0
        %v1879 = vsel %vm638, %v1868, 0
        %1881 = vmatprep.subr.bf16.mxu0 %v1873
        %1882 = vmatpush1.bf16.msra.mxu0 %v1870
        %1883 = vmatprep.subr.bf16.mxu0 0
        %1884 = vmatpush1.bf16.msra.mxu0 0
        %1885 = vmatprep.subr.bf16.mxu0 0
        %1886 = vmatpush1.bf16.msra.mxu0 0
        %1887 = vmatprep.subr.bf16.mxu0 0
        %1888 = vmatpush1.bf16.msra.mxu0 0
        %1889 = vmatprep.subr.bf16.mxu0 0
        %1890 = vmatpush1.bf16.msra.mxu0 0
        %1891 = vmatprep.subr.bf16.mxu0 0
        %1892 = vmatpush1.bf16.msra.mxu0 0
        %1893 = vmatprep.subr.bf16.mxu0 0
        %1894 = vmatpush1.bf16.msra.mxu0 0
        %1895 = vmatprep.subr.bf16.mxu0 0
        %1896 = vmatpush1.bf16.msra.mxu0 0
        %1897 = vmatprep.subr.bf16.mxu0 0
        %1898 = vmatpush1.bf16.msra.mxu0 0
        %1899 = vmatprep.subr.bf16.mxu0 0
        %1900 = vmatpush1.bf16.msra.mxu0 0
        %1901 = vmatprep.subr.bf16.mxu0 0
        %1902 = vmatpush1.bf16.msra.mxu0 0
        %1903 = vmatprep.subr.bf16.mxu0 0
        %1904 = vmatpush1.bf16.msra.mxu0 0
        %1905 = vmatprep.subr.bf16.mxu0 0
        %1906 = vmatpush1.bf16.msra.mxu0 0
        %1907 = vmatprep.subr.bf16.mxu0 0
        %1908 = vmatpush1.bf16.msra.mxu0 0
        %1909 = vmatprep.subr.bf16.mxu0 0
        %1910 = vmatpush1.bf16.msra.mxu0 0
        %1911 = vmatprep.subr.bf16.mxu0 0
        %1912 = vmatpush1.bf16.msra.mxu0 0
        %1913 = vmatprep.mubr.bf16.mxu0 0
        %1914 = vmatmul.mubr.bf16.gmra.mrb[0].mxu0 %v591
        %v1915 = vpop.f32.mrb[0].mxu0
        %v1916 = vadd.f32 %v1508, %v1915
        %v1917 = vpop.f32.mrb[0].mxu0
        %v1918 = vadd.f32 %v1510, %v1917
        %v1919 = vpop.f32.mrb[0].mxu0
        %v1920 = vadd.f32 %v1512, %v1919
        %v1921 = vpop.f32.mrb[0].mxu0
        %v1922 = vadd.f32 %v1514, %v1921
        %1923 = vmatprep.mubr.bf16.mxu0 0
        %1924 = vmatmul.mubr.bf16.gmra.mrb[0].mxu0 %v594
        %v1925 = vpop.f32.mrb[0].mxu0
        %v1926 = vadd.f32 %v1518, %v1925
        %v1927 = vpop.f32.mrb[0].mxu0
        %v1928 = vadd.f32 %v1520, %v1927
        %v1929 = vpop.f32.mrb[0].mxu0
        %v1930 = vadd.f32 %v1522, %v1929
        %v1931 = vpop.f32.mrb[0].mxu0
        %v1932 = vadd.f32 %v1524, %v1931
        %1933 = vmatprep.mubr.bf16.mxu0 0
        %1934 = vmatmul.mubr.bf16.gmra.mrb[0].mxu0 %v597
        %v1935 = vpop.f32.mrb[0].mxu0
        %v1936 = vadd.f32 %v1528, %v1935
        %v1937 = vpop.f32.mrb[0].mxu0
        %v1938 = vadd.f32 %v1530, %v1937
        %v1939 = vpop.f32.mrb[0].mxu0
        %v1940 = vadd.f32 %v1532, %v1939
        %v1941 = vpop.f32.mrb[0].mxu0
        %v1942 = vadd.f32 %v1534, %v1941
        %1943 = vmatprep.mubr.bf16.mxu0 0
        %1944 = vmatmul.mubr.bf16.gmra.mrb[0].mxu0 %v600
        %v1945 = vpop.f32.mrb[0].mxu0
        %v1946 = vadd.f32 %v1538, %v1945
        %v1947 = vpop.f32.mrb[0].mxu0
        %v1948 = vadd.f32 %v1540, %v1947
        %v1949 = vpop.f32.mrb[0].mxu0
        %v1950 = vadd.f32 %v1542, %v1949
        %v1951 = vpop.f32.mrb[0].mxu0
        %v1952 = vadd.f32 %v1544, %v1951
        %1953 = vmatprep.mubr.bf16.mxu0 0
        %1954 = vmatmul.mubr.bf16.gmra.mrb[0].mxu0 %v603
        %v1955 = vpop.f32.mrb[0].mxu0
        %v1956 = vadd.f32 %v1548, %v1955
        %v1957 = vpop.f32.mrb[0].mxu0
        %v1958 = vadd.f32 %v1550, %v1957
        %v1959 = vpop.f32.mrb[0].mxu0
        %v1960 = vadd.f32 %v1552, %v1959
        %v1961 = vpop.f32.mrb[0].mxu0
        %v1962 = vadd.f32 %v1554, %v1961
        %1963 = vmatprep.mubr.bf16.mxu0 0
        %1964 = vmatmul.mubr.bf16.gmra.mrb[0].mxu0 %v606
        %v1965 = vpop.f32.mrb[0].mxu0
        %v1966 = vadd.f32 %v1558, %v1965
        %v1967 = vpop.f32.mrb[0].mxu0
        %v1968 = vadd.f32 %v1560, %v1967
        %v1969 = vpop.f32.mrb[0].mxu0
        %v1970 = vadd.f32 %v1562, %v1969
        %v1971 = vpop.f32.mrb[0].mxu0
        %v1972 = vadd.f32 %v1564, %v1971
        %1973 = vmatprep.mubr.bf16.mxu0 0
        %1974 = vmatmul.mubr.bf16.gmra.mrb[0].mxu0 %v609
        %v1975 = vpop.f32.mrb[0].mxu0
        %v1976 = vadd.f32 %v1568, %v1975
        %v1977 = vpop.f32.mrb[0].mxu0
        %v1978 = vadd.f32 %v1570, %v1977
        %v1979 = vpop.f32.mrb[0].mxu0
        %v1980 = vadd.f32 %v1572, %v1979
        %v1981 = vpop.f32.mrb[0].mxu0
        %v1982 = vadd.f32 %v1574, %v1981
        %1983 = vmatprep.mubr.bf16.mxu0 0
        %1984 = vmatmul.mubr.bf16.gmra.mrb[0].mxu0 %v612
        %v1985 = vpop.f32.mrb[0].mxu0
        %v1986 = vadd.f32 %v1578, %v1985
        %v1987 = vpop.f32.mrb[0].mxu0
        %v1988 = vadd.f32 %v1580, %v1987
        %v1989 = vpop.f32.mrb[0].mxu0
        %v1990 = vadd.f32 %v1582, %v1989
        %v1991 = vpop.f32.mrb[0].mxu0
        %v1992 = vadd.f32 %v1584, %v1991
        %1993 = vmatprep.mubr.bf16.mxu0 0
        %1994 = vmatmul.mubr.bf16.gmra.mrb[0].mxu0 %v615
        %v1995 = vpop.f32.mrb[0].mxu0
        %v1996 = vadd.f32 %v1588, %v1995
        %v1997 = vpop.f32.mrb[0].mxu0
        %v1998 = vadd.f32 %v1590, %v1997
        %v1999 = vpop.f32.mrb[0].mxu0
        %v2000 = vadd.f32 %v1592, %v1999
        %v2001 = vpop.f32.mrb[0].mxu0
        %v2002 = vadd.f32 %v1594, %v2001
        %2003 = vmatprep.mubr.bf16.mxu0 0
        %2004 = vmatmul.mubr.bf16.gmra.mrb[0].mxu0 %v618
        %v2005 = vpop.f32.mrb[0].mxu0
        %v2006 = vadd.f32 %v1598, %v2005
        %v2007 = vpop.f32.mrb[0].mxu0
        %v2008 = vadd.f32 %v1600, %v2007
        %v2009 = vpop.f32.mrb[0].mxu0
        %v2010 = vadd.f32 %v1602, %v2009
        %v2011 = vpop.f32.mrb[0].mxu0
        %v2012 = vadd.f32 %v1604, %v2011
        %2013 = vmatprep.mubr.bf16.mxu0 0
        %2014 = vmatmul.mubr.bf16.gmra.mrb[0].mxu0 %v621
        %v2015 = vpop.f32.mrb[0].mxu0
        %v2016 = vadd.f32 %v1608, %v2015
        %v2017 = vpop.f32.mrb[0].mxu0
        %v2018 = vadd.f32 %v1610, %v2017
        %v2019 = vpop.f32.mrb[0].mxu0
        %v2020 = vadd.f32 %v1612, %v2019
        %v2021 = vpop.f32.mrb[0].mxu0
        %v2022 = vadd.f32 %v1614, %v2021
        %2023 = vmatprep.mubr.bf16.mxu0 0
        %2024 = vmatmul.mubr.bf16.gmra.mrb[0].mxu0 %v624
        %v2025 = vpop.f32.mrb[0].mxu0
        %v2026 = vadd.f32 %v1618, %v2025
        %v2027 = vpop.f32.mrb[0].mxu0
        %v2028 = vadd.f32 %v1620, %v2027
        %v2029 = vpop.f32.mrb[0].mxu0
        %v2030 = vadd.f32 %v1622, %v2029
        %v2031 = vpop.f32.mrb[0].mxu0
        %v2032 = vadd.f32 %v1624, %v2031
        %2033 = vmatprep.mubr.bf16.mxu0 0
        %2034 = vmatmul.mubr.bf16.gmra.mrb[0].mxu0 %v627
        %v2035 = vpop.f32.mrb[0].mxu0
        %v2036 = vadd.f32 %v1628, %v2035
        %v2037 = vpop.f32.mrb[0].mxu0
        %v2038 = vadd.f32 %v1630, %v2037
        %v2039 = vpop.f32.mrb[0].mxu0
        %v2040 = vadd.f32 %v1632, %v2039
        %v2041 = vpop.f32.mrb[0].mxu0
        %v2042 = vadd.f32 %v1634, %v2041
        %2043 = vmatprep.mubr.bf16.mxu0 0
        %2044 = vmatmul.mubr.bf16.gmra.mrb[0].mxu0 %v630
        %v2045 = vpop.f32.mrb[0].mxu0
        %v2046 = vadd.f32 %v1638, %v2045
        %v2047 = vpop.f32.mrb[0].mxu0
        %v2048 = vadd.f32 %v1640, %v2047
        %v2049 = vpop.f32.mrb[0].mxu0
        %v2050 = vadd.f32 %v1642, %v2049
        %v2051 = vpop.f32.mrb[0].mxu0
        %v2052 = vadd.f32 %v1644, %v2051
        %2053 = vmatprep.mubr.bf16.mxu0 0
        %2054 = vmatmul.mubr.bf16.gmra.mrb[0].mxu0 %v633
        %v2055 = vpop.f32.mrb[0].mxu0
        %v2056 = vadd.f32 %v1648, %v2055
        %v2057 = vpop.f32.mrb[0].mxu0
        %v2058 = vadd.f32 %v1650, %v2057
        %v2059 = vpop.f32.mrb[0].mxu0
        %v2060 = vadd.f32 %v1652, %v2059
        %v2061 = vpop.f32.mrb[0].mxu0
        %v2062 = vadd.f32 %v1654, %v2061
        %2063 = vmatprep.mubr.bf16.mxu0 0
        %2064 = vmatmul.mubr.bf16.gmra.mrb[0].mxu0 %v636
        %v2065 = vpop.f32.mrb[0].mxu0
        %v2066 = vadd.f32 %v1658, %v2065
        %v2067 = vpop.f32.mrb[0].mxu0
        %v2068 = vadd.f32 %v1660, %v2067
        %v2069 = vpop.f32.mrb[0].mxu0
        %v2070 = vadd.f32 %v1662, %v2069
        %v2071 = vpop.f32.mrb[0].mxu0
        %v2072 = vadd.f32 %v1664, %v2071
        %2073 = vdwg.mxu0
        %2074 = vmatprep.subr.bf16.mxu0 %v1879
        %2075 = vmatpush1.bf16.msra.mxu0 %v1876
        %2076 = vmatprep.subr.bf16.mxu0 0
        %2077 = vmatpush1.bf16.msra.mxu0 0
        %2078 = vmatprep.subr.bf16.mxu0 0
        %2079 = vmatpush1.bf16.msra.mxu0 0
        %2080 = vmatprep.subr.bf16.mxu0 0
        %2081 = vmatpush1.bf16.msra.mxu0 0
        %2082 = vmatprep.subr.bf16.mxu0 0
        %2083 = vmatpush1.bf16.msra.mxu0 0
        %2084 = vmatprep.subr.bf16.mxu0 0
        %2085 = vmatpush1.bf16.msra.mxu0 0
        %2086 = vmatprep.subr.bf16.mxu0 0
        %2087 = vmatpush1.bf16.msra.mxu0 0
        %2088 = vmatprep.subr.bf16.mxu0 0
        %2089 = vmatpush1.bf16.msra.mxu0 0
        %2090 = vmatprep.subr.bf16.mxu0 0
        %2091 = vmatpush1.bf16.msra.mxu0 0
        %2092 = vmatprep.subr.bf16.mxu0 0
        %2093 = vmatpush1.bf16.msra.mxu0 0
        %2094 = vmatprep.subr.bf16.mxu0 0
        %2095 = vmatpush1.bf16.msra.mxu0 0
        %2096 = vmatprep.subr.bf16.mxu0 0
        %2097 = vmatpush1.bf16.msra.mxu0 0
        %2098 = vmatprep.subr.bf16.mxu0 0
        %2099 = vmatpush1.bf16.msra.mxu0 0
        %2100 = vmatprep.subr.bf16.mxu0 0
        %2101 = vmatpush1.bf16.msra.mxu0 0
        %2102 = vmatprep.subr.bf16.mxu0 0
        %2103 = vmatpush1.bf16.msra.mxu0 0
        %2104 = vmatprep.subr.bf16.mxu0 0
        %2105 = vmatpush1.bf16.msra.mxu0 0
        %2106 = vmatprep.mubr.bf16.mxu0 0
        %2107 = vmatmul.mubr.bf16.gmra.mrb[0].mxu0 %v591
        %v2108 = vpop.f32.mrb[0].mxu0
        %v2109 = vadd.f32 %v1701, %v2108
        %v2110 = vpop.f32.mrb[0].mxu0
        %v2111 = vadd.f32 %v1703, %v2110
        %v2112 = vpop.f32.mrb[0].mxu0
        %v2113 = vadd.f32 %v1705, %v2112
        %v2114 = vpop.f32.mrb[0].mxu0
        %v2115 = vadd.f32 %v1707, %v2114
        %2116 = vmatprep.mubr.bf16.mxu0 0
        %2117 = vmatmul.mubr.bf16.gmra.mrb[0].mxu0 %v594
        %v2118 = vpop.f32.mrb[0].mxu0
        %v2119 = vadd.f32 %v1711, %v2118
        %v2120 = vpop.f32.mrb[0].mxu0
        %v2121 = vadd.f32 %v1713, %v2120
        %v2122 = vpop.f32.mrb[0].mxu0
        %v2123 = vadd.f32 %v1715, %v2122
        %v2124 = vpop.f32.mrb[0].mxu0
        %v2125 = vadd.f32 %v1717, %v2124
        %2126 = vmatprep.mubr.bf16.mxu0 0
        %2127 = vmatmul.mubr.bf16.gmra.mrb[0].mxu0 %v597
        %v2128 = vpop.f32.mrb[0].mxu0
        %v2129 = vadd.f32 %v1721, %v2128
        %v2130 = vpop.f32.mrb[0].mxu0
        %v2131 = vadd.f32 %v1723, %v2130
        %v2132 = vpop.f32.mrb[0].mxu0
        %v2133 = vadd.f32 %v1725, %v2132
        %v2134 = vpop.f32.mrb[0].mxu0
        %v2135 = vadd.f32 %v1727, %v2134
        %2136 = vmatprep.mubr.bf16.mxu0 0
        %2137 = vmatmul.mubr.bf16.gmra.mrb[0].mxu0 %v600
        %v2138 = vpop.f32.mrb[0].mxu0
        %v2139 = vadd.f32 %v1731, %v2138
        %v2140 = vpop.f32.mrb[0].mxu0
        %v2141 = vadd.f32 %v1733, %v2140
        %v2142 = vpop.f32.mrb[0].mxu0
        %v2143 = vadd.f32 %v1735, %v2142
        %v2144 = vpop.f32.mrb[0].mxu0
        %v2145 = vadd.f32 %v1737, %v2144
        %2146 = vmatprep.mubr.bf16.mxu0 0
        %2147 = vmatmul.mubr.bf16.gmra.mrb[0].mxu0 %v603
        %v2148 = vpop.f32.mrb[0].mxu0
        %v2149 = vadd.f32 %v1741, %v2148
        %v2150 = vpop.f32.mrb[0].mxu0
        %v2151 = vadd.f32 %v1743, %v2150
        %v2152 = vpop.f32.mrb[0].mxu0
        %v2153 = vadd.f32 %v1745, %v2152
        %v2154 = vpop.f32.mrb[0].mxu0
        %v2155 = vadd.f32 %v1747, %v2154
        %2156 = vmatprep.mubr.bf16.mxu0 0
        %2157 = vmatmul.mubr.bf16.gmra.mrb[0].mxu0 %v606
        %v2158 = vpop.f32.mrb[0].mxu0
        %v2159 = vadd.f32 %v1751, %v2158
        %v2160 = vpop.f32.mrb[0].mxu0
        %v2161 = vadd.f32 %v1753, %v2160
        %v2162 = vpop.f32.mrb[0].mxu0
        %v2163 = vadd.f32 %v1755, %v2162
        %v2164 = vpop.f32.mrb[0].mxu0
        %v2165 = vadd.f32 %v1757, %v2164
        %2166 = vmatprep.mubr.bf16.mxu0 0
        %2167 = vmatmul.mubr.bf16.gmra.mrb[0].mxu0 %v609
        %v2168 = vpop.f32.mrb[0].mxu0
        %v2169 = vadd.f32 %v1761, %v2168
        %v2170 = vpop.f32.mrb[0].mxu0
        %v2171 = vadd.f32 %v1763, %v2170
        %v2172 = vpop.f32.mrb[0].mxu0
        %v2173 = vadd.f32 %v1765, %v2172
        %v2174 = vpop.f32.mrb[0].mxu0
        %v2175 = vadd.f32 %v1767, %v2174
        %2176 = vmatprep.mubr.bf16.mxu0 0
        %2177 = vmatmul.mubr.bf16.gmra.mrb[0].mxu0 %v612
        %v2178 = vpop.f32.mrb[0].mxu0
        %v2179 = vadd.f32 %v1771, %v2178
        %v2180 = vpop.f32.mrb[0].mxu0
        %v2181 = vadd.f32 %v1773, %v2180
        %v2182 = vpop.f32.mrb[0].mxu0
        %v2183 = vadd.f32 %v1775, %v2182
        %v2184 = vpop.f32.mrb[0].mxu0
        %v2185 = vadd.f32 %v1777, %v2184
        %2186 = vmatprep.mubr.bf16.mxu0 0
        %2187 = vmatmul.mubr.bf16.gmra.mrb[0].mxu0 %v615
        %v2188 = vpop.f32.mrb[0].mxu0
        %v2189 = vadd.f32 %v1781, %v2188
        %v2190 = vpop.f32.mrb[0].mxu0
        %v2191 = vadd.f32 %v1783, %v2190
        %v2192 = vpop.f32.mrb[0].mxu0
        %v2193 = vadd.f32 %v1785, %v2192
        %v2194 = vpop.f32.mrb[0].mxu0
        %v2195 = vadd.f32 %v1787, %v2194
        %2196 = vmatprep.mubr.bf16.mxu0 0
        %2197 = vmatmul.mubr.bf16.gmra.mrb[0].mxu0 %v618
        %v2198 = vpop.f32.mrb[0].mxu0
        %v2199 = vadd.f32 %v1791, %v2198
        %v2200 = vpop.f32.mrb[0].mxu0
        %v2201 = vadd.f32 %v1793, %v2200
        %v2202 = vpop.f32.mrb[0].mxu0
        %v2203 = vadd.f32 %v1795, %v2202
        %v2204 = vpop.f32.mrb[0].mxu0
        %v2205 = vadd.f32 %v1797, %v2204
        %2206 = vmatprep.mubr.bf16.mxu0 0
        %2207 = vmatmul.mubr.bf16.gmra.mrb[0].mxu0 %v621
        %v2208 = vpop.f32.mrb[0].mxu0
        %v2209 = vadd.f32 %v1801, %v2208
        %v2210 = vpop.f32.mrb[0].mxu0
        %v2211 = vadd.f32 %v1803, %v2210
        %v2212 = vpop.f32.mrb[0].mxu0
        %v2213 = vadd.f32 %v1805, %v2212
        %v2214 = vpop.f32.mrb[0].mxu0
        %v2215 = vadd.f32 %v1807, %v2214
        %2216 = vmatprep.mubr.bf16.mxu0 0
        %2217 = vmatmul.mubr.bf16.gmra.mrb[0].mxu0 %v624
        %v2218 = vpop.f32.mrb[0].mxu0
        %v2219 = vadd.f32 %v1811, %v2218
        %v2220 = vpop.f32.mrb[0].mxu0
        %v2221 = vadd.f32 %v1813, %v2220
        %v2222 = vpop.f32.mrb[0].mxu0
        %v2223 = vadd.f32 %v1815, %v2222
        %v2224 = vpop.f32.mrb[0].mxu0
        %v2225 = vadd.f32 %v1817, %v2224
        %2226 = vmatprep.mubr.bf16.mxu0 0
        %2227 = vmatmul.mubr.bf16.gmra.mrb[0].mxu0 %v627
        %v2228 = vpop.f32.mrb[0].mxu0
        %v2229 = vadd.f32 %v1821, %v2228
        %v2230 = vpop.f32.mrb[0].mxu0
        %v2231 = vadd.f32 %v1823, %v2230
        %v2232 = vpop.f32.mrb[0].mxu0
        %v2233 = vadd.f32 %v1825, %v2232
        %v2234 = vpop.f32.mrb[0].mxu0
        %v2235 = vadd.f32 %v1827, %v2234
        %2236 = vmatprep.mubr.bf16.mxu0 0
        %2237 = vmatmul.mubr.bf16.gmra.mrb[0].mxu0 %v630
        %v2238 = vpop.f32.mrb[0].mxu0
        %v2239 = vadd.f32 %v1831, %v2238
        %v2240 = vpop.f32.mrb[0].mxu0
        %v2241 = vadd.f32 %v1833, %v2240
        %v2242 = vpop.f32.mrb[0].mxu0
        %v2243 = vadd.f32 %v1835, %v2242
        %v2244 = vpop.f32.mrb[0].mxu0
        %v2245 = vadd.f32 %v1837, %v2244
        %2246 = vmatprep.mubr.bf16.mxu0 0
        %2247 = vmatmul.mubr.bf16.gmra.mrb[0].mxu0 %v633
        %v2248 = vpop.f32.mrb[0].mxu0
        %v2249 = vadd.f32 %v1841, %v2248
        %v2250 = vpop.f32.mrb[0].mxu0
        %v2251 = vadd.f32 %v1843, %v2250
        %v2252 = vpop.f32.mrb[0].mxu0
        %v2253 = vadd.f32 %v1845, %v2252
        %v2254 = vpop.f32.mrb[0].mxu0
        %v2255 = vadd.f32 %v1847, %v2254
        %2256 = vmatprep.mubr.bf16.mxu0 0
        %2257 = vmatmul.mubr.bf16.gmra.mrb[0].mxu0 %v636
        %v2258 = vpop.f32.mrb[0].mxu0
        %v2259 = vadd.f32 %v1851, %v2258
        %v2260 = vpop.f32.mrb[0].mxu0
        %v2261 = vadd.f32 %v1853, %v2260
        %v2262 = vpop.f32.mrb[0].mxu0
        %v2263 = vadd.f32 %v1855, %v2262
        %v2264 = vpop.f32.mrb[0].mxu0
        %v2265 = vadd.f32 %v1857, %v2264
        %2266 = vdwg.mxu0
        %v2268 = vlaneseq
        %v2269 = vshrl.u32 %v2268, 7
        %v2270 = vsub.s32 0, %v2269
        %v2271 = vrot.slane %v579, %v2270
        %v2272 = vlaneseq
        %v2273 = vshrl.u32 %v2272, 7
        %v2274 = vsub.s32 1, %v2273
        %v2275 = vrot.slane %v579, %v2274
        %v2276 = vlaneseq
        %v2277 = vshrl.u32 %v2276, 7
        %v2278 = vsub.s32 2, %v2277
        %v2279 = vrot.slane %v579, %v2278
        %v2280 = vlaneseq
        %v2281 = vshrl.u32 %v2280, 7
        %v2282 = vsub.s32 3, %v2281
        %v2283 = vrot.slane %v579, %v2282
        %v2288 = vadd.f32 %v1916, %v2271
        %v2289 = vadd.f32 %v1918, %v2275
        %v2290 = vadd.f32 %v2109, %v2279
        %v2291 = vadd.f32 %v2111, %v2283
        %v2292 = vadd.f32 %v1920, %v2271
        %v2293 = vadd.f32 %v1922, %v2275
        %v2294 = vadd.f32 %v2113, %v2279
        %v2295 = vadd.f32 %v2115, %v2283
        %v2296 = vadd.f32 %v1926, %v2271
        %v2297 = vadd.f32 %v1928, %v2275
        %v2298 = vadd.f32 %v2119, %v2279
        %v2299 = vadd.f32 %v2121, %v2283
        %v2300 = vadd.f32 %v1930, %v2271
        %v2301 = vadd.f32 %v1932, %v2275
        %v2302 = vadd.f32 %v2123, %v2279
        %v2303 = vadd.f32 %v2125, %v2283
        %v2304 = vadd.f32 %v1936, %v2271
        %v2305 = vadd.f32 %v1938, %v2275
        %v2306 = vadd.f32 %v2129, %v2279
        %v2307 = vadd.f32 %v2131, %v2283
        %v2308 = vadd.f32 %v1940, %v2271
        %v2309 = vadd.f32 %v1942, %v2275
        %v2310 = vadd.f32 %v2133, %v2279
        %v2311 = vadd.f32 %v2135, %v2283
        %v2312 = vadd.f32 %v1946, %v2271
        %v2313 = vadd.f32 %v1948, %v2275
        %v2314 = vadd.f32 %v2139, %v2279
        %v2315 = vadd.f32 %v2141, %v2283
        %v2316 = vadd.f32 %v1950, %v2271
        %v2317 = vadd.f32 %v1952, %v2275
        %v2318 = vadd.f32 %v2143, %v2279
        %v2319 = vadd.f32 %v2145, %v2283
        %v2320 = vadd.f32 %v1956, %v2271
        %v2321 = vadd.f32 %v1958, %v2275
        %v2322 = vadd.f32 %v2149, %v2279
        %v2323 = vadd.f32 %v2151, %v2283
        %v2324 = vadd.f32 %v1960, %v2271
        %v2325 = vadd.f32 %v1962, %v2275
        %v2326 = vadd.f32 %v2153, %v2279
        %v2327 = vadd.f32 %v2155, %v2283
        %v2328 = vadd.f32 %v1966, %v2271
        %v2329 = vadd.f32 %v1968, %v2275
        %v2330 = vadd.f32 %v2159, %v2279
        %v2331 = vadd.f32 %v2161, %v2283
        %v2332 = vadd.f32 %v1970, %v2271
        %v2333 = vadd.f32 %v1972, %v2275
        %v2334 = vadd.f32 %v2163, %v2279
        %v2335 = vadd.f32 %v2165, %v2283
        %v2336 = vadd.f32 %v1976, %v2271
        %v2337 = vadd.f32 %v1978, %v2275
        %v2338 = vadd.f32 %v2169, %v2279
        %v2339 = vadd.f32 %v2171, %v2283
        %v2340 = vadd.f32 %v1980, %v2271
        %v2341 = vadd.f32 %v1982, %v2275
        %v2342 = vadd.f32 %v2173, %v2279
        %v2343 = vadd.f32 %v2175, %v2283
        %v2344 = vadd.f32 %v1986, %v2271
        %v2345 = vadd.f32 %v1988, %v2275
        %v2346 = vadd.f32 %v2179, %v2279
        %v2347 = vadd.f32 %v2181, %v2283
        %v2348 = vadd.f32 %v1990, %v2271
        %v2349 = vadd.f32 %v1992, %v2275
        %v2350 = vadd.f32 %v2183, %v2279
        %v2351 = vadd.f32 %v2185, %v2283
        %v2352 = vadd.f32 %v1996, %v2271
        %v2353 = vadd.f32 %v1998, %v2275
        %v2354 = vadd.f32 %v2189, %v2279
        %v2355 = vadd.f32 %v2191, %v2283
        %v2356 = vadd.f32 %v2000, %v2271
        %v2357 = vadd.f32 %v2002, %v2275
        %v2358 = vadd.f32 %v2193, %v2279
        %v2359 = vadd.f32 %v2195, %v2283
        %v2360 = vadd.f32 %v2006, %v2271
        %v2361 = vadd.f32 %v2008, %v2275
        %v2362 = vadd.f32 %v2199, %v2279
        %v2363 = vadd.f32 %v2201, %v2283
        %v2364 = vadd.f32 %v2010, %v2271
        %v2365 = vadd.f32 %v2012, %v2275
        %v2366 = vadd.f32 %v2203, %v2279
        %v2367 = vadd.f32 %v2205, %v2283
        %v2368 = vadd.f32 %v2016, %v2271
        %v2369 = vadd.f32 %v2018, %v2275
        %v2370 = vadd.f32 %v2209, %v2279
        %v2371 = vadd.f32 %v2211, %v2283
        %v2372 = vadd.f32 %v2020, %v2271
        %v2373 = vadd.f32 %v2022, %v2275
        %v2374 = vadd.f32 %v2213, %v2279
        %v2375 = vadd.f32 %v2215, %v2283
        %v2376 = vadd.f32 %v2026, %v2271
        %v2377 = vadd.f32 %v2028, %v2275
        %v2378 = vadd.f32 %v2219, %v2279
        %v2379 = vadd.f32 %v2221, %v2283
        %v2380 = vadd.f32 %v2030, %v2271
        %v2381 = vadd.f32 %v2032, %v2275
        %v2382 = vadd.f32 %v2223, %v2279
        %v2383 = vadd.f32 %v2225, %v2283
        %v2384 = vadd.f32 %v2036, %v2271
        %v2385 = vadd.f32 %v2038, %v2275
        %v2386 = vadd.f32 %v2229, %v2279
        %v2387 = vadd.f32 %v2231, %v2283
        %v2388 = vadd.f32 %v2040, %v2271
        %v2389 = vadd.f32 %v2042, %v2275
        %v2390 = vadd.f32 %v2233, %v2279
        %v2391 = vadd.f32 %v2235, %v2283
        %v2392 = vadd.f32 %v2046, %v2271
        %v2393 = vadd.f32 %v2048, %v2275
        %v2394 = vadd.f32 %v2239, %v2279
        %v2395 = vadd.f32 %v2241, %v2283
        %v2396 = vadd.f32 %v2050, %v2271
        %v2397 = vadd.f32 %v2052, %v2275
        %v2398 = vadd.f32 %v2243, %v2279
        %v2399 = vadd.f32 %v2245, %v2283
        %v2400 = vadd.f32 %v2056, %v2271
        %v2401 = vadd.f32 %v2058, %v2275
        %v2402 = vadd.f32 %v2249, %v2279
        %v2403 = vadd.f32 %v2251, %v2283
        %v2404 = vadd.f32 %v2060, %v2271
        %v2405 = vadd.f32 %v2062, %v2275
        %v2406 = vadd.f32 %v2253, %v2279
        %v2407 = vadd.f32 %v2255, %v2283
        %v2408 = vadd.f32 %v2066, %v2271
        %v2409 = vadd.f32 %v2068, %v2275
        %v2410 = vadd.f32 %v2259, %v2279
        %v2411 = vadd.f32 %v2261, %v2283
        %v2412 = vadd.f32 %v2070, %v2271
        %v2413 = vadd.f32 %v2072, %v2275
        %v2414 = vadd.f32 %v2263, %v2279
        %v2415 = vadd.f32 %v2265, %v2283
        %v2416 = vpack.c.bf16 %v2292, %v2288
        %v2417 = vpack.c.bf16 %v2293, %v2289
        %v2418 = vpack.c.bf16 %v2294, %v2290
        %v2419 = vpack.c.bf16 %v2295, %v2291
        %v2420 = vpack.c.bf16 %v2300, %v2296
        %v2421 = vpack.c.bf16 %v2301, %v2297
        %v2422 = vpack.c.bf16 %v2302, %v2298
        %v2423 = vpack.c.bf16 %v2303, %v2299
        %v2424 = vpack.c.bf16 %v2308, %v2304
        %v2425 = vpack.c.bf16 %v2309, %v2305
        %v2426 = vpack.c.bf16 %v2310, %v2306
        %v2427 = vpack.c.bf16 %v2311, %v2307
        %v2428 = vpack.c.bf16 %v2316, %v2312
        %v2429 = vpack.c.bf16 %v2317, %v2313
        %v2430 = vpack.c.bf16 %v2318, %v2314
        %v2431 = vpack.c.bf16 %v2319, %v2315
        %v2432 = vpack.c.bf16 %v2324, %v2320
        %v2433 = vpack.c.bf16 %v2325, %v2321
        %v2434 = vpack.c.bf16 %v2326, %v2322
        %v2435 = vpack.c.bf16 %v2327, %v2323
        %v2436 = vpack.c.bf16 %v2332, %v2328
        %v2437 = vpack.c.bf16 %v2333, %v2329
        %v2438 = vpack.c.bf16 %v2334, %v2330
        %v2439 = vpack.c.bf16 %v2335, %v2331
        %v2440 = vpack.c.bf16 %v2340, %v2336
        %v2441 = vpack.c.bf16 %v2341, %v2337
        %v2442 = vpack.c.bf16 %v2342, %v2338
        %v2443 = vpack.c.bf16 %v2343, %v2339
        %v2444 = vpack.c.bf16 %v2348, %v2344
        %v2445 = vpack.c.bf16 %v2349, %v2345
        %v2446 = vpack.c.bf16 %v2350, %v2346
        %v2447 = vpack.c.bf16 %v2351, %v2347
        %v2448 = vpack.c.bf16 %v2356, %v2352
        %v2449 = vpack.c.bf16 %v2357, %v2353
        %v2450 = vpack.c.bf16 %v2358, %v2354
        %v2451 = vpack.c.bf16 %v2359, %v2355
        %v2452 = vpack.c.bf16 %v2364, %v2360
        %v2453 = vpack.c.bf16 %v2365, %v2361
        %v2454 = vpack.c.bf16 %v2366, %v2362
        %v2455 = vpack.c.bf16 %v2367, %v2363
        %v2456 = vpack.c.bf16 %v2372, %v2368
        %v2457 = vpack.c.bf16 %v2373, %v2369
        %v2458 = vpack.c.bf16 %v2374, %v2370
        %v2459 = vpack.c.bf16 %v2375, %v2371
        %v2460 = vpack.c.bf16 %v2380, %v2376
        %v2461 = vpack.c.bf16 %v2381, %v2377
        %v2462 = vpack.c.bf16 %v2382, %v2378
        %v2463 = vpack.c.bf16 %v2383, %v2379
        %v2464 = vpack.c.bf16 %v2388, %v2384
        %v2465 = vpack.c.bf16 %v2389, %v2385
        %v2466 = vpack.c.bf16 %v2390, %v2386
        %v2467 = vpack.c.bf16 %v2391, %v2387
        %v2468 = vpack.c.bf16 %v2396, %v2392
        %v2469 = vpack.c.bf16 %v2397, %v2393
        %v2470 = vpack.c.bf16 %v2398, %v2394
        %v2471 = vpack.c.bf16 %v2399, %v2395
        %v2472 = vpack.c.bf16 %v2404, %v2400
        %v2473 = vpack.c.bf16 %v2405, %v2401
        %v2474 = vpack.c.bf16 %v2406, %v2402
        %v2475 = vpack.c.bf16 %v2407, %v2403
        %v2476 = vpack.c.bf16 %v2412, %v2408
        %v2477 = vpack.c.bf16 %v2413, %v2409
        %v2478 = vpack.c.bf16 %v2414, %v2410
        %v2479 = vpack.c.bf16 %v2415, %v2411
        %v2480 = vmax.bf16 %v2416, 0
        %v2481 = vmax.bf16 %v2417, 0
        %v2482 = vmax.bf16 %v2418, 0
        %v2483 = vmax.bf16 %v2419, 0
        %v2484 = vmax.bf16 %v2420, 0
        %v2485 = vmax.bf16 %v2421, 0
        %v2486 = vmax.bf16 %v2422, 0
        %v2487 = vmax.bf16 %v2423, 0
        %v2488 = vmax.bf16 %v2424, 0
        %v2489 = vmax.bf16 %v2425, 0
        %v2490 = vmax.bf16 %v2426, 0
        %v2491 = vmax.bf16 %v2427, 0
        %v2492 = vmax.bf16 %v2428, 0
        %v2493 = vmax.bf16 %v2429, 0
        %v2494 = vmax.bf16 %v2430, 0
        %v2495 = vmax.bf16 %v2431, 0
        %v2496 = vmax.bf16 %v2432, 0
        %v2497 = vmax.bf16 %v2433, 0
        %v2498 = vmax.bf16 %v2434, 0
        %v2499 = vmax.bf16 %v2435, 0
        %v2500 = vmax.bf16 %v2436, 0
        %v2501 = vmax.bf16 %v2437, 0
        %v2502 = vmax.bf16 %v2438, 0
        %v2503 = vmax.bf16 %v2439, 0
        %v2504 = vmax.bf16 %v2440, 0
        %v2505 = vmax.bf16 %v2441, 0
        %v2506 = vmax.bf16 %v2442, 0
        %v2507 = vmax.bf16 %v2443, 0
        %v2508 = vmax.bf16 %v2444, 0
        %v2509 = vmax.bf16 %v2445, 0
        %v2510 = vmax.bf16 %v2446, 0
        %v2511 = vmax.bf16 %v2447, 0
        %v2512 = vmax.bf16 %v2448, 0
        %v2513 = vmax.bf16 %v2449, 0
        %v2514 = vmax.bf16 %v2450, 0
        %v2515 = vmax.bf16 %v2451, 0
        %v2516 = vmax.bf16 %v2452, 0
        %v2517 = vmax.bf16 %v2453, 0
        %v2518 = vmax.bf16 %v2454, 0
        %v2519 = vmax.bf16 %v2455, 0
        %v2520 = vmax.bf16 %v2456, 0
        %v2521 = vmax.bf16 %v2457, 0
        %v2522 = vmax.bf16 %v2458, 0
        %v2523 = vmax.bf16 %v2459, 0
        %v2524 = vmax.bf16 %v2460, 0
        %v2525 = vmax.bf16 %v2461, 0
        %v2526 = vmax.bf16 %v2462, 0
        %v2527 = vmax.bf16 %v2463, 0
        %v2528 = vmax.bf16 %v2464, 0
        %v2529 = vmax.bf16 %v2465, 0
        %v2530 = vmax.bf16 %v2466, 0
        %v2531 = vmax.bf16 %v2467, 0
        %v2532 = vmax.bf16 %v2468, 0
        %v2533 = vmax.bf16 %v2469, 0
        %v2534 = vmax.bf16 %v2470, 0
        %v2535 = vmax.bf16 %v2471, 0
        %v2536 = vmax.bf16 %v2472, 0
        %v2537 = vmax.bf16 %v2473, 0
        %v2538 = vmax.bf16 %v2474, 0
        %v2539 = vmax.bf16 %v2475, 0
        %v2540 = vmax.bf16 %v2476, 0
        %v2541 = vmax.bf16 %v2477, 0
        %v2542 = vmax.bf16 %v2478, 0
        %v2543 = vmax.bf16 %v2479, 0
        %v2545 = vlaneseq
        %v2546 = vshrl.u32 %v2545, 7
        %v2547 = vsub.s32 0, %v2546
        %v2548 = vrot.slane %v580, %v2547
        %v2549 = vlaneseq
        %v2550 = vshrl.u32 %v2549, 7
        %v2551 = vsub.s32 1, %v2550
        %v2552 = vrot.slane %v580, %v2551
        %v2553 = vlaneseq
        %v2554 = vshrl.u32 %v2553, 7
        %v2555 = vsub.s32 2, %v2554
        %v2556 = vrot.slane %v580, %v2555
        %v2557 = vlaneseq
        %v2558 = vshrl.u32 %v2557, 7
        %v2559 = vsub.s32 3, %v2558
        %v2560 = vrot.slane %v580, %v2559
        %v2693 = vunpack.c.l.b16 %v384
        %v2694 = vunpack.c.h.b16 %v384
        %v2695 = vunpack.c.l.b16 %v385
        %v2696 = vunpack.c.h.b16 %v385
        %v2697 = vunpack.c.l.b16 %v386
        %v2698 = vunpack.c.h.b16 %v386
        %v2699 = vunpack.c.l.b16 %v387
        %v2700 = vunpack.c.h.b16 %v387
        %v2701 = vunpack.c.l.b16 %v388
        %v2702 = vunpack.c.h.b16 %v388
        %v2703 = vunpack.c.l.b16 %v389
        %v2704 = vunpack.c.h.b16 %v389
        %v2705 = vunpack.c.l.b16 %v390
        %v2706 = vunpack.c.h.b16 %v390
        %v2707 = vunpack.c.l.b16 %v391
        %v2708 = vunpack.c.h.b16 %v391
        %v2709 = vunpack.c.l.b16 %v392
        %v2710 = vunpack.c.h.b16 %v392
        %v2711 = vunpack.c.l.b16 %v393
        %v2712 = vunpack.c.h.b16 %v393
        %v2713 = vunpack.c.l.b16 %v394
        %v2714 = vunpack.c.h.b16 %v394
        %v2715 = vunpack.c.l.b16 %v395
        %v2716 = vunpack.c.h.b16 %v395
        %v2717 = vunpack.c.l.b16 %v396
        %v2718 = vunpack.c.h.b16 %v396
        %v2719 = vunpack.c.l.b16 %v397
        %v2720 = vunpack.c.h.b16 %v397
        %v2721 = vunpack.c.l.b16 %v398
        %v2722 = vunpack.c.h.b16 %v398
        %v2723 = vunpack.c.l.b16 %v399
        %v2724 = vunpack.c.h.b16 %v399
        %v2725 = vunpack.c.l.b16 %v400
        %v2726 = vunpack.c.h.b16 %v400
        %v2727 = vunpack.c.l.b16 %v401
        %v2728 = vunpack.c.h.b16 %v401
        %v2729 = vunpack.c.l.b16 %v402
        %v2730 = vunpack.c.h.b16 %v402
        %v2731 = vunpack.c.l.b16 %v403
        %v2732 = vunpack.c.h.b16 %v403
        %v2733 = vunpack.c.l.b16 %v404
        %v2734 = vunpack.c.h.b16 %v404
        %v2735 = vunpack.c.l.b16 %v405
        %v2736 = vunpack.c.h.b16 %v405
        %v2737 = vunpack.c.l.b16 %v406
        %v2738 = vunpack.c.h.b16 %v406
        %v2739 = vunpack.c.l.b16 %v407
        %v2740 = vunpack.c.h.b16 %v407
        %v2741 = vunpack.c.l.b16 %v408
        %v2742 = vunpack.c.h.b16 %v408
        %v2743 = vunpack.c.l.b16 %v409
        %v2744 = vunpack.c.h.b16 %v409
        %v2745 = vunpack.c.l.b16 %v410
        %v2746 = vunpack.c.h.b16 %v410
        %v2747 = vunpack.c.l.b16 %v411
        %v2748 = vunpack.c.h.b16 %v411
        %v2749 = vunpack.c.l.b16 %v412
        %v2750 = vunpack.c.h.b16 %v412
        %v2751 = vunpack.c.l.b16 %v413
        %v2752 = vunpack.c.h.b16 %v413
        %v2753 = vunpack.c.l.b16 %v414
        %v2754 = vunpack.c.h.b16 %v414
        %v2755 = vunpack.c.l.b16 %v415
        %v2756 = vunpack.c.h.b16 %v415
        %v2757 = vunpack.c.l.b16 %v416
        %v2758 = vunpack.c.h.b16 %v416
        %v2759 = vunpack.c.l.b16 %v417
        %v2760 = vunpack.c.h.b16 %v417
        %v2761 = vunpack.c.l.b16 %v418
        %v2762 = vunpack.c.h.b16 %v418
        %v2763 = vunpack.c.l.b16 %v419
        %v2764 = vunpack.c.h.b16 %v419
        %v2765 = vunpack.c.l.b16 %v420
        %v2766 = vunpack.c.h.b16 %v420
        %v2767 = vunpack.c.l.b16 %v421
        %v2768 = vunpack.c.h.b16 %v421
        %v2769 = vunpack.c.l.b16 %v422
        %v2770 = vunpack.c.h.b16 %v422
        %v2771 = vunpack.c.l.b16 %v423
        %v2772 = vunpack.c.h.b16 %v423
        %v2773 = vunpack.c.l.b16 %v424
        %v2774 = vunpack.c.h.b16 %v424
        %v2775 = vunpack.c.l.b16 %v425
        %v2776 = vunpack.c.h.b16 %v425
        %v2777 = vunpack.c.l.b16 %v426
        %v2778 = vunpack.c.h.b16 %v426
        %v2779 = vunpack.c.l.b16 %v427
        %v2780 = vunpack.c.h.b16 %v427
        %v2781 = vunpack.c.l.b16 %v428
        %v2782 = vunpack.c.h.b16 %v428
        %v2783 = vunpack.c.l.b16 %v429
        %v2784 = vunpack.c.h.b16 %v429
        %v2785 = vunpack.c.l.b16 %v430
        %v2786 = vunpack.c.h.b16 %v430
        %v2787 = vunpack.c.l.b16 %v431
        %v2788 = vunpack.c.h.b16 %v431
        %v2789 = vunpack.c.l.b16 %v432
        %v2790 = vunpack.c.h.b16 %v432
        %v2791 = vunpack.c.l.b16 %v433
        %v2792 = vunpack.c.h.b16 %v433
        %v2793 = vunpack.c.l.b16 %v434
        %v2794 = vunpack.c.h.b16 %v434
        %v2795 = vunpack.c.l.b16 %v435
        %v2796 = vunpack.c.h.b16 %v435
        %v2797 = vunpack.c.l.b16 %v436
        %v2798 = vunpack.c.h.b16 %v436
        %v2799 = vunpack.c.l.b16 %v437
        %v2800 = vunpack.c.h.b16 %v437
        %v2801 = vunpack.c.l.b16 %v438
        %v2802 = vunpack.c.h.b16 %v438
        %v2803 = vunpack.c.l.b16 %v439
        %v2804 = vunpack.c.h.b16 %v439
        %v2805 = vunpack.c.l.b16 %v440
        %v2806 = vunpack.c.h.b16 %v440
        %v2807 = vunpack.c.l.b16 %v441
        %v2808 = vunpack.c.h.b16 %v441
        %v2809 = vunpack.c.l.b16 %v442
        %v2810 = vunpack.c.h.b16 %v442
        %v2811 = vunpack.c.l.b16 %v443
        %v2812 = vunpack.c.h.b16 %v443
        %v2813 = vunpack.c.l.b16 %v444
        %v2814 = vunpack.c.h.b16 %v444
        %v2815 = vunpack.c.l.b16 %v445
        %v2816 = vunpack.c.h.b16 %v445
        %v2817 = vunpack.c.l.b16 %v446
        %v2818 = vunpack.c.h.b16 %v446
        %v2819 = vunpack.c.l.b16 %v447
        %v2820 = vunpack.c.h.b16 %v447
        %v2821 = vunpack.c.l.b16 %v448
        %v2822 = vunpack.c.h.b16 %v448
        %v2823 = vunpack.c.l.b16 %v449
        %v2824 = vunpack.c.h.b16 %v449
        %v2825 = vunpack.c.l.b16 %v450
        %v2826 = vunpack.c.h.b16 %v450
        %v2827 = vunpack.c.l.b16 %v451
        %v2828 = vunpack.c.h.b16 %v451
        %v2829 = vunpack.c.l.b16 %v452
        %v2830 = vunpack.c.h.b16 %v452
        %v2831 = vunpack.c.l.b16 %v453
        %v2832 = vunpack.c.h.b16 %v453
        %v2833 = vunpack.c.l.b16 %v454
        %v2834 = vunpack.c.h.b16 %v454
        %v2835 = vunpack.c.l.b16 %v455
        %v2836 = vunpack.c.h.b16 %v455
        %v2837 = vunpack.c.l.b16 %v456
        %v2838 = vunpack.c.h.b16 %v456
        %v2839 = vunpack.c.l.b16 %v457
        %v2840 = vunpack.c.h.b16 %v457
        %v2841 = vunpack.c.l.b16 %v458
        %v2842 = vunpack.c.h.b16 %v458
        %v2843 = vunpack.c.l.b16 %v459
        %v2844 = vunpack.c.h.b16 %v459
        %v2845 = vunpack.c.l.b16 %v460
        %v2846 = vunpack.c.h.b16 %v460
        %v2847 = vunpack.c.l.b16 %v461
        %v2848 = vunpack.c.h.b16 %v461
        %v2849 = vunpack.c.l.b16 %v462
        %v2850 = vunpack.c.h.b16 %v462
        %v2851 = vunpack.c.l.b16 %v463
        %v2852 = vunpack.c.h.b16 %v463
        %v2853 = vunpack.c.l.b16 %v464
        %v2854 = vunpack.c.h.b16 %v464
        %v2855 = vunpack.c.l.b16 %v465
        %v2856 = vunpack.c.h.b16 %v465
        %v2857 = vunpack.c.l.b16 %v466
        %v2858 = vunpack.c.h.b16 %v466
        %v2859 = vunpack.c.l.b16 %v467
        %v2860 = vunpack.c.h.b16 %v467
        %v2861 = vunpack.c.l.b16 %v468
        %v2862 = vunpack.c.h.b16 %v468
        %v2863 = vunpack.c.l.b16 %v469
        %v2864 = vunpack.c.h.b16 %v469
        %v2865 = vunpack.c.l.b16 %v470
        %v2866 = vunpack.c.h.b16 %v470
        %v2867 = vunpack.c.l.b16 %v471
        %v2868 = vunpack.c.h.b16 %v471
        %v2869 = vunpack.c.l.b16 %v472
        %v2870 = vunpack.c.h.b16 %v472
        %v2871 = vunpack.c.l.b16 %v473
        %v2872 = vunpack.c.h.b16 %v473
        %v2873 = vunpack.c.l.b16 %v474
        %v2874 = vunpack.c.h.b16 %v474
        %v2875 = vunpack.c.l.b16 %v475
        %v2876 = vunpack.c.h.b16 %v475
        %v2877 = vunpack.c.l.b16 %v476
        %v2878 = vunpack.c.h.b16 %v476
        %v2879 = vunpack.c.l.b16 %v477
        %v2880 = vunpack.c.h.b16 %v477
        %v2881 = vunpack.c.l.b16 %v478
        %v2882 = vunpack.c.h.b16 %v478
        %v2883 = vunpack.c.l.b16 %v479
        %v2884 = vunpack.c.h.b16 %v479
        %v2885 = vunpack.c.l.b16 %v480
        %v2886 = vunpack.c.h.b16 %v480
        %v2887 = vunpack.c.l.b16 %v481
        %v2888 = vunpack.c.h.b16 %v481
        %v2889 = vunpack.c.l.b16 %v482
        %v2890 = vunpack.c.h.b16 %v482
        %v2891 = vunpack.c.l.b16 %v483
        %v2892 = vunpack.c.h.b16 %v483
        %v2893 = vunpack.c.l.b16 %v484
        %v2894 = vunpack.c.h.b16 %v484
        %v2895 = vunpack.c.l.b16 %v485
        %v2896 = vunpack.c.h.b16 %v485
        %v2897 = vunpack.c.l.b16 %v486
        %v2898 = vunpack.c.h.b16 %v486
        %v2899 = vunpack.c.l.b16 %v487
        %v2900 = vunpack.c.h.b16 %v487
        %v2901 = vunpack.c.l.b16 %v488
        %v2902 = vunpack.c.h.b16 %v488
        %v2903 = vunpack.c.l.b16 %v489
        %v2904 = vunpack.c.h.b16 %v489
        %v2905 = vunpack.c.l.b16 %v490
        %v2906 = vunpack.c.h.b16 %v490
        %v2907 = vunpack.c.l.b16 %v491
        %v2908 = vunpack.c.h.b16 %v491
        %v2909 = vunpack.c.l.b16 %v492
        %v2910 = vunpack.c.h.b16 %v492
        %v2911 = vunpack.c.l.b16 %v493
        %v2912 = vunpack.c.h.b16 %v493
        %v2913 = vunpack.c.l.b16 %v494
        %v2914 = vunpack.c.h.b16 %v494
        %v2915 = vunpack.c.l.b16 %v495
        %v2916 = vunpack.c.h.b16 %v495
        %v2917 = vunpack.c.l.b16 %v496
        %v2918 = vunpack.c.h.b16 %v496
        %v2919 = vunpack.c.l.b16 %v497
        %v2920 = vunpack.c.h.b16 %v497
        %v2921 = vunpack.c.l.b16 %v498
        %v2922 = vunpack.c.h.b16 %v498
        %v2923 = vunpack.c.l.b16 %v499
        %v2924 = vunpack.c.h.b16 %v499
        %v2925 = vunpack.c.l.b16 %v500
        %v2926 = vunpack.c.h.b16 %v500
        %v2927 = vunpack.c.l.b16 %v501
        %v2928 = vunpack.c.h.b16 %v501
        %v2929 = vunpack.c.l.b16 %v502
        %v2930 = vunpack.c.h.b16 %v502
        %v2931 = vunpack.c.l.b16 %v503
        %v2932 = vunpack.c.h.b16 %v503
        %v2933 = vunpack.c.l.b16 %v504
        %v2934 = vunpack.c.h.b16 %v504
        %v2935 = vunpack.c.l.b16 %v505
        %v2936 = vunpack.c.h.b16 %v505
        %v2937 = vunpack.c.l.b16 %v506
        %v2938 = vunpack.c.h.b16 %v506
        %v2939 = vunpack.c.l.b16 %v507
        %v2940 = vunpack.c.h.b16 %v507
        %v2941 = vunpack.c.l.b16 %v508
        %v2942 = vunpack.c.h.b16 %v508
        %v2943 = vunpack.c.l.b16 %v509
        %v2944 = vunpack.c.h.b16 %v509
        %v2945 = vunpack.c.l.b16 %v510
        %v2946 = vunpack.c.h.b16 %v510
        %v2947 = vunpack.c.l.b16 %v511
        %v2948 = vunpack.c.h.b16 %v511
        %v2949 = vpack.c.b16 %v2697, %v2693
        %v2950 = vpack.c.b16 %v2698, %v2694
        %v2951 = vpack.c.b16 %v2699, %v2695
        %v2952 = vpack.c.b16 %v2700, %v2696
        %v2953 = vpack.c.b16 %v2705, %v2701
        %v2954 = vpack.c.b16 %v2706, %v2702
        %v2955 = vpack.c.b16 %v2707, %v2703
        %v2956 = vpack.c.b16 %v2708, %v2704
        %v2957 = vpack.c.b16 %v2713, %v2709
        %v2958 = vpack.c.b16 %v2714, %v2710
        %v2959 = vpack.c.b16 %v2715, %v2711
        %v2960 = vpack.c.b16 %v2716, %v2712
        %v2961 = vpack.c.b16 %v2721, %v2717
        %v2962 = vpack.c.b16 %v2722, %v2718
        %v2963 = vpack.c.b16 %v2723, %v2719
        %v2964 = vpack.c.b16 %v2724, %v2720
        %v2965 = vpack.c.b16 %v2729, %v2725
        %v2966 = vpack.c.b16 %v2730, %v2726
        %v2967 = vpack.c.b16 %v2731, %v2727
        %v2968 = vpack.c.b16 %v2732, %v2728
        %v2969 = vpack.c.b16 %v2737, %v2733
        %v2970 = vpack.c.b16 %v2738, %v2734
        %v2971 = vpack.c.b16 %v2739, %v2735
        %v2972 = vpack.c.b16 %v2740, %v2736
        %v2973 = vpack.c.b16 %v2745, %v2741
        %v2974 = vpack.c.b16 %v2746, %v2742
        %v2975 = vpack.c.b16 %v2747, %v2743
        %v2976 = vpack.c.b16 %v2748, %v2744
        %v2977 = vpack.c.b16 %v2753, %v2749
        %v2978 = vpack.c.b16 %v2754, %v2750
        %v2979 = vpack.c.b16 %v2755, %v2751
        %v2980 = vpack.c.b16 %v2756, %v2752
        %v2981 = vpack.c.b16 %v2761, %v2757
        %v2982 = vpack.c.b16 %v2762, %v2758
        %v2983 = vpack.c.b16 %v2763, %v2759
        %v2984 = vpack.c.b16 %v2764, %v2760
        %v2985 = vpack.c.b16 %v2769, %v2765
        %v2986 = vpack.c.b16 %v2770, %v2766
        %v2987 = vpack.c.b16 %v2771, %v2767
        %v2988 = vpack.c.b16 %v2772, %v2768
        %v2989 = vpack.c.b16 %v2777, %v2773
        %v2990 = vpack.c.b16 %v2778, %v2774
        %v2991 = vpack.c.b16 %v2779, %v2775
        %v2992 = vpack.c.b16 %v2780, %v2776
        %v2993 = vpack.c.b16 %v2785, %v2781
        %v2994 = vpack.c.b16 %v2786, %v2782
        %v2995 = vpack.c.b16 %v2787, %v2783
        %v2996 = vpack.c.b16 %v2788, %v2784
        %v2997 = vpack.c.b16 %v2793, %v2789
        %v2998 = vpack.c.b16 %v2794, %v2790
        %v2999 = vpack.c.b16 %v2795, %v2791
        %v3000 = vpack.c.b16 %v2796, %v2792
        %v3001 = vpack.c.b16 %v2801, %v2797
        %v3002 = vpack.c.b16 %v2802, %v2798
        %v3003 = vpack.c.b16 %v2803, %v2799
        %v3004 = vpack.c.b16 %v2804, %v2800
        %v3005 = vpack.c.b16 %v2809, %v2805
        %v3006 = vpack.c.b16 %v2810, %v2806
        %v3007 = vpack.c.b16 %v2811, %v2807
        %v3008 = vpack.c.b16 %v2812, %v2808
        %v3009 = vpack.c.b16 %v2817, %v2813
        %v3010 = vpack.c.b16 %v2818, %v2814
        %v3011 = vpack.c.b16 %v2819, %v2815
        %v3012 = vpack.c.b16 %v2820, %v2816
        %v3013 = vpack.c.b16 %v2825, %v2821
        %v3014 = vpack.c.b16 %v2826, %v2822
        %v3015 = vpack.c.b16 %v2827, %v2823
        %v3016 = vpack.c.b16 %v2828, %v2824
        %v3017 = vpack.c.b16 %v2833, %v2829
        %v3018 = vpack.c.b16 %v2834, %v2830
        %v3019 = vpack.c.b16 %v2835, %v2831
        %v3020 = vpack.c.b16 %v2836, %v2832
        %v3021 = vpack.c.b16 %v2841, %v2837
        %v3022 = vpack.c.b16 %v2842, %v2838
        %v3023 = vpack.c.b16 %v2843, %v2839
        %v3024 = vpack.c.b16 %v2844, %v2840
        %v3025 = vpack.c.b16 %v2849, %v2845
        %v3026 = vpack.c.b16 %v2850, %v2846
        %v3027 = vpack.c.b16 %v2851, %v2847
        %v3028 = vpack.c.b16 %v2852, %v2848
        %v3029 = vpack.c.b16 %v2857, %v2853
        %v3030 = vpack.c.b16 %v2858, %v2854
        %v3031 = vpack.c.b16 %v2859, %v2855
        %v3032 = vpack.c.b16 %v2860, %v2856
        %v3033 = vpack.c.b16 %v2865, %v2861
        %v3034 = vpack.c.b16 %v2866, %v2862
        %v3035 = vpack.c.b16 %v2867, %v2863
        %v3036 = vpack.c.b16 %v2868, %v2864
        %v3037 = vpack.c.b16 %v2873, %v2869
        %v3038 = vpack.c.b16 %v2874, %v2870
        %v3039 = vpack.c.b16 %v2875, %v2871
        %v3040 = vpack.c.b16 %v2876, %v2872
        %v3041 = vpack.c.b16 %v2881, %v2877
        %v3042 = vpack.c.b16 %v2882, %v2878
        %v3043 = vpack.c.b16 %v2883, %v2879
        %v3044 = vpack.c.b16 %v2884, %v2880
        %v3045 = vpack.c.b16 %v2889, %v2885
        %v3046 = vpack.c.b16 %v2890, %v2886
        %v3047 = vpack.c.b16 %v2891, %v2887
        %v3048 = vpack.c.b16 %v2892, %v2888
        %v3049 = vpack.c.b16 %v2897, %v2893
        %v3050 = vpack.c.b16 %v2898, %v2894
        %v3051 = vpack.c.b16 %v2899, %v2895
        %v3052 = vpack.c.b16 %v2900, %v2896
        %v3053 = vpack.c.b16 %v2905, %v2901
        %v3054 = vpack.c.b16 %v2906, %v2902
        %v3055 = vpack.c.b16 %v2907, %v2903
        %v3056 = vpack.c.b16 %v2908, %v2904
        %v3057 = vpack.c.b16 %v2913, %v2909
        %v3058 = vpack.c.b16 %v2914, %v2910
        %v3059 = vpack.c.b16 %v2915, %v2911
        %v3060 = vpack.c.b16 %v2916, %v2912
        %v3061 = vpack.c.b16 %v2921, %v2917
        %v3062 = vpack.c.b16 %v2922, %v2918
        %v3063 = vpack.c.b16 %v2923, %v2919
        %v3064 = vpack.c.b16 %v2924, %v2920
        %v3065 = vpack.c.b16 %v2929, %v2925
        %v3066 = vpack.c.b16 %v2930, %v2926
        %v3067 = vpack.c.b16 %v2931, %v2927
        %v3068 = vpack.c.b16 %v2932, %v2928
        %v3069 = vpack.c.b16 %v2937, %v2933
        %v3070 = vpack.c.b16 %v2938, %v2934
        %v3071 = vpack.c.b16 %v2939, %v2935
        %v3072 = vpack.c.b16 %v2940, %v2936
        %v3073 = vpack.c.b16 %v2945, %v2941
        %v3074 = vpack.c.b16 %v2946, %v2942
        %v3075 = vpack.c.b16 %v2947, %v2943
        %v3076 = vpack.c.b16 %v2948, %v2944
        %3205 = vmatprep.subr.bf16.mxu0 %v2950
        %3206 = vmatpush1.bf16.msra.mxu0 %v2949
        %3207 = vmatprep.subr.bf16.mxu0 %v2954
        %3208 = vmatpush1.bf16.msra.mxu0 %v2953
        %3209 = vmatprep.subr.bf16.mxu0 %v2958
        %3210 = vmatpush1.bf16.msra.mxu0 %v2957
        %3211 = vmatprep.subr.bf16.mxu0 %v2962
        %3212 = vmatpush1.bf16.msra.mxu0 %v2961
        %3213 = vmatprep.subr.bf16.mxu0 %v2966
        %3214 = vmatpush1.bf16.msra.mxu0 %v2965
        %3215 = vmatprep.subr.bf16.mxu0 %v2970
        %3216 = vmatpush1.bf16.msra.mxu0 %v2969
        %3217 = vmatprep.subr.bf16.mxu0 %v2974
        %3218 = vmatpush1.bf16.msra.mxu0 %v2973
        %3219 = vmatprep.subr.bf16.mxu0 %v2978
        %3220 = vmatpush1.bf16.msra.mxu0 %v2977
        %3221 = vmatprep.subr.bf16.mxu0 %v2982
        %3222 = vmatpush1.bf16.msra.mxu0 %v2981
        %3223 = vmatprep.subr.bf16.mxu0 %v2986
        %3224 = vmatpush1.bf16.msra.mxu0 %v2985
        %3225 = vmatprep.subr.bf16.mxu0 %v2990
        %3226 = vmatpush1.bf16.msra.mxu0 %v2989
        %3227 = vmatprep.subr.bf16.mxu0 %v2994
        %3228 = vmatpush1.bf16.msra.mxu0 %v2993
        %3229 = vmatprep.subr.bf16.mxu0 %v2998
        %3230 = vmatpush1.bf16.msra.mxu0 %v2997
        %3231 = vmatprep.subr.bf16.mxu0 %v3002
        %3232 = vmatpush1.bf16.msra.mxu0 %v3001
        %3233 = vmatprep.subr.bf16.mxu0 %v3006
        %3234 = vmatpush1.bf16.msra.mxu0 %v3005
        %3235 = vmatprep.subr.bf16.mxu0 %v3010
        %3236 = vmatpush1.bf16.msra.mxu0 %v3009
        %3237 = vmatprep.mubr.bf16.mxu0 %v2481
        %3238 = vmatmul.mubr.bf16.gmra.mrb[0].mxu0 %v2480
        %v3239 = vpop.f32.mrb[0].mxu0
        %v3240 = vadd.f32 %v2548, %v3239
        %v3241 = vpop.f32.mrb[0].mxu0
        %v3242 = vadd.f32 %v2552, %v3241
        %v3243 = vpop.f32.mrb[0].mxu0
        %v3244 = vadd.f32 %v2548, %v3243
        %v3245 = vpop.f32.mrb[0].mxu0
        %v3246 = vadd.f32 %v2552, %v3245
        %3247 = vmatprep.mubr.bf16.mxu0 %v2485
        %3248 = vmatmul.mubr.bf16.gmra.mrb[0].mxu0 %v2484
        %v3249 = vpop.f32.mrb[0].mxu0
        %v3250 = vadd.f32 %v2548, %v3249
        %v3251 = vpop.f32.mrb[0].mxu0
        %v3252 = vadd.f32 %v2552, %v3251
        %v3253 = vpop.f32.mrb[0].mxu0
        %v3254 = vadd.f32 %v2548, %v3253
        %v3255 = vpop.f32.mrb[0].mxu0
        %v3256 = vadd.f32 %v2552, %v3255
        %3257 = vmatprep.mubr.bf16.mxu0 %v2489
        %3258 = vmatmul.mubr.bf16.gmra.mrb[0].mxu0 %v2488
        %v3259 = vpop.f32.mrb[0].mxu0
        %v3260 = vadd.f32 %v2548, %v3259
        %v3261 = vpop.f32.mrb[0].mxu0
        %v3262 = vadd.f32 %v2552, %v3261
        %v3263 = vpop.f32.mrb[0].mxu0
        %v3264 = vadd.f32 %v2548, %v3263
        %v3265 = vpop.f32.mrb[0].mxu0
        %v3266 = vadd.f32 %v2552, %v3265
        %3267 = vmatprep.mubr.bf16.mxu0 %v2493
        %3268 = vmatmul.mubr.bf16.gmra.mrb[0].mxu0 %v2492
        %v3269 = vpop.f32.mrb[0].mxu0
        %v3270 = vadd.f32 %v2548, %v3269
        %v3271 = vpop.f32.mrb[0].mxu0
        %v3272 = vadd.f32 %v2552, %v3271
        %v3273 = vpop.f32.mrb[0].mxu0
        %v3274 = vadd.f32 %v2548, %v3273
        %v3275 = vpop.f32.mrb[0].mxu0
        %v3276 = vadd.f32 %v2552, %v3275
        %3277 = vmatprep.mubr.bf16.mxu0 %v2497
        %3278 = vmatmul.mubr.bf16.gmra.mrb[0].mxu0 %v2496
        %v3279 = vpop.f32.mrb[0].mxu0
        %v3280 = vadd.f32 %v2548, %v3279
        %v3281 = vpop.f32.mrb[0].mxu0
        %v3282 = vadd.f32 %v2552, %v3281
        %v3283 = vpop.f32.mrb[0].mxu0
        %v3284 = vadd.f32 %v2548, %v3283
        %v3285 = vpop.f32.mrb[0].mxu0
        %v3286 = vadd.f32 %v2552, %v3285
        %3287 = vmatprep.mubr.bf16.mxu0 %v2501
        %3288 = vmatmul.mubr.bf16.gmra.mrb[0].mxu0 %v2500
        %v3289 = vpop.f32.mrb[0].mxu0
        %v3290 = vadd.f32 %v2548, %v3289
        %v3291 = vpop.f32.mrb[0].mxu0
        %v3292 = vadd.f32 %v2552, %v3291
        %v3293 = vpop.f32.mrb[0].mxu0
        %v3294 = vadd.f32 %v2548, %v3293
        %v3295 = vpop.f32.mrb[0].mxu0
        %v3296 = vadd.f32 %v2552, %v3295
        %3297 = vmatprep.mubr.bf16.mxu0 %v2505
        %3298 = vmatmul.mubr.bf16.gmra.mrb[0].mxu0 %v2504
        %v3299 = vpop.f32.mrb[0].mxu0
        %v3300 = vadd.f32 %v2548, %v3299
        %v3301 = vpop.f32.mrb[0].mxu0
        %v3302 = vadd.f32 %v2552, %v3301
        %v3303 = vpop.f32.mrb[0].mxu0
        %v3304 = vadd.f32 %v2548, %v3303
        %v3305 = vpop.f32.mrb[0].mxu0
        %v3306 = vadd.f32 %v2552, %v3305
        %3307 = vmatprep.mubr.bf16.mxu0 %v2509
        %3308 = vmatmul.mubr.bf16.gmra.mrb[0].mxu0 %v2508
        %v3309 = vpop.f32.mrb[0].mxu0
        %v3310 = vadd.f32 %v2548, %v3309
        %v3311 = vpop.f32.mrb[0].mxu0
        %v3312 = vadd.f32 %v2552, %v3311
        %v3313 = vpop.f32.mrb[0].mxu0
        %v3314 = vadd.f32 %v2548, %v3313
        %v3315 = vpop.f32.mrb[0].mxu0
        %v3316 = vadd.f32 %v2552, %v3315
        %3317 = vmatprep.mubr.bf16.mxu0 %v2513
        %3318 = vmatmul.mubr.bf16.gmra.mrb[0].mxu0 %v2512
        %v3319 = vpop.f32.mrb[0].mxu0
        %v3320 = vadd.f32 %v2548, %v3319
        %v3321 = vpop.f32.mrb[0].mxu0
        %v3322 = vadd.f32 %v2552, %v3321
        %v3323 = vpop.f32.mrb[0].mxu0
        %v3324 = vadd.f32 %v2548, %v3323
        %v3325 = vpop.f32.mrb[0].mxu0
        %v3326 = vadd.f32 %v2552, %v3325
        %3327 = vmatprep.mubr.bf16.mxu0 %v2517
        %3328 = vmatmul.mubr.bf16.gmra.mrb[0].mxu0 %v2516
        %v3329 = vpop.f32.mrb[0].mxu0
        %v3330 = vadd.f32 %v2548, %v3329
        %v3331 = vpop.f32.mrb[0].mxu0
        %v3332 = vadd.f32 %v2552, %v3331
        %v3333 = vpop.f32.mrb[0].mxu0
        %v3334 = vadd.f32 %v2548, %v3333
        %v3335 = vpop.f32.mrb[0].mxu0
        %v3336 = vadd.f32 %v2552, %v3335
        %3337 = vmatprep.mubr.bf16.mxu0 %v2521
        %3338 = vmatmul.mubr.bf16.gmra.mrb[0].mxu0 %v2520
        %v3339 = vpop.f32.mrb[0].mxu0
        %v3340 = vadd.f32 %v2548, %v3339
        %v3341 = vpop.f32.mrb[0].mxu0
        %v3342 = vadd.f32 %v2552, %v3341
        %v3343 = vpop.f32.mrb[0].mxu0
        %v3344 = vadd.f32 %v2548, %v3343
        %v3345 = vpop.f32.mrb[0].mxu0
        %v3346 = vadd.f32 %v2552, %v3345
        %3347 = vmatprep.mubr.bf16.mxu0 %v2525
        %3348 = vmatmul.mubr.bf16.gmra.mrb[0].mxu0 %v2524
        %v3349 = vpop.f32.mrb[0].mxu0
        %v3350 = vadd.f32 %v2548, %v3349
        %v3351 = vpop.f32.mrb[0].mxu0
        %v3352 = vadd.f32 %v2552, %v3351
        %v3353 = vpop.f32.mrb[0].mxu0
        %v3354 = vadd.f32 %v2548, %v3353
        %v3355 = vpop.f32.mrb[0].mxu0
        %v3356 = vadd.f32 %v2552, %v3355
        %3357 = vmatprep.mubr.bf16.mxu0 %v2529
        %3358 = vmatmul.mubr.bf16.gmra.mrb[0].mxu0 %v2528
        %v3359 = vpop.f32.mrb[0].mxu0
        %v3360 = vadd.f32 %v2548, %v3359
        %v3361 = vpop.f32.mrb[0].mxu0
        %v3362 = vadd.f32 %v2552, %v3361
        %v3363 = vpop.f32.mrb[0].mxu0
        %v3364 = vadd.f32 %v2548, %v3363
        %v3365 = vpop.f32.mrb[0].mxu0
        %v3366 = vadd.f32 %v2552, %v3365
        %3367 = vmatprep.mubr.bf16.mxu0 %v2533
        %3368 = vmatmul.mubr.bf16.gmra.mrb[0].mxu0 %v2532
        %v3369 = vpop.f32.mrb[0].mxu0
        %v3370 = vadd.f32 %v2548, %v3369
        %v3371 = vpop.f32.mrb[0].mxu0
        %v3372 = vadd.f32 %v2552, %v3371
        %v3373 = vpop.f32.mrb[0].mxu0
        %v3374 = vadd.f32 %v2548, %v3373
        %v3375 = vpop.f32.mrb[0].mxu0
        %v3376 = vadd.f32 %v2552, %v3375
        %3377 = vmatprep.mubr.bf16.mxu0 %v2537
        %3378 = vmatmul.mubr.bf16.gmra.mrb[0].mxu0 %v2536
        %v3379 = vpop.f32.mrb[0].mxu0
        %v3380 = vadd.f32 %v2548, %v3379
        %v3381 = vpop.f32.mrb[0].mxu0
        %v3382 = vadd.f32 %v2552, %v3381
        %v3383 = vpop.f32.mrb[0].mxu0
        %v3384 = vadd.f32 %v2548, %v3383
        %v3385 = vpop.f32.mrb[0].mxu0
        %v3386 = vadd.f32 %v2552, %v3385
        %3387 = vmatprep.mubr.bf16.mxu0 %v2541
        %3388 = vmatmul.mubr.bf16.gmra.mrb[0].mxu0 %v2540
        %v3389 = vpop.f32.mrb[0].mxu0
        %v3390 = vadd.f32 %v2548, %v3389
        %v3391 = vpop.f32.mrb[0].mxu0
        %v3392 = vadd.f32 %v2552, %v3391
        %v3393 = vpop.f32.mrb[0].mxu0
        %v3394 = vadd.f32 %v2548, %v3393
        %v3395 = vpop.f32.mrb[0].mxu0
        %v3396 = vadd.f32 %v2552, %v3395
        %3397 = vdwg.mxu0
        %3398 = vmatprep.subr.bf16.mxu0 %v3014
        %3399 = vmatpush1.bf16.msra.mxu0 %v3013
        %3400 = vmatprep.subr.bf16.mxu0 %v3018
        %3401 = vmatpush1.bf16.msra.mxu0 %v3017
        %3402 = vmatprep.subr.bf16.mxu0 %v3022
        %3403 = vmatpush1.bf16.msra.mxu0 %v3021
        %3404 = vmatprep.subr.bf16.mxu0 %v3026
        %3405 = vmatpush1.bf16.msra.mxu0 %v3025
        %3406 = vmatprep.subr.bf16.mxu0 %v3030
        %3407 = vmatpush1.bf16.msra.mxu0 %v3029
        %3408 = vmatprep.subr.bf16.mxu0 %v3034
        %3409 = vmatpush1.bf16.msra.mxu0 %v3033
        %3410 = vmatprep.subr.bf16.mxu0 %v3038
        %3411 = vmatpush1.bf16.msra.mxu0 %v3037
        %3412 = vmatprep.subr.bf16.mxu0 %v3042
        %3413 = vmatpush1.bf16.msra.mxu0 %v3041
        %3414 = vmatprep.subr.bf16.mxu0 %v3046
        %3415 = vmatpush1.bf16.msra.mxu0 %v3045
        %3416 = vmatprep.subr.bf16.mxu0 %v3050
        %3417 = vmatpush1.bf16.msra.mxu0 %v3049
        %3418 = vmatprep.subr.bf16.mxu0 %v3054
        %3419 = vmatpush1.bf16.msra.mxu0 %v3053
        %3420 = vmatprep.subr.bf16.mxu0 %v3058
        %3421 = vmatpush1.bf16.msra.mxu0 %v3057
        %3422 = vmatprep.subr.bf16.mxu0 %v3062
        %3423 = vmatpush1.bf16.msra.mxu0 %v3061
        %3424 = vmatprep.subr.bf16.mxu0 %v3066
        %3425 = vmatpush1.bf16.msra.mxu0 %v3065
        %3426 = vmatprep.subr.bf16.mxu0 %v3070
        %3427 = vmatpush1.bf16.msra.mxu0 %v3069
        %3428 = vmatprep.subr.bf16.mxu0 %v3074
        %3429 = vmatpush1.bf16.msra.mxu0 %v3073
        %3430 = vmatprep.mubr.bf16.mxu0 %v2483
        %3431 = vmatmul.mubr.bf16.gmra.mrb[0].mxu0 %v2482
        %v3432 = vpop.f32.mrb[0].mxu0
        %v3433 = vadd.f32 %v3240, %v3432
        %v3434 = vpop.f32.mrb[0].mxu0
        %v3435 = vadd.f32 %v3242, %v3434
        %v3436 = vpop.f32.mrb[0].mxu0
        %v3437 = vadd.f32 %v3244, %v3436
        %v3438 = vpop.f32.mrb[0].mxu0
        %v3439 = vadd.f32 %v3246, %v3438
        %3440 = vmatprep.mubr.bf16.mxu0 %v2487
        %3441 = vmatmul.mubr.bf16.gmra.mrb[0].mxu0 %v2486
        %v3442 = vpop.f32.mrb[0].mxu0
        %v3443 = vadd.f32 %v3250, %v3442
        %v3444 = vpop.f32.mrb[0].mxu0
        %v3445 = vadd.f32 %v3252, %v3444
        %v3446 = vpop.f32.mrb[0].mxu0
        %v3447 = vadd.f32 %v3254, %v3446
        %v3448 = vpop.f32.mrb[0].mxu0
        %v3449 = vadd.f32 %v3256, %v3448
        %3450 = vmatprep.mubr.bf16.mxu0 %v2491
        %3451 = vmatmul.mubr.bf16.gmra.mrb[0].mxu0 %v2490
        %v3452 = vpop.f32.mrb[0].mxu0
        %v3453 = vadd.f32 %v3260, %v3452
        %v3454 = vpop.f32.mrb[0].mxu0
        %v3455 = vadd.f32 %v3262, %v3454
        %v3456 = vpop.f32.mrb[0].mxu0
        %v3457 = vadd.f32 %v3264, %v3456
        %v3458 = vpop.f32.mrb[0].mxu0
        %v3459 = vadd.f32 %v3266, %v3458
        %3460 = vmatprep.mubr.bf16.mxu0 %v2495
        %3461 = vmatmul.mubr.bf16.gmra.mrb[0].mxu0 %v2494
        %v3462 = vpop.f32.mrb[0].mxu0
        %v3463 = vadd.f32 %v3270, %v3462
        %v3464 = vpop.f32.mrb[0].mxu0
        %v3465 = vadd.f32 %v3272, %v3464
        %v3466 = vpop.f32.mrb[0].mxu0
        %v3467 = vadd.f32 %v3274, %v3466
        %v3468 = vpop.f32.mrb[0].mxu0
        %v3469 = vadd.f32 %v3276, %v3468
        %3470 = vmatprep.mubr.bf16.mxu0 %v2499
        %3471 = vmatmul.mubr.bf16.gmra.mrb[0].mxu0 %v2498
        %v3472 = vpop.f32.mrb[0].mxu0
        %v3473 = vadd.f32 %v3280, %v3472
        %v3474 = vpop.f32.mrb[0].mxu0
        %v3475 = vadd.f32 %v3282, %v3474
        %v3476 = vpop.f32.mrb[0].mxu0
        %v3477 = vadd.f32 %v3284, %v3476
        %v3478 = vpop.f32.mrb[0].mxu0
        %v3479 = vadd.f32 %v3286, %v3478
        %3480 = vmatprep.mubr.bf16.mxu0 %v2503
        %3481 = vmatmul.mubr.bf16.gmra.mrb[0].mxu0 %v2502
        %v3482 = vpop.f32.mrb[0].mxu0
        %v3483 = vadd.f32 %v3290, %v3482
        %v3484 = vpop.f32.mrb[0].mxu0
        %v3485 = vadd.f32 %v3292, %v3484
        %v3486 = vpop.f32.mrb[0].mxu0
        %v3487 = vadd.f32 %v3294, %v3486
        %v3488 = vpop.f32.mrb[0].mxu0
        %v3489 = vadd.f32 %v3296, %v3488
        %3490 = vmatprep.mubr.bf16.mxu0 %v2507
        %3491 = vmatmul.mubr.bf16.gmra.mrb[0].mxu0 %v2506
        %v3492 = vpop.f32.mrb[0].mxu0
        %v3493 = vadd.f32 %v3300, %v3492
        %v3494 = vpop.f32.mrb[0].mxu0
        %v3495 = vadd.f32 %v3302, %v3494
        %v3496 = vpop.f32.mrb[0].mxu0
        %v3497 = vadd.f32 %v3304, %v3496
        %v3498 = vpop.f32.mrb[0].mxu0
        %v3499 = vadd.f32 %v3306, %v3498
        %3500 = vmatprep.mubr.bf16.mxu0 %v2511
        %3501 = vmatmul.mubr.bf16.gmra.mrb[0].mxu0 %v2510
        %v3502 = vpop.f32.mrb[0].mxu0
        %v3503 = vadd.f32 %v3310, %v3502
        %v3504 = vpop.f32.mrb[0].mxu0
        %v3505 = vadd.f32 %v3312, %v3504
        %v3506 = vpop.f32.mrb[0].mxu0
        %v3507 = vadd.f32 %v3314, %v3506
        %v3508 = vpop.f32.mrb[0].mxu0
        %v3509 = vadd.f32 %v3316, %v3508
        %3510 = vmatprep.mubr.bf16.mxu0 %v2515
        %3511 = vmatmul.mubr.bf16.gmra.mrb[0].mxu0 %v2514
        %v3512 = vpop.f32.mrb[0].mxu0
        %v3513 = vadd.f32 %v3320, %v3512
        %v3514 = vpop.f32.mrb[0].mxu0
        %v3515 = vadd.f32 %v3322, %v3514
        %v3516 = vpop.f32.mrb[0].mxu0
        %v3517 = vadd.f32 %v3324, %v3516
        %v3518 = vpop.f32.mrb[0].mxu0
        %v3519 = vadd.f32 %v3326, %v3518
        %3520 = vmatprep.mubr.bf16.mxu0 %v2519
        %3521 = vmatmul.mubr.bf16.gmra.mrb[0].mxu0 %v2518
        %v3522 = vpop.f32.mrb[0].mxu0
        %v3523 = vadd.f32 %v3330, %v3522
        %v3524 = vpop.f32.mrb[0].mxu0
        %v3525 = vadd.f32 %v3332, %v3524
        %v3526 = vpop.f32.mrb[0].mxu0
        %v3527 = vadd.f32 %v3334, %v3526
        %v3528 = vpop.f32.mrb[0].mxu0
        %v3529 = vadd.f32 %v3336, %v3528
        %3530 = vmatprep.mubr.bf16.mxu0 %v2523
        %3531 = vmatmul.mubr.bf16.gmra.mrb[0].mxu0 %v2522
        %v3532 = vpop.f32.mrb[0].mxu0
        %v3533 = vadd.f32 %v3340, %v3532
        %v3534 = vpop.f32.mrb[0].mxu0
        %v3535 = vadd.f32 %v3342, %v3534
        %v3536 = vpop.f32.mrb[0].mxu0
        %v3537 = vadd.f32 %v3344, %v3536
        %v3538 = vpop.f32.mrb[0].mxu0
        %v3539 = vadd.f32 %v3346, %v3538
        %3540 = vmatprep.mubr.bf16.mxu0 %v2527
        %3541 = vmatmul.mubr.bf16.gmra.mrb[0].mxu0 %v2526
        %v3542 = vpop.f32.mrb[0].mxu0
        %v3543 = vadd.f32 %v3350, %v3542
        %v3544 = vpop.f32.mrb[0].mxu0
        %v3545 = vadd.f32 %v3352, %v3544
        %v3546 = vpop.f32.mrb[0].mxu0
        %v3547 = vadd.f32 %v3354, %v3546
        %v3548 = vpop.f32.mrb[0].mxu0
        %v3549 = vadd.f32 %v3356, %v3548
        %3550 = vmatprep.mubr.bf16.mxu0 %v2531
        %3551 = vmatmul.mubr.bf16.gmra.mrb[0].mxu0 %v2530
        %v3552 = vpop.f32.mrb[0].mxu0
        %v3553 = vadd.f32 %v3360, %v3552
        %v3554 = vpop.f32.mrb[0].mxu0
        %v3555 = vadd.f32 %v3362, %v3554
        %v3556 = vpop.f32.mrb[0].mxu0
        %v3557 = vadd.f32 %v3364, %v3556
        %v3558 = vpop.f32.mrb[0].mxu0
        %v3559 = vadd.f32 %v3366, %v3558
        %3560 = vmatprep.mubr.bf16.mxu0 %v2535
        %3561 = vmatmul.mubr.bf16.gmra.mrb[0].mxu0 %v2534
        %v3562 = vpop.f32.mrb[0].mxu0
        %v3563 = vadd.f32 %v3370, %v3562
        %v3564 = vpop.f32.mrb[0].mxu0
        %v3565 = vadd.f32 %v3372, %v3564
        %v3566 = vpop.f32.mrb[0].mxu0
        %v3567 = vadd.f32 %v3374, %v3566
        %v3568 = vpop.f32.mrb[0].mxu0
        %v3569 = vadd.f32 %v3376, %v3568
        %3570 = vmatprep.mubr.bf16.mxu0 %v2539
        %3571 = vmatmul.mubr.bf16.gmra.mrb[0].mxu0 %v2538
        %v3572 = vpop.f32.mrb[0].mxu0
        %v3573 = vadd.f32 %v3380, %v3572
        %v3574 = vpop.f32.mrb[0].mxu0
        %v3575 = vadd.f32 %v3382, %v3574
        %v3576 = vpop.f32.mrb[0].mxu0
        %v3577 = vadd.f32 %v3384, %v3576
        %v3578 = vpop.f32.mrb[0].mxu0
        %v3579 = vadd.f32 %v3386, %v3578
        %3580 = vmatprep.mubr.bf16.mxu0 %v2543
        %3581 = vmatmul.mubr.bf16.gmra.mrb[0].mxu0 %v2542
        %v3582 = vpop.f32.mrb[0].mxu0
        %v3583 = vadd.f32 %v3390, %v3582
        %v3584 = vpop.f32.mrb[0].mxu0
        %v3585 = vadd.f32 %v3392, %v3584
        %v3586 = vpop.f32.mrb[0].mxu0
        %v3587 = vadd.f32 %v3394, %v3586
        %v3588 = vpop.f32.mrb[0].mxu0
        %v3589 = vadd.f32 %v3396, %v3588
        %3590 = vdwg.mxu0
        %3591 = vmatprep.subr.bf16.mxu0 %v2952
        %3592 = vmatpush1.bf16.msra.mxu0 %v2951
        %3593 = vmatprep.subr.bf16.mxu0 %v2956
        %3594 = vmatpush1.bf16.msra.mxu0 %v2955
        %3595 = vmatprep.subr.bf16.mxu0 %v2960
        %3596 = vmatpush1.bf16.msra.mxu0 %v2959
        %3597 = vmatprep.subr.bf16.mxu0 %v2964
        %3598 = vmatpush1.bf16.msra.mxu0 %v2963
        %3599 = vmatprep.subr.bf16.mxu0 %v2968
        %3600 = vmatpush1.bf16.msra.mxu0 %v2967
        %3601 = vmatprep.subr.bf16.mxu0 %v2972
        %3602 = vmatpush1.bf16.msra.mxu0 %v2971
        %3603 = vmatprep.subr.bf16.mxu0 %v2976
        %3604 = vmatpush1.bf16.msra.mxu0 %v2975
        %3605 = vmatprep.subr.bf16.mxu0 %v2980
        %3606 = vmatpush1.bf16.msra.mxu0 %v2979
        %3607 = vmatprep.subr.bf16.mxu0 %v2984
        %3608 = vmatpush1.bf16.msra.mxu0 %v2983
        %3609 = vmatprep.subr.bf16.mxu0 %v2988
        %3610 = vmatpush1.bf16.msra.mxu0 %v2987
        %3611 = vmatprep.subr.bf16.mxu0 %v2992
        %3612 = vmatpush1.bf16.msra.mxu0 %v2991
        %3613 = vmatprep.subr.bf16.mxu0 %v2996
        %3614 = vmatpush1.bf16.msra.mxu0 %v2995
        %3615 = vmatprep.subr.bf16.mxu0 %v3000
        %3616 = vmatpush1.bf16.msra.mxu0 %v2999
        %3617 = vmatprep.subr.bf16.mxu0 %v3004
        %3618 = vmatpush1.bf16.msra.mxu0 %v3003
        %3619 = vmatprep.subr.bf16.mxu0 %v3008
        %3620 = vmatpush1.bf16.msra.mxu0 %v3007
        %3621 = vmatprep.subr.bf16.mxu0 %v3012
        %3622 = vmatpush1.bf16.msra.mxu0 %v3011
        %3623 = vmatprep.mubr.bf16.mxu0 %v2481
        %3624 = vmatmul.mubr.bf16.gmra.mrb[0].mxu0 %v2480
        %v3625 = vpop.f32.mrb[0].mxu0
        %v3626 = vadd.f32 %v2556, %v3625
        %v3627 = vpop.f32.mrb[0].mxu0
        %v3628 = vadd.f32 %v2560, %v3627
        %v3629 = vpop.f32.mrb[0].mxu0
        %v3630 = vadd.f32 %v2556, %v3629
        %v3631 = vpop.f32.mrb[0].mxu0
        %v3632 = vadd.f32 %v2560, %v3631
        %3633 = vmatprep.mubr.bf16.mxu0 %v2485
        %3634 = vmatmul.mubr.bf16.gmra.mrb[0].mxu0 %v2484
        %v3635 = vpop.f32.mrb[0].mxu0
        %v3636 = vadd.f32 %v2556, %v3635
        %v3637 = vpop.f32.mrb[0].mxu0
        %v3638 = vadd.f32 %v2560, %v3637
        %v3639 = vpop.f32.mrb[0].mxu0
        %v3640 = vadd.f32 %v2556, %v3639
        %v3641 = vpop.f32.mrb[0].mxu0
        %v3642 = vadd.f32 %v2560, %v3641
        %3643 = vmatprep.mubr.bf16.mxu0 %v2489
        %3644 = vmatmul.mubr.bf16.gmra.mrb[0].mxu0 %v2488
        %v3645 = vpop.f32.mrb[0].mxu0
        %v3646 = vadd.f32 %v2556, %v3645
        %v3647 = vpop.f32.mrb[0].mxu0
        %v3648 = vadd.f32 %v2560, %v3647
        %v3649 = vpop.f32.mrb[0].mxu0
        %v3650 = vadd.f32 %v2556, %v3649
        %v3651 = vpop.f32.mrb[0].mxu0
        %v3652 = vadd.f32 %v2560, %v3651
        %3653 = vmatprep.mubr.bf16.mxu0 %v2493
        %3654 = vmatmul.mubr.bf16.gmra.mrb[0].mxu0 %v2492
        %v3655 = vpop.f32.mrb[0].mxu0
        %v3656 = vadd.f32 %v2556, %v3655
        %v3657 = vpop.f32.mrb[0].mxu0
        %v3658 = vadd.f32 %v2560, %v3657
        %v3659 = vpop.f32.mrb[0].mxu0
        %v3660 = vadd.f32 %v2556, %v3659
        %v3661 = vpop.f32.mrb[0].mxu0
        %v3662 = vadd.f32 %v2560, %v3661
        %3663 = vmatprep.mubr.bf16.mxu0 %v2497
        %3664 = vmatmul.mubr.bf16.gmra.mrb[0].mxu0 %v2496
        %v3665 = vpop.f32.mrb[0].mxu0
        %v3666 = vadd.f32 %v2556, %v3665
        %v3667 = vpop.f32.mrb[0].mxu0
        %v3668 = vadd.f32 %v2560, %v3667
        %v3669 = vpop.f32.mrb[0].mxu0
        %v3670 = vadd.f32 %v2556, %v3669
        %v3671 = vpop.f32.mrb[0].mxu0
        %v3672 = vadd.f32 %v2560, %v3671
        %3673 = vmatprep.mubr.bf16.mxu0 %v2501
        %3674 = vmatmul.mubr.bf16.gmra.mrb[0].mxu0 %v2500
        %v3675 = vpop.f32.mrb[0].mxu0
        %v3676 = vadd.f32 %v2556, %v3675
        %v3677 = vpop.f32.mrb[0].mxu0
        %v3678 = vadd.f32 %v2560, %v3677
        %v3679 = vpop.f32.mrb[0].mxu0
        %v3680 = vadd.f32 %v2556, %v3679
        %v3681 = vpop.f32.mrb[0].mxu0
        %v3682 = vadd.f32 %v2560, %v3681
        %3683 = vmatprep.mubr.bf16.mxu0 %v2505
        %3684 = vmatmul.mubr.bf16.gmra.mrb[0].mxu0 %v2504
        %v3685 = vpop.f32.mrb[0].mxu0
        %v3686 = vadd.f32 %v2556, %v3685
        %v3687 = vpop.f32.mrb[0].mxu0
        %v3688 = vadd.f32 %v2560, %v3687
        %v3689 = vpop.f32.mrb[0].mxu0
        %v3690 = vadd.f32 %v2556, %v3689
        %v3691 = vpop.f32.mrb[0].mxu0
        %v3692 = vadd.f32 %v2560, %v3691
        %3693 = vmatprep.mubr.bf16.mxu0 %v2509
        %3694 = vmatmul.mubr.bf16.gmra.mrb[0].mxu0 %v2508
        %v3695 = vpop.f32.mrb[0].mxu0
        %v3696 = vadd.f32 %v2556, %v3695
        %v3697 = vpop.f32.mrb[0].mxu0
        %v3698 = vadd.f32 %v2560, %v3697
        %v3699 = vpop.f32.mrb[0].mxu0
        %v3700 = vadd.f32 %v2556, %v3699
        %v3701 = vpop.f32.mrb[0].mxu0
        %v3702 = vadd.f32 %v2560, %v3701
        %3703 = vmatprep.mubr.bf16.mxu0 %v2513
        %3704 = vmatmul.mubr.bf16.gmra.mrb[0].mxu0 %v2512
        %v3705 = vpop.f32.mrb[0].mxu0
        %v3706 = vadd.f32 %v2556, %v3705
        %v3707 = vpop.f32.mrb[0].mxu0
        %v3708 = vadd.f32 %v2560, %v3707
        %v3709 = vpop.f32.mrb[0].mxu0
        %v3710 = vadd.f32 %v2556, %v3709
        %v3711 = vpop.f32.mrb[0].mxu0
        %v3712 = vadd.f32 %v2560, %v3711
        %3713 = vmatprep.mubr.bf16.mxu0 %v2517
        %3714 = vmatmul.mubr.bf16.gmra.mrb[0].mxu0 %v2516
        %v3715 = vpop.f32.mrb[0].mxu0
        %v3716 = vadd.f32 %v2556, %v3715
        %v3717 = vpop.f32.mrb[0].mxu0
        %v3718 = vadd.f32 %v2560, %v3717
        %v3719 = vpop.f32.mrb[0].mxu0
        %v3720 = vadd.f32 %v2556, %v3719
        %v3721 = vpop.f32.mrb[0].mxu0
        %v3722 = vadd.f32 %v2560, %v3721
        %3723 = vmatprep.mubr.bf16.mxu0 %v2521
        %3724 = vmatmul.mubr.bf16.gmra.mrb[0].mxu0 %v2520
        %v3725 = vpop.f32.mrb[0].mxu0
        %v3726 = vadd.f32 %v2556, %v3725
        %v3727 = vpop.f32.mrb[0].mxu0
        %v3728 = vadd.f32 %v2560, %v3727
        %v3729 = vpop.f32.mrb[0].mxu0
        %v3730 = vadd.f32 %v2556, %v3729
        %v3731 = vpop.f32.mrb[0].mxu0
        %v3732 = vadd.f32 %v2560, %v3731
        %3733 = vmatprep.mubr.bf16.mxu0 %v2525
        %3734 = vmatmul.mubr.bf16.gmra.mrb[0].mxu0 %v2524
        %v3735 = vpop.f32.mrb[0].mxu0
        %v3736 = vadd.f32 %v2556, %v3735
        %v3737 = vpop.f32.mrb[0].mxu0
        %v3738 = vadd.f32 %v2560, %v3737
        %v3739 = vpop.f32.mrb[0].mxu0
        %v3740 = vadd.f32 %v2556, %v3739
        %v3741 = vpop.f32.mrb[0].mxu0
        %v3742 = vadd.f32 %v2560, %v3741
        %3743 = vmatprep.mubr.bf16.mxu0 %v2529
        %3744 = vmatmul.mubr.bf16.gmra.mrb[0].mxu0 %v2528
        %v3745 = vpop.f32.mrb[0].mxu0
        %v3746 = vadd.f32 %v2556, %v3745
        %v3747 = vpop.f32.mrb[0].mxu0
        %v3748 = vadd.f32 %v2560, %v3747
        %v3749 = vpop.f32.mrb[0].mxu0
        %v3750 = vadd.f32 %v2556, %v3749
        %v3751 = vpop.f32.mrb[0].mxu0
        %v3752 = vadd.f32 %v2560, %v3751
        %3753 = vmatprep.mubr.bf16.mxu0 %v2533
        %3754 = vmatmul.mubr.bf16.gmra.mrb[0].mxu0 %v2532
        %v3755 = vpop.f32.mrb[0].mxu0
        %v3756 = vadd.f32 %v2556, %v3755
        %v3757 = vpop.f32.mrb[0].mxu0
        %v3758 = vadd.f32 %v2560, %v3757
        %v3759 = vpop.f32.mrb[0].mxu0
        %v3760 = vadd.f32 %v2556, %v3759
        %v3761 = vpop.f32.mrb[0].mxu0
        %v3762 = vadd.f32 %v2560, %v3761
        %3763 = vmatprep.mubr.bf16.mxu0 %v2537
        %3764 = vmatmul.mubr.bf16.gmra.mrb[0].mxu0 %v2536
        %v3765 = vpop.f32.mrb[0].mxu0
        %v3766 = vadd.f32 %v2556, %v3765
        %v3767 = vpop.f32.mrb[0].mxu0
        %v3768 = vadd.f32 %v2560, %v3767
        %v3769 = vpop.f32.mrb[0].mxu0
        %v3770 = vadd.f32 %v2556, %v3769
        %v3771 = vpop.f32.mrb[0].mxu0
        %v3772 = vadd.f32 %v2560, %v3771
        %3773 = vmatprep.mubr.bf16.mxu0 %v2541
        %3774 = vmatmul.mubr.bf16.gmra.mrb[0].mxu0 %v2540
        %v3775 = vpop.f32.mrb[0].mxu0
        %v3776 = vadd.f32 %v2556, %v3775
        %v3777 = vpop.f32.mrb[0].mxu0
        %v3778 = vadd.f32 %v2560, %v3777
        %v3779 = vpop.f32.mrb[0].mxu0
        %v3780 = vadd.f32 %v2556, %v3779
        %v3781 = vpop.f32.mrb[0].mxu0
        %v3782 = vadd.f32 %v2560, %v3781
        %3783 = vdwg.mxu0
        %3784 = vmatprep.subr.bf16.mxu0 %v3016
        %3785 = vmatpush1.bf16.msra.mxu0 %v3015
        %3786 = vmatprep.subr.bf16.mxu0 %v3020
        %3787 = vmatpush1.bf16.msra.mxu0 %v3019
        %3788 = vmatprep.subr.bf16.mxu0 %v3024
        %3789 = vmatpush1.bf16.msra.mxu0 %v3023
        %3790 = vmatprep.subr.bf16.mxu0 %v3028
        %3791 = vmatpush1.bf16.msra.mxu0 %v3027
        %3792 = vmatprep.subr.bf16.mxu0 %v3032
        %3793 = vmatpush1.bf16.msra.mxu0 %v3031
        %3794 = vmatprep.subr.bf16.mxu0 %v3036
        %3795 = vmatpush1.bf16.msra.mxu0 %v3035
        %3796 = vmatprep.subr.bf16.mxu0 %v3040
        %3797 = vmatpush1.bf16.msra.mxu0 %v3039
        %3798 = vmatprep.subr.bf16.mxu0 %v3044
        %3799 = vmatpush1.bf16.msra.mxu0 %v3043
        %3800 = vmatprep.subr.bf16.mxu0 %v3048
        %3801 = vmatpush1.bf16.msra.mxu0 %v3047
        %3802 = vmatprep.subr.bf16.mxu0 %v3052
        %3803 = vmatpush1.bf16.msra.mxu0 %v3051
        %3804 = vmatprep.subr.bf16.mxu0 %v3056
        %3805 = vmatpush1.bf16.msra.mxu0 %v3055
        %3806 = vmatprep.subr.bf16.mxu0 %v3060
        %3807 = vmatpush1.bf16.msra.mxu0 %v3059
        %3808 = vmatprep.subr.bf16.mxu0 %v3064
        %3809 = vmatpush1.bf16.msra.mxu0 %v3063
        %3810 = vmatprep.subr.bf16.mxu0 %v3068
        %3811 = vmatpush1.bf16.msra.mxu0 %v3067
        %3812 = vmatprep.subr.bf16.mxu0 %v3072
        %3813 = vmatpush1.bf16.msra.mxu0 %v3071
        %3814 = vmatprep.subr.bf16.mxu0 %v3076
        %3815 = vmatpush1.bf16.msra.mxu0 %v3075
        %3816 = vmatprep.mubr.bf16.mxu0 %v2483
        %3817 = vmatmul.mubr.bf16.gmra.mrb[0].mxu0 %v2482
        %v3818 = vpop.f32.mrb[0].mxu0
        %v3819 = vadd.f32 %v3626, %v3818
        %v3820 = vpop.f32.mrb[0].mxu0
        %v3821 = vadd.f32 %v3628, %v3820
        %v3822 = vpop.f32.mrb[0].mxu0
        %v3823 = vadd.f32 %v3630, %v3822
        %v3824 = vpop.f32.mrb[0].mxu0
        %v3825 = vadd.f32 %v3632, %v3824
        %3826 = vmatprep.mubr.bf16.mxu0 %v2487
        %3827 = vmatmul.mubr.bf16.gmra.mrb[0].mxu0 %v2486
        %v3828 = vpop.f32.mrb[0].mxu0
        %v3829 = vadd.f32 %v3636, %v3828
        %v3830 = vpop.f32.mrb[0].mxu0
        %v3831 = vadd.f32 %v3638, %v3830
        %v3832 = vpop.f32.mrb[0].mxu0
        %v3833 = vadd.f32 %v3640, %v3832
        %v3834 = vpop.f32.mrb[0].mxu0
        %v3835 = vadd.f32 %v3642, %v3834
        %3836 = vmatprep.mubr.bf16.mxu0 %v2491
        %3837 = vmatmul.mubr.bf16.gmra.mrb[0].mxu0 %v2490
        %v3838 = vpop.f32.mrb[0].mxu0
        %v3839 = vadd.f32 %v3646, %v3838
        %v3840 = vpop.f32.mrb[0].mxu0
        %v3841 = vadd.f32 %v3648, %v3840
        %v3842 = vpop.f32.mrb[0].mxu0
        %v3843 = vadd.f32 %v3650, %v3842
        %v3844 = vpop.f32.mrb[0].mxu0
        %v3845 = vadd.f32 %v3652, %v3844
        %3846 = vmatprep.mubr.bf16.mxu0 %v2495
        %3847 = vmatmul.mubr.bf16.gmra.mrb[0].mxu0 %v2494
        %v3848 = vpop.f32.mrb[0].mxu0
        %v3849 = vadd.f32 %v3656, %v3848
        %v3850 = vpop.f32.mrb[0].mxu0
        %v3851 = vadd.f32 %v3658, %v3850
        %v3852 = vpop.f32.mrb[0].mxu0
        %v3853 = vadd.f32 %v3660, %v3852
        %v3854 = vpop.f32.mrb[0].mxu0
        %v3855 = vadd.f32 %v3662, %v3854
        %3856 = vmatprep.mubr.bf16.mxu0 %v2499
        %3857 = vmatmul.mubr.bf16.gmra.mrb[0].mxu0 %v2498
        %v3858 = vpop.f32.mrb[0].mxu0
        %v3859 = vadd.f32 %v3666, %v3858
        %v3860 = vpop.f32.mrb[0].mxu0
        %v3861 = vadd.f32 %v3668, %v3860
        %v3862 = vpop.f32.mrb[0].mxu0
        %v3863 = vadd.f32 %v3670, %v3862
        %v3864 = vpop.f32.mrb[0].mxu0
        %v3865 = vadd.f32 %v3672, %v3864
        %3866 = vmatprep.mubr.bf16.mxu0 %v2503
        %3867 = vmatmul.mubr.bf16.gmra.mrb[0].mxu0 %v2502
        %v3868 = vpop.f32.mrb[0].mxu0
        %v3869 = vadd.f32 %v3676, %v3868
        %v3870 = vpop.f32.mrb[0].mxu0
        %v3871 = vadd.f32 %v3678, %v3870
        %v3872 = vpop.f32.mrb[0].mxu0
        %v3873 = vadd.f32 %v3680, %v3872
        %v3874 = vpop.f32.mrb[0].mxu0
        %v3875 = vadd.f32 %v3682, %v3874
        %3876 = vmatprep.mubr.bf16.mxu0 %v2507
        %3877 = vmatmul.mubr.bf16.gmra.mrb[0].mxu0 %v2506
        %v3878 = vpop.f32.mrb[0].mxu0
        %v3879 = vadd.f32 %v3686, %v3878
        %v3880 = vpop.f32.mrb[0].mxu0
        %v3881 = vadd.f32 %v3688, %v3880
        %v3882 = vpop.f32.mrb[0].mxu0
        %v3883 = vadd.f32 %v3690, %v3882
        %v3884 = vpop.f32.mrb[0].mxu0
        %v3885 = vadd.f32 %v3692, %v3884
        %3886 = vmatprep.mubr.bf16.mxu0 %v2511
        %3887 = vmatmul.mubr.bf16.gmra.mrb[0].mxu0 %v2510
        %v3888 = vpop.f32.mrb[0].mxu0
        %v3889 = vadd.f32 %v3696, %v3888
        %v3890 = vpop.f32.mrb[0].mxu0
        %v3891 = vadd.f32 %v3698, %v3890
        %v3892 = vpop.f32.mrb[0].mxu0
        %v3893 = vadd.f32 %v3700, %v3892
        %v3894 = vpop.f32.mrb[0].mxu0
        %v3895 = vadd.f32 %v3702, %v3894
        %3896 = vmatprep.mubr.bf16.mxu0 %v2515
        %3897 = vmatmul.mubr.bf16.gmra.mrb[0].mxu0 %v2514
        %v3898 = vpop.f32.mrb[0].mxu0
        %v3899 = vadd.f32 %v3706, %v3898
        %v3900 = vpop.f32.mrb[0].mxu0
        %v3901 = vadd.f32 %v3708, %v3900
        %v3902 = vpop.f32.mrb[0].mxu0
        %v3903 = vadd.f32 %v3710, %v3902
        %v3904 = vpop.f32.mrb[0].mxu0
        %v3905 = vadd.f32 %v3712, %v3904
        %3906 = vmatprep.mubr.bf16.mxu0 %v2519
        %3907 = vmatmul.mubr.bf16.gmra.mrb[0].mxu0 %v2518
        %v3908 = vpop.f32.mrb[0].mxu0
        %v3909 = vadd.f32 %v3716, %v3908
        %v3910 = vpop.f32.mrb[0].mxu0
        %v3911 = vadd.f32 %v3718, %v3910
        %v3912 = vpop.f32.mrb[0].mxu0
        %v3913 = vadd.f32 %v3720, %v3912
        %v3914 = vpop.f32.mrb[0].mxu0
        %v3915 = vadd.f32 %v3722, %v3914
        %3916 = vmatprep.mubr.bf16.mxu0 %v2523
        %3917 = vmatmul.mubr.bf16.gmra.mrb[0].mxu0 %v2522
        %v3918 = vpop.f32.mrb[0].mxu0
        %v3919 = vadd.f32 %v3726, %v3918
        %v3920 = vpop.f32.mrb[0].mxu0
        %v3921 = vadd.f32 %v3728, %v3920
        %v3922 = vpop.f32.mrb[0].mxu0
        %v3923 = vadd.f32 %v3730, %v3922
        %v3924 = vpop.f32.mrb[0].mxu0
        %v3925 = vadd.f32 %v3732, %v3924
        %3926 = vmatprep.mubr.bf16.mxu0 %v2527
        %3927 = vmatmul.mubr.bf16.gmra.mrb[0].mxu0 %v2526
        %v3928 = vpop.f32.mrb[0].mxu0
        %v3929 = vadd.f32 %v3736, %v3928
        %v3930 = vpop.f32.mrb[0].mxu0
        %v3931 = vadd.f32 %v3738, %v3930
        %v3932 = vpop.f32.mrb[0].mxu0
        %v3933 = vadd.f32 %v3740, %v3932
        %v3934 = vpop.f32.mrb[0].mxu0
        %v3935 = vadd.f32 %v3742, %v3934
        %3936 = vmatprep.mubr.bf16.mxu0 %v2531
        %3937 = vmatmul.mubr.bf16.gmra.mrb[0].mxu0 %v2530
        %v3938 = vpop.f32.mrb[0].mxu0
        %v3939 = vadd.f32 %v3746, %v3938
        %v3940 = vpop.f32.mrb[0].mxu0
        %v3941 = vadd.f32 %v3748, %v3940
        %v3942 = vpop.f32.mrb[0].mxu0
        %v3943 = vadd.f32 %v3750, %v3942
        %v3944 = vpop.f32.mrb[0].mxu0
        %v3945 = vadd.f32 %v3752, %v3944
        %3946 = vmatprep.mubr.bf16.mxu0 %v2535
        %3947 = vmatmul.mubr.bf16.gmra.mrb[0].mxu0 %v2534
        %v3948 = vpop.f32.mrb[0].mxu0
        %v3949 = vadd.f32 %v3756, %v3948
        %v3950 = vpop.f32.mrb[0].mxu0
        %v3951 = vadd.f32 %v3758, %v3950
        %v3952 = vpop.f32.mrb[0].mxu0
        %v3953 = vadd.f32 %v3760, %v3952
        %v3954 = vpop.f32.mrb[0].mxu0
        %v3955 = vadd.f32 %v3762, %v3954
        %3956 = vmatprep.mubr.bf16.mxu0 %v2539
        %3957 = vmatmul.mubr.bf16.gmra.mrb[0].mxu0 %v2538
        %v3958 = vpop.f32.mrb[0].mxu0
        %v3959 = vadd.f32 %v3766, %v3958
        %v3960 = vpop.f32.mrb[0].mxu0
        %v3961 = vadd.f32 %v3768, %v3960
        %v3962 = vpop.f32.mrb[0].mxu0
        %v3963 = vadd.f32 %v3770, %v3962
        %v3964 = vpop.f32.mrb[0].mxu0
        %v3965 = vadd.f32 %v3772, %v3964
        %3966 = vmatprep.mubr.bf16.mxu0 %v2543
        %3967 = vmatmul.mubr.bf16.gmra.mrb[0].mxu0 %v2542
        %v3968 = vpop.f32.mrb[0].mxu0
        %v3969 = vadd.f32 %v3776, %v3968
        %v3970 = vpop.f32.mrb[0].mxu0
        %v3971 = vadd.f32 %v3778, %v3970
        %v3972 = vpop.f32.mrb[0].mxu0
        %v3973 = vadd.f32 %v3780, %v3972
        %v3974 = vpop.f32.mrb[0].mxu0
        %v3975 = vadd.f32 %v3782, %v3974
        %3976 = vdwg.mxu0
        %v3977 = vpack.c.bf16 %v3437, %v3433
        %v3978 = vpack.c.bf16 %v3439, %v3435
        %v3979 = vpack.c.bf16 %v3823, %v3819
        %v3980 = vpack.c.bf16 %v3825, %v3821
        %v3981 = vpack.c.bf16 %v3447, %v3443
        %v3982 = vpack.c.bf16 %v3449, %v3445
        %v3983 = vpack.c.bf16 %v3833, %v3829
        %v3984 = vpack.c.bf16 %v3835, %v3831
        %v3985 = vpack.c.bf16 %v3457, %v3453
        %v3986 = vpack.c.bf16 %v3459, %v3455
        %v3987 = vpack.c.bf16 %v3843, %v3839
        %v3988 = vpack.c.bf16 %v3845, %v3841
        %v3989 = vpack.c.bf16 %v3467, %v3463
        %v3990 = vpack.c.bf16 %v3469, %v3465
        %v3991 = vpack.c.bf16 %v3853, %v3849
        %v3992 = vpack.c.bf16 %v3855, %v3851
        %v3993 = vpack.c.bf16 %v3477, %v3473
        %v3994 = vpack.c.bf16 %v3479, %v3475
        %v3995 = vpack.c.bf16 %v3863, %v3859
        %v3996 = vpack.c.bf16 %v3865, %v3861
        %v3997 = vpack.c.bf16 %v3487, %v3483
        %v3998 = vpack.c.bf16 %v3489, %v3485
        %v3999 = vpack.c.bf16 %v3873, %v3869
        %v4000 = vpack.c.bf16 %v3875, %v3871
        %v4001 = vpack.c.bf16 %v3497, %v3493
        %v4002 = vpack.c.bf16 %v3499, %v3495
        %v4003 = vpack.c.bf16 %v3883, %v3879
        %v4004 = vpack.c.bf16 %v3885, %v3881
        %v4005 = vpack.c.bf16 %v3507, %v3503
        %v4006 = vpack.c.bf16 %v3509, %v3505
        %v4007 = vpack.c.bf16 %v3893, %v3889
        %v4008 = vpack.c.bf16 %v3895, %v3891
        %v4009 = vpack.c.bf16 %v3517, %v3513
        %v4010 = vpack.c.bf16 %v3519, %v3515
        %v4011 = vpack.c.bf16 %v3903, %v3899
        %v4012 = vpack.c.bf16 %v3905, %v3901
        %v4013 = vpack.c.bf16 %v3527, %v3523
        %v4014 = vpack.c.bf16 %v3529, %v3525
        %v4015 = vpack.c.bf16 %v3913, %v3909
        %v4016 = vpack.c.bf16 %v3915, %v3911
        %v4017 = vpack.c.bf16 %v3537, %v3533
        %v4018 = vpack.c.bf16 %v3539, %v3535
        %v4019 = vpack.c.bf16 %v3923, %v3919
        %v4020 = vpack.c.bf16 %v3925, %v3921
        %v4021 = vpack.c.bf16 %v3547, %v3543
        %v4022 = vpack.c.bf16 %v3549, %v3545
        %v4023 = vpack.c.bf16 %v3933, %v3929
        %v4024 = vpack.c.bf16 %v3935, %v3931
        %v4025 = vpack.c.bf16 %v3557, %v3553
        %v4026 = vpack.c.bf16 %v3559, %v3555
        %v4027 = vpack.c.bf16 %v3943, %v3939
        %v4028 = vpack.c.bf16 %v3945, %v3941
        %v4029 = vpack.c.bf16 %v3567, %v3563
        %v4030 = vpack.c.bf16 %v3569, %v3565
        %v4031 = vpack.c.bf16 %v3953, %v3949
        %v4032 = vpack.c.bf16 %v3955, %v3951
        %v4033 = vpack.c.bf16 %v3577, %v3573
        %v4034 = vpack.c.bf16 %v3579, %v3575
        %v4035 = vpack.c.bf16 %v3963, %v3959
        %v4036 = vpack.c.bf16 %v3965, %v3961
        %v4037 = vpack.c.bf16 %v3587, %v3583
        %v4038 = vpack.c.bf16 %v3589, %v3585
        %v4039 = vpack.c.bf16 %v3973, %v3969
        %v4040 = vpack.c.bf16 %v3975, %v3971
        %v4041 = vmax.bf16 %v3977, 0
        %v4042 = vmax.bf16 %v3978, 0
        %v4043 = vmax.bf16 %v3979, 0
        %v4044 = vmax.bf16 %v3980, 0
        %v4045 = vmax.bf16 %v3981, 0
        %v4046 = vmax.bf16 %v3982, 0
        %v4047 = vmax.bf16 %v3983, 0
        %v4048 = vmax.bf16 %v3984, 0
        %v4049 = vmax.bf16 %v3985, 0
        %v4050 = vmax.bf16 %v3986, 0
        %v4051 = vmax.bf16 %v3987, 0
        %v4052 = vmax.bf16 %v3988, 0
        %v4053 = vmax.bf16 %v3989, 0
        %v4054 = vmax.bf16 %v3990, 0
        %v4055 = vmax.bf16 %v3991, 0
        %v4056 = vmax.bf16 %v3992, 0
        %v4057 = vmax.bf16 %v3993, 0
        %v4058 = vmax.bf16 %v3994, 0
        %v4059 = vmax.bf16 %v3995, 0
        %v4060 = vmax.bf16 %v3996, 0
        %v4061 = vmax.bf16 %v3997, 0
        %v4062 = vmax.bf16 %v3998, 0
        %v4063 = vmax.bf16 %v3999, 0
        %v4064 = vmax.bf16 %v4000, 0
        %v4065 = vmax.bf16 %v4001, 0
        %v4066 = vmax.bf16 %v4002, 0
        %v4067 = vmax.bf16 %v4003, 0
        %v4068 = vmax.bf16 %v4004, 0
        %v4069 = vmax.bf16 %v4005, 0
        %v4070 = vmax.bf16 %v4006, 0
        %v4071 = vmax.bf16 %v4007, 0
        %v4072 = vmax.bf16 %v4008, 0
        %v4073 = vmax.bf16 %v4009, 0
        %v4074 = vmax.bf16 %v4010, 0
        %v4075 = vmax.bf16 %v4011, 0
        %v4076 = vmax.bf16 %v4012, 0
        %v4077 = vmax.bf16 %v4013, 0
        %v4078 = vmax.bf16 %v4014, 0
        %v4079 = vmax.bf16 %v4015, 0
        %v4080 = vmax.bf16 %v4016, 0
        %v4081 = vmax.bf16 %v4017, 0
        %v4082 = vmax.bf16 %v4018, 0
        %v4083 = vmax.bf16 %v4019, 0
        %v4084 = vmax.bf16 %v4020, 0
        %v4085 = vmax.bf16 %v4021, 0
        %v4086 = vmax.bf16 %v4022, 0
        %v4087 = vmax.bf16 %v4023, 0
        %v4088 = vmax.bf16 %v4024, 0
        %v4089 = vmax.bf16 %v4025, 0
        %v4090 = vmax.bf16 %v4026, 0
        %v4091 = vmax.bf16 %v4027, 0
        %v4092 = vmax.bf16 %v4028, 0
        %v4093 = vmax.bf16 %v4029, 0
        %v4094 = vmax.bf16 %v4030, 0
        %v4095 = vmax.bf16 %v4031, 0
        %v4096 = vmax.bf16 %v4032, 0
        %v4097 = vmax.bf16 %v4033, 0
        %v4098 = vmax.bf16 %v4034, 0
        %v4099 = vmax.bf16 %v4035, 0
        %v4100 = vmax.bf16 %v4036, 0
        %v4101 = vmax.bf16 %v4037, 0
        %v4102 = vmax.bf16 %v4038, 0
        %v4103 = vmax.bf16 %v4039, 0
        %v4104 = vmax.bf16 %v4040, 0
        %v4106 = vlaneseq
        %v4107 = vshrl.u32 %v4106, 7
        %v4108 = vsub.s32 0, %v4107
        %v4109 = vrot.slane %v581, %v4108
        %v4110 = vlaneseq
        %v4111 = vshrl.u32 %v4110, 7
        %v4112 = vsub.s32 1, %v4111
        %v4113 = vrot.slane %v581, %v4112
        %v4180 = vunpack.c.l.b16 %v512
        %v4181 = vunpack.c.h.b16 %v512
        %v4182 = vunpack.c.l.b16 %v513
        %v4183 = vunpack.c.h.b16 %v513
        %v4184 = vunpack.c.l.b16 %v514
        %v4185 = vunpack.c.h.b16 %v514
        %v4186 = vunpack.c.l.b16 %v515
        %v4187 = vunpack.c.h.b16 %v515
        %v4188 = vunpack.c.l.b16 %v516
        %v4189 = vunpack.c.h.b16 %v516
        %v4190 = vunpack.c.l.b16 %v517
        %v4191 = vunpack.c.h.b16 %v517
        %v4192 = vunpack.c.l.b16 %v518
        %v4193 = vunpack.c.h.b16 %v518
        %v4194 = vunpack.c.l.b16 %v519
        %v4195 = vunpack.c.h.b16 %v519
        %v4196 = vunpack.c.l.b16 %v520
        %v4197 = vunpack.c.h.b16 %v520
        %v4198 = vunpack.c.l.b16 %v521
        %v4199 = vunpack.c.h.b16 %v521
        %v4200 = vunpack.c.l.b16 %v522
        %v4201 = vunpack.c.h.b16 %v522
        %v4202 = vunpack.c.l.b16 %v523
        %v4203 = vunpack.c.h.b16 %v523
        %v4204 = vunpack.c.l.b16 %v524
        %v4205 = vunpack.c.h.b16 %v524
        %v4206 = vunpack.c.l.b16 %v525
        %v4207 = vunpack.c.h.b16 %v525
        %v4208 = vunpack.c.l.b16 %v526
        %v4209 = vunpack.c.h.b16 %v526
        %v4210 = vunpack.c.l.b16 %v527
        %v4211 = vunpack.c.h.b16 %v527
        %v4212 = vunpack.c.l.b16 %v528
        %v4213 = vunpack.c.h.b16 %v528
        %v4214 = vunpack.c.l.b16 %v529
        %v4215 = vunpack.c.h.b16 %v529
        %v4216 = vunpack.c.l.b16 %v530
        %v4217 = vunpack.c.h.b16 %v530
        %v4218 = vunpack.c.l.b16 %v531
        %v4219 = vunpack.c.h.b16 %v531
        %v4220 = vunpack.c.l.b16 %v532
        %v4221 = vunpack.c.h.b16 %v532
        %v4222 = vunpack.c.l.b16 %v533
        %v4223 = vunpack.c.h.b16 %v533
        %v4224 = vunpack.c.l.b16 %v534
        %v4225 = vunpack.c.h.b16 %v534
        %v4226 = vunpack.c.l.b16 %v535
        %v4227 = vunpack.c.h.b16 %v535
        %v4228 = vunpack.c.l.b16 %v536
        %v4229 = vunpack.c.h.b16 %v536
        %v4230 = vunpack.c.l.b16 %v537
        %v4231 = vunpack.c.h.b16 %v537
        %v4232 = vunpack.c.l.b16 %v538
        %v4233 = vunpack.c.h.b16 %v538
        %v4234 = vunpack.c.l.b16 %v539
        %v4235 = vunpack.c.h.b16 %v539
        %v4236 = vunpack.c.l.b16 %v540
        %v4237 = vunpack.c.h.b16 %v540
        %v4238 = vunpack.c.l.b16 %v541
        %v4239 = vunpack.c.h.b16 %v541
        %v4240 = vunpack.c.l.b16 %v542
        %v4241 = vunpack.c.h.b16 %v542
        %v4242 = vunpack.c.l.b16 %v543
        %v4243 = vunpack.c.h.b16 %v543
        %v4244 = vunpack.c.l.b16 %v544
        %v4245 = vunpack.c.h.b16 %v544
        %v4246 = vunpack.c.l.b16 %v545
        %v4247 = vunpack.c.h.b16 %v545
        %v4248 = vunpack.c.l.b16 %v546
        %v4249 = vunpack.c.h.b16 %v546
        %v4250 = vunpack.c.l.b16 %v547
        %v4251 = vunpack.c.h.b16 %v547
        %v4252 = vunpack.c.l.b16 %v548
        %v4253 = vunpack.c.h.b16 %v548
        %v4254 = vunpack.c.l.b16 %v549
        %v4255 = vunpack.c.h.b16 %v549
        %v4256 = vunpack.c.l.b16 %v550
        %v4257 = vunpack.c.h.b16 %v550
        %v4258 = vunpack.c.l.b16 %v551
        %v4259 = vunpack.c.h.b16 %v551
        %v4260 = vunpack.c.l.b16 %v552
        %v4261 = vunpack.c.h.b16 %v552
        %v4262 = vunpack.c.l.b16 %v553
        %v4263 = vunpack.c.h.b16 %v553
        %v4264 = vunpack.c.l.b16 %v554
        %v4265 = vunpack.c.h.b16 %v554
        %v4266 = vunpack.c.l.b16 %v555
        %v4267 = vunpack.c.h.b16 %v555
        %v4268 = vunpack.c.l.b16 %v556
        %v4269 = vunpack.c.h.b16 %v556
        %v4270 = vunpack.c.l.b16 %v557
        %v4271 = vunpack.c.h.b16 %v557
        %v4272 = vunpack.c.l.b16 %v558
        %v4273 = vunpack.c.h.b16 %v558
        %v4274 = vunpack.c.l.b16 %v559
        %v4275 = vunpack.c.h.b16 %v559
        %v4276 = vunpack.c.l.b16 %v560
        %v4277 = vunpack.c.h.b16 %v560
        %v4278 = vunpack.c.l.b16 %v561
        %v4279 = vunpack.c.h.b16 %v561
        %v4280 = vunpack.c.l.b16 %v562
        %v4281 = vunpack.c.h.b16 %v562
        %v4282 = vunpack.c.l.b16 %v563
        %v4283 = vunpack.c.h.b16 %v563
        %v4284 = vunpack.c.l.b16 %v564
        %v4285 = vunpack.c.h.b16 %v564
        %v4286 = vunpack.c.l.b16 %v565
        %v4287 = vunpack.c.h.b16 %v565
        %v4288 = vunpack.c.l.b16 %v566
        %v4289 = vunpack.c.h.b16 %v566
        %v4290 = vunpack.c.l.b16 %v567
        %v4291 = vunpack.c.h.b16 %v567
        %v4292 = vunpack.c.l.b16 %v568
        %v4293 = vunpack.c.h.b16 %v568
        %v4294 = vunpack.c.l.b16 %v569
        %v4295 = vunpack.c.h.b16 %v569
        %v4296 = vunpack.c.l.b16 %v570
        %v4297 = vunpack.c.h.b16 %v570
        %v4298 = vunpack.c.l.b16 %v571
        %v4299 = vunpack.c.h.b16 %v571
        %v4300 = vunpack.c.l.b16 %v572
        %v4301 = vunpack.c.h.b16 %v572
        %v4302 = vunpack.c.l.b16 %v573
        %v4303 = vunpack.c.h.b16 %v573
        %v4304 = vunpack.c.l.b16 %v574
        %v4305 = vunpack.c.h.b16 %v574
        %v4306 = vunpack.c.l.b16 %v575
        %v4307 = vunpack.c.h.b16 %v575
        %v4308 = vpack.c.b16 %v4182, %v4180
        %v4309 = vpack.c.b16 %v4183, %v4181
        %v4310 = vpack.c.b16 %v4186, %v4184
        %v4311 = vpack.c.b16 %v4187, %v4185
        %v4312 = vpack.c.b16 %v4190, %v4188
        %v4313 = vpack.c.b16 %v4191, %v4189
        %v4314 = vpack.c.b16 %v4194, %v4192
        %v4315 = vpack.c.b16 %v4195, %v4193
        %v4316 = vpack.c.b16 %v4198, %v4196
        %v4317 = vpack.c.b16 %v4199, %v4197
        %v4318 = vpack.c.b16 %v4202, %v4200
        %v4319 = vpack.c.b16 %v4203, %v4201
        %v4320 = vpack.c.b16 %v4206, %v4204
        %v4321 = vpack.c.b16 %v4207, %v4205
        %v4322 = vpack.c.b16 %v4210, %v4208
        %v4323 = vpack.c.b16 %v4211, %v4209
        %v4324 = vpack.c.b16 %v4214, %v4212
        %v4325 = vpack.c.b16 %v4215, %v4213
        %v4326 = vpack.c.b16 %v4218, %v4216
        %v4327 = vpack.c.b16 %v4219, %v4217
        %v4328 = vpack.c.b16 %v4222, %v4220
        %v4329 = vpack.c.b16 %v4223, %v4221
        %v4330 = vpack.c.b16 %v4226, %v4224
        %v4331 = vpack.c.b16 %v4227, %v4225
        %v4332 = vpack.c.b16 %v4230, %v4228
        %v4333 = vpack.c.b16 %v4231, %v4229
        %v4334 = vpack.c.b16 %v4234, %v4232
        %v4335 = vpack.c.b16 %v4235, %v4233
        %v4336 = vpack.c.b16 %v4238, %v4236
        %v4337 = vpack.c.b16 %v4239, %v4237
        %v4338 = vpack.c.b16 %v4242, %v4240
        %v4339 = vpack.c.b16 %v4243, %v4241
        %v4340 = vpack.c.b16 %v4246, %v4244
        %v4341 = vpack.c.b16 %v4247, %v4245
        %v4342 = vpack.c.b16 %v4250, %v4248
        %v4343 = vpack.c.b16 %v4251, %v4249
        %v4344 = vpack.c.b16 %v4254, %v4252
        %v4345 = vpack.c.b16 %v4255, %v4253
        %v4346 = vpack.c.b16 %v4258, %v4256
        %v4347 = vpack.c.b16 %v4259, %v4257
        %v4348 = vpack.c.b16 %v4262, %v4260
        %v4349 = vpack.c.b16 %v4263, %v4261
        %v4350 = vpack.c.b16 %v4266, %v4264
        %v4351 = vpack.c.b16 %v4267, %v4265
        %v4352 = vpack.c.b16 %v4270, %v4268
        %v4353 = vpack.c.b16 %v4271, %v4269
        %v4354 = vpack.c.b16 %v4274, %v4272
        %v4355 = vpack.c.b16 %v4275, %v4273
        %v4356 = vpack.c.b16 %v4278, %v4276
        %v4357 = vpack.c.b16 %v4279, %v4277
        %v4358 = vpack.c.b16 %v4282, %v4280
        %v4359 = vpack.c.b16 %v4283, %v4281
        %v4360 = vpack.c.b16 %v4286, %v4284
        %v4361 = vpack.c.b16 %v4287, %v4285
        %v4362 = vpack.c.b16 %v4290, %v4288
        %v4363 = vpack.c.b16 %v4291, %v4289
        %v4364 = vpack.c.b16 %v4294, %v4292
        %v4365 = vpack.c.b16 %v4295, %v4293
        %v4366 = vpack.c.b16 %v4298, %v4296
        %v4367 = vpack.c.b16 %v4299, %v4297
        %v4368 = vpack.c.b16 %v4302, %v4300
        %v4369 = vpack.c.b16 %v4303, %v4301
        %v4370 = vpack.c.b16 %v4306, %v4304
        %v4371 = vpack.c.b16 %v4307, %v4305
        %4436 = vmatprep.subr.bf16.mxu0 %v4309
        %4437 = vmatpush1.bf16.msra.mxu0 %v4308
        %4438 = vmatprep.subr.bf16.mxu0 %v4311
        %4439 = vmatpush1.bf16.msra.mxu0 %v4310
        %4440 = vmatprep.subr.bf16.mxu0 %v4313
        %4441 = vmatpush1.bf16.msra.mxu0 %v4312
        %4442 = vmatprep.subr.bf16.mxu0 %v4315
        %4443 = vmatpush1.bf16.msra.mxu0 %v4314
        %4444 = vmatprep.subr.bf16.mxu0 %v4317
        %4445 = vmatpush1.bf16.msra.mxu0 %v4316
        %4446 = vmatprep.subr.bf16.mxu0 %v4319
        %4447 = vmatpush1.bf16.msra.mxu0 %v4318
        %4448 = vmatprep.subr.bf16.mxu0 %v4321
        %4449 = vmatpush1.bf16.msra.mxu0 %v4320
        %4450 = vmatprep.subr.bf16.mxu0 %v4323
        %4451 = vmatpush1.bf16.msra.mxu0 %v4322
        %4452 = vmatprep.subr.bf16.mxu0 %v4325
        %4453 = vmatpush1.bf16.msra.mxu0 %v4324
        %4454 = vmatprep.subr.bf16.mxu0 %v4327
        %4455 = vmatpush1.bf16.msra.mxu0 %v4326
        %4456 = vmatprep.subr.bf16.mxu0 %v4329
        %4457 = vmatpush1.bf16.msra.mxu0 %v4328
        %4458 = vmatprep.subr.bf16.mxu0 %v4331
        %4459 = vmatpush1.bf16.msra.mxu0 %v4330
        %4460 = vmatprep.subr.bf16.mxu0 %v4333
        %4461 = vmatpush1.bf16.msra.mxu0 %v4332
        %4462 = vmatprep.subr.bf16.mxu0 %v4335
        %4463 = vmatpush1.bf16.msra.mxu0 %v4334
        %4464 = vmatprep.subr.bf16.mxu0 %v4337
        %4465 = vmatpush1.bf16.msra.mxu0 %v4336
        %4466 = vmatprep.subr.bf16.mxu0 %v4339
        %4467 = vmatpush1.bf16.msra.mxu0 %v4338
        %4468 = vmatprep.mubr.bf16.mxu0 %v4042
        %4469 = vmatmul.mubr.bf16.gmra.mrb[0].mxu0 %v4041
        %v4470 = vpop.f32.mrb[0].mxu0
        %v4471 = vadd.f32 %v4109, %v4470
        %v4472 = vpop.f32.mrb[0].mxu0
        %v4473 = vadd.f32 %v4113, %v4472
        %v4474 = vpop.f32.mrb[0].mxu0
        %v4475 = vadd.f32 %v4109, %v4474
        %v4476 = vpop.f32.mrb[0].mxu0
        %v4477 = vadd.f32 %v4113, %v4476
        %4478 = vmatprep.mubr.bf16.mxu0 %v4046
        %4479 = vmatmul.mubr.bf16.gmra.mrb[0].mxu0 %v4045
        %v4480 = vpop.f32.mrb[0].mxu0
        %v4481 = vadd.f32 %v4109, %v4480
        %v4482 = vpop.f32.mrb[0].mxu0
        %v4483 = vadd.f32 %v4113, %v4482
        %v4484 = vpop.f32.mrb[0].mxu0
        %v4485 = vadd.f32 %v4109, %v4484
        %v4486 = vpop.f32.mrb[0].mxu0
        %v4487 = vadd.f32 %v4113, %v4486
        %4488 = vmatprep.mubr.bf16.mxu0 %v4050
        %4489 = vmatmul.mubr.bf16.gmra.mrb[0].mxu0 %v4049
        %v4490 = vpop.f32.mrb[0].mxu0
        %v4491 = vadd.f32 %v4109, %v4490
        %v4492 = vpop.f32.mrb[0].mxu0
        %v4493 = vadd.f32 %v4113, %v4492
        %v4494 = vpop.f32.mrb[0].mxu0
        %v4495 = vadd.f32 %v4109, %v4494
        %v4496 = vpop.f32.mrb[0].mxu0
        %v4497 = vadd.f32 %v4113, %v4496
        %4498 = vmatprep.mubr.bf16.mxu0 %v4054
        %4499 = vmatmul.mubr.bf16.gmra.mrb[0].mxu0 %v4053
        %v4500 = vpop.f32.mrb[0].mxu0
        %v4501 = vadd.f32 %v4109, %v4500
        %v4502 = vpop.f32.mrb[0].mxu0
        %v4503 = vadd.f32 %v4113, %v4502
        %v4504 = vpop.f32.mrb[0].mxu0
        %v4505 = vadd.f32 %v4109, %v4504
        %v4506 = vpop.f32.mrb[0].mxu0
        %v4507 = vadd.f32 %v4113, %v4506
        %4508 = vmatprep.mubr.bf16.mxu0 %v4058
        %4509 = vmatmul.mubr.bf16.gmra.mrb[0].mxu0 %v4057
        %v4510 = vpop.f32.mrb[0].mxu0
        %v4511 = vadd.f32 %v4109, %v4510
        %v4512 = vpop.f32.mrb[0].mxu0
        %v4513 = vadd.f32 %v4113, %v4512
        %v4514 = vpop.f32.mrb[0].mxu0
        %v4515 = vadd.f32 %v4109, %v4514
        %v4516 = vpop.f32.mrb[0].mxu0
        %v4517 = vadd.f32 %v4113, %v4516
        %4518 = vmatprep.mubr.bf16.mxu0 %v4062
        %4519 = vmatmul.mubr.bf16.gmra.mrb[0].mxu0 %v4061
        %v4520 = vpop.f32.mrb[0].mxu0
        %v4521 = vadd.f32 %v4109, %v4520
        %v4522 = vpop.f32.mrb[0].mxu0
        %v4523 = vadd.f32 %v4113, %v4522
        %v4524 = vpop.f32.mrb[0].mxu0
        %v4525 = vadd.f32 %v4109, %v4524
        %v4526 = vpop.f32.mrb[0].mxu0
        %v4527 = vadd.f32 %v4113, %v4526
        %4528 = vmatprep.mubr.bf16.mxu0 %v4066
        %4529 = vmatmul.mubr.bf16.gmra.mrb[0].mxu0 %v4065
        %v4530 = vpop.f32.mrb[0].mxu0
        %v4531 = vadd.f32 %v4109, %v4530
        %v4532 = vpop.f32.mrb[0].mxu0
        %v4533 = vadd.f32 %v4113, %v4532
        %v4534 = vpop.f32.mrb[0].mxu0
        %v4535 = vadd.f32 %v4109, %v4534
        %v4536 = vpop.f32.mrb[0].mxu0
        %v4537 = vadd.f32 %v4113, %v4536
        %4538 = vmatprep.mubr.bf16.mxu0 %v4070
        %4539 = vmatmul.mubr.bf16.gmra.mrb[0].mxu0 %v4069
        %v4540 = vpop.f32.mrb[0].mxu0
        %v4541 = vadd.f32 %v4109, %v4540
        %v4542 = vpop.f32.mrb[0].mxu0
        %v4543 = vadd.f32 %v4113, %v4542
        %v4544 = vpop.f32.mrb[0].mxu0
        %v4545 = vadd.f32 %v4109, %v4544
        %v4546 = vpop.f32.mrb[0].mxu0
        %v4547 = vadd.f32 %v4113, %v4546
        %4548 = vmatprep.mubr.bf16.mxu0 %v4074
        %4549 = vmatmul.mubr.bf16.gmra.mrb[0].mxu0 %v4073
        %v4550 = vpop.f32.mrb[0].mxu0
        %v4551 = vadd.f32 %v4109, %v4550
        %v4552 = vpop.f32.mrb[0].mxu0
        %v4553 = vadd.f32 %v4113, %v4552
        %v4554 = vpop.f32.mrb[0].mxu0
        %v4555 = vadd.f32 %v4109, %v4554
        %v4556 = vpop.f32.mrb[0].mxu0
        %v4557 = vadd.f32 %v4113, %v4556
        %4558 = vmatprep.mubr.bf16.mxu0 %v4078
        %4559 = vmatmul.mubr.bf16.gmra.mrb[0].mxu0 %v4077
        %v4560 = vpop.f32.mrb[0].mxu0
        %v4561 = vadd.f32 %v4109, %v4560
        %v4562 = vpop.f32.mrb[0].mxu0
        %v4563 = vadd.f32 %v4113, %v4562
        %v4564 = vpop.f32.mrb[0].mxu0
        %v4565 = vadd.f32 %v4109, %v4564
        %v4566 = vpop.f32.mrb[0].mxu0
        %v4567 = vadd.f32 %v4113, %v4566
        %4568 = vmatprep.mubr.bf16.mxu0 %v4082
        %4569 = vmatmul.mubr.bf16.gmra.mrb[0].mxu0 %v4081
        %v4570 = vpop.f32.mrb[0].mxu0
        %v4571 = vadd.f32 %v4109, %v4570
        %v4572 = vpop.f32.mrb[0].mxu0
        %v4573 = vadd.f32 %v4113, %v4572
        %v4574 = vpop.f32.mrb[0].mxu0
        %v4575 = vadd.f32 %v4109, %v4574
        %v4576 = vpop.f32.mrb[0].mxu0
        %v4577 = vadd.f32 %v4113, %v4576
        %4578 = vmatprep.mubr.bf16.mxu0 %v4086
        %4579 = vmatmul.mubr.bf16.gmra.mrb[0].mxu0 %v4085
        %v4580 = vpop.f32.mrb[0].mxu0
        %v4581 = vadd.f32 %v4109, %v4580
        %v4582 = vpop.f32.mrb[0].mxu0
        %v4583 = vadd.f32 %v4113, %v4582
        %v4584 = vpop.f32.mrb[0].mxu0
        %v4585 = vadd.f32 %v4109, %v4584
        %v4586 = vpop.f32.mrb[0].mxu0
        %v4587 = vadd.f32 %v4113, %v4586
        %4588 = vmatprep.mubr.bf16.mxu0 %v4090
        %4589 = vmatmul.mubr.bf16.gmra.mrb[0].mxu0 %v4089
        %v4590 = vpop.f32.mrb[0].mxu0
        %v4591 = vadd.f32 %v4109, %v4590
        %v4592 = vpop.f32.mrb[0].mxu0
        %v4593 = vadd.f32 %v4113, %v4592
        %v4594 = vpop.f32.mrb[0].mxu0
        %v4595 = vadd.f32 %v4109, %v4594
        %v4596 = vpop.f32.mrb[0].mxu0
        %v4597 = vadd.f32 %v4113, %v4596
        %4598 = vmatprep.mubr.bf16.mxu0 %v4094
        %4599 = vmatmul.mubr.bf16.gmra.mrb[0].mxu0 %v4093
        %v4600 = vpop.f32.mrb[0].mxu0
        %v4601 = vadd.f32 %v4109, %v4600
        %v4602 = vpop.f32.mrb[0].mxu0
        %v4603 = vadd.f32 %v4113, %v4602
        %v4604 = vpop.f32.mrb[0].mxu0
        %v4605 = vadd.f32 %v4109, %v4604
        %v4606 = vpop.f32.mrb[0].mxu0
        %v4607 = vadd.f32 %v4113, %v4606
        %4608 = vmatprep.mubr.bf16.mxu0 %v4098
        %4609 = vmatmul.mubr.bf16.gmra.mrb[0].mxu0 %v4097
        %v4610 = vpop.f32.mrb[0].mxu0
        %v4611 = vadd.f32 %v4109, %v4610
        %v4612 = vpop.f32.mrb[0].mxu0
        %v4613 = vadd.f32 %v4113, %v4612
        %v4614 = vpop.f32.mrb[0].mxu0
        %v4615 = vadd.f32 %v4109, %v4614
        %v4616 = vpop.f32.mrb[0].mxu0
        %v4617 = vadd.f32 %v4113, %v4616
        %4618 = vmatprep.mubr.bf16.mxu0 %v4102
        %4619 = vmatmul.mubr.bf16.gmra.mrb[0].mxu0 %v4101
        %v4620 = vpop.f32.mrb[0].mxu0
        %v4621 = vadd.f32 %v4109, %v4620
        %v4622 = vpop.f32.mrb[0].mxu0
        %v4623 = vadd.f32 %v4113, %v4622
        %v4624 = vpop.f32.mrb[0].mxu0
        %v4625 = vadd.f32 %v4109, %v4624
        %v4626 = vpop.f32.mrb[0].mxu0
        %v4627 = vadd.f32 %v4113, %v4626
        %4628 = vdwg.mxu0
        %4629 = vmatprep.subr.bf16.mxu0 %v4341
        %4630 = vmatpush1.bf16.msra.mxu0 %v4340
        %4631 = vmatprep.subr.bf16.mxu0 %v4343
        %4632 = vmatpush1.bf16.msra.mxu0 %v4342
        %4633 = vmatprep.subr.bf16.mxu0 %v4345
        %4634 = vmatpush1.bf16.msra.mxu0 %v4344
        %4635 = vmatprep.subr.bf16.mxu0 %v4347
        %4636 = vmatpush1.bf16.msra.mxu0 %v4346
        %4637 = vmatprep.subr.bf16.mxu0 %v4349
        %4638 = vmatpush1.bf16.msra.mxu0 %v4348
        %4639 = vmatprep.subr.bf16.mxu0 %v4351
        %4640 = vmatpush1.bf16.msra.mxu0 %v4350
        %4641 = vmatprep.subr.bf16.mxu0 %v4353
        %4642 = vmatpush1.bf16.msra.mxu0 %v4352
        %4643 = vmatprep.subr.bf16.mxu0 %v4355
        %4644 = vmatpush1.bf16.msra.mxu0 %v4354
        %4645 = vmatprep.subr.bf16.mxu0 %v4357
        %4646 = vmatpush1.bf16.msra.mxu0 %v4356
        %4647 = vmatprep.subr.bf16.mxu0 %v4359
        %4648 = vmatpush1.bf16.msra.mxu0 %v4358
        %4649 = vmatprep.subr.bf16.mxu0 %v4361
        %4650 = vmatpush1.bf16.msra.mxu0 %v4360
        %4651 = vmatprep.subr.bf16.mxu0 %v4363
        %4652 = vmatpush1.bf16.msra.mxu0 %v4362
        %4653 = vmatprep.subr.bf16.mxu0 %v4365
        %4654 = vmatpush1.bf16.msra.mxu0 %v4364
        %4655 = vmatprep.subr.bf16.mxu0 %v4367
        %4656 = vmatpush1.bf16.msra.mxu0 %v4366
        %4657 = vmatprep.subr.bf16.mxu0 %v4369
        %4658 = vmatpush1.bf16.msra.mxu0 %v4368
        %4659 = vmatprep.subr.bf16.mxu0 %v4371
        %4660 = vmatpush1.bf16.msra.mxu0 %v4370
        %4661 = vmatprep.mubr.bf16.mxu0 %v4044
        %4662 = vmatmul.mubr.bf16.gmra.mrb[0].mxu0 %v4043
        %v4663 = vpop.f32.mrb[0].mxu0
        %v4664 = vadd.f32 %v4471, %v4663
        %v4665 = vpop.f32.mrb[0].mxu0
        %v4666 = vadd.f32 %v4473, %v4665
        %v4667 = vpop.f32.mrb[0].mxu0
        %v4668 = vadd.f32 %v4475, %v4667
        %v4669 = vpop.f32.mrb[0].mxu0
        %v4670 = vadd.f32 %v4477, %v4669
        %4671 = vmatprep.mubr.bf16.mxu0 %v4048
        %4672 = vmatmul.mubr.bf16.gmra.mrb[0].mxu0 %v4047
        %v4673 = vpop.f32.mrb[0].mxu0
        %v4674 = vadd.f32 %v4481, %v4673
        %v4675 = vpop.f32.mrb[0].mxu0
        %v4676 = vadd.f32 %v4483, %v4675
        %v4677 = vpop.f32.mrb[0].mxu0
        %v4678 = vadd.f32 %v4485, %v4677
        %v4679 = vpop.f32.mrb[0].mxu0
        %v4680 = vadd.f32 %v4487, %v4679
        %4681 = vmatprep.mubr.bf16.mxu0 %v4052
        %4682 = vmatmul.mubr.bf16.gmra.mrb[0].mxu0 %v4051
        %v4683 = vpop.f32.mrb[0].mxu0
        %v4684 = vadd.f32 %v4491, %v4683
        %v4685 = vpop.f32.mrb[0].mxu0
        %v4686 = vadd.f32 %v4493, %v4685
        %v4687 = vpop.f32.mrb[0].mxu0
        %v4688 = vadd.f32 %v4495, %v4687
        %v4689 = vpop.f32.mrb[0].mxu0
        %v4690 = vadd.f32 %v4497, %v4689
        %4691 = vmatprep.mubr.bf16.mxu0 %v4056
        %4692 = vmatmul.mubr.bf16.gmra.mrb[0].mxu0 %v4055
        %v4693 = vpop.f32.mrb[0].mxu0
        %v4694 = vadd.f32 %v4501, %v4693
        %v4695 = vpop.f32.mrb[0].mxu0
        %v4696 = vadd.f32 %v4503, %v4695
        %v4697 = vpop.f32.mrb[0].mxu0
        %v4698 = vadd.f32 %v4505, %v4697
        %v4699 = vpop.f32.mrb[0].mxu0
        %v4700 = vadd.f32 %v4507, %v4699
        %4701 = vmatprep.mubr.bf16.mxu0 %v4060
        %4702 = vmatmul.mubr.bf16.gmra.mrb[0].mxu0 %v4059
        %v4703 = vpop.f32.mrb[0].mxu0
        %v4704 = vadd.f32 %v4511, %v4703
        %v4705 = vpop.f32.mrb[0].mxu0
        %v4706 = vadd.f32 %v4513, %v4705
        %v4707 = vpop.f32.mrb[0].mxu0
        %v4708 = vadd.f32 %v4515, %v4707
        %v4709 = vpop.f32.mrb[0].mxu0
        %v4710 = vadd.f32 %v4517, %v4709
        %4711 = vmatprep.mubr.bf16.mxu0 %v4064
        %4712 = vmatmul.mubr.bf16.gmra.mrb[0].mxu0 %v4063
        %v4713 = vpop.f32.mrb[0].mxu0
        %v4714 = vadd.f32 %v4521, %v4713
        %v4715 = vpop.f32.mrb[0].mxu0
        %v4716 = vadd.f32 %v4523, %v4715
        %v4717 = vpop.f32.mrb[0].mxu0
        %v4718 = vadd.f32 %v4525, %v4717
        %v4719 = vpop.f32.mrb[0].mxu0
        %v4720 = vadd.f32 %v4527, %v4719
        %4721 = vmatprep.mubr.bf16.mxu0 %v4068
        %4722 = vmatmul.mubr.bf16.gmra.mrb[0].mxu0 %v4067
        %v4723 = vpop.f32.mrb[0].mxu0
        %v4724 = vadd.f32 %v4531, %v4723
        %v4725 = vpop.f32.mrb[0].mxu0
        %v4726 = vadd.f32 %v4533, %v4725
        %v4727 = vpop.f32.mrb[0].mxu0
        %v4728 = vadd.f32 %v4535, %v4727
        %v4729 = vpop.f32.mrb[0].mxu0
        %v4730 = vadd.f32 %v4537, %v4729
        %4731 = vmatprep.mubr.bf16.mxu0 %v4072
        %4732 = vmatmul.mubr.bf16.gmra.mrb[0].mxu0 %v4071
        %v4733 = vpop.f32.mrb[0].mxu0
        %v4734 = vadd.f32 %v4541, %v4733
        %v4735 = vpop.f32.mrb[0].mxu0
        %v4736 = vadd.f32 %v4543, %v4735
        %v4737 = vpop.f32.mrb[0].mxu0
        %v4738 = vadd.f32 %v4545, %v4737
        %v4739 = vpop.f32.mrb[0].mxu0
        %v4740 = vadd.f32 %v4547, %v4739
        %4741 = vmatprep.mubr.bf16.mxu0 %v4076
        %4742 = vmatmul.mubr.bf16.gmra.mrb[0].mxu0 %v4075
        %v4743 = vpop.f32.mrb[0].mxu0
        %v4744 = vadd.f32 %v4551, %v4743
        %v4745 = vpop.f32.mrb[0].mxu0
        %v4746 = vadd.f32 %v4553, %v4745
        %v4747 = vpop.f32.mrb[0].mxu0
        %v4748 = vadd.f32 %v4555, %v4747
        %v4749 = vpop.f32.mrb[0].mxu0
        %v4750 = vadd.f32 %v4557, %v4749
        %4751 = vmatprep.mubr.bf16.mxu0 %v4080
        %4752 = vmatmul.mubr.bf16.gmra.mrb[0].mxu0 %v4079
        %v4753 = vpop.f32.mrb[0].mxu0
        %v4754 = vadd.f32 %v4561, %v4753
        %v4755 = vpop.f32.mrb[0].mxu0
        %v4756 = vadd.f32 %v4563, %v4755
        %v4757 = vpop.f32.mrb[0].mxu0
        %v4758 = vadd.f32 %v4565, %v4757
        %v4759 = vpop.f32.mrb[0].mxu0
        %v4760 = vadd.f32 %v4567, %v4759
        %4761 = vmatprep.mubr.bf16.mxu0 %v4084
        %4762 = vmatmul.mubr.bf16.gmra.mrb[0].mxu0 %v4083
        %v4763 = vpop.f32.mrb[0].mxu0
        %v4764 = vadd.f32 %v4571, %v4763
        %v4765 = vpop.f32.mrb[0].mxu0
        %v4766 = vadd.f32 %v4573, %v4765
        %v4767 = vpop.f32.mrb[0].mxu0
        %v4768 = vadd.f32 %v4575, %v4767
        %v4769 = vpop.f32.mrb[0].mxu0
        %v4770 = vadd.f32 %v4577, %v4769
        %4771 = vmatprep.mubr.bf16.mxu0 %v4088
        %4772 = vmatmul.mubr.bf16.gmra.mrb[0].mxu0 %v4087
        %v4773 = vpop.f32.mrb[0].mxu0
        %v4774 = vadd.f32 %v4581, %v4773
        %v4775 = vpop.f32.mrb[0].mxu0
        %v4776 = vadd.f32 %v4583, %v4775
        %v4777 = vpop.f32.mrb[0].mxu0
        %v4778 = vadd.f32 %v4585, %v4777
        %v4779 = vpop.f32.mrb[0].mxu0
        %v4780 = vadd.f32 %v4587, %v4779
        %4781 = vmatprep.mubr.bf16.mxu0 %v4092
        %4782 = vmatmul.mubr.bf16.gmra.mrb[0].mxu0 %v4091
        %v4783 = vpop.f32.mrb[0].mxu0
        %v4784 = vadd.f32 %v4591, %v4783
        %v4785 = vpop.f32.mrb[0].mxu0
        %v4786 = vadd.f32 %v4593, %v4785
        %v4787 = vpop.f32.mrb[0].mxu0
        %v4788 = vadd.f32 %v4595, %v4787
        %v4789 = vpop.f32.mrb[0].mxu0
        %v4790 = vadd.f32 %v4597, %v4789
        %4791 = vmatprep.mubr.bf16.mxu0 %v4096
        %4792 = vmatmul.mubr.bf16.gmra.mrb[0].mxu0 %v4095
        %v4793 = vpop.f32.mrb[0].mxu0
        %v4794 = vadd.f32 %v4601, %v4793
        %v4795 = vpop.f32.mrb[0].mxu0
        %v4796 = vadd.f32 %v4603, %v4795
        %v4797 = vpop.f32.mrb[0].mxu0
        %v4798 = vadd.f32 %v4605, %v4797
        %v4799 = vpop.f32.mrb[0].mxu0
        %v4800 = vadd.f32 %v4607, %v4799
        %4801 = vmatprep.mubr.bf16.mxu0 %v4100
        %4802 = vmatmul.mubr.bf16.gmra.mrb[0].mxu0 %v4099
        %v4803 = vpop.f32.mrb[0].mxu0
        %v4804 = vadd.f32 %v4611, %v4803
        %v4805 = vpop.f32.mrb[0].mxu0
        %v4806 = vadd.f32 %v4613, %v4805
        %v4807 = vpop.f32.mrb[0].mxu0
        %v4808 = vadd.f32 %v4615, %v4807
        %v4809 = vpop.f32.mrb[0].mxu0
        %v4810 = vadd.f32 %v4617, %v4809
        %4811 = vmatprep.mubr.bf16.mxu0 %v4104
        %4812 = vmatmul.mubr.bf16.gmra.mrb[0].mxu0 %v4103
        %v4813 = vpop.f32.mrb[0].mxu0
        %v4814 = vadd.f32 %v4621, %v4813
        %v4815 = vpop.f32.mrb[0].mxu0
        %v4816 = vadd.f32 %v4623, %v4815
        %v4817 = vpop.f32.mrb[0].mxu0
        %v4818 = vadd.f32 %v4625, %v4817
        %v4819 = vpop.f32.mrb[0].mxu0
        %v4820 = vadd.f32 %v4627, %v4819
        %4821 = vdwg.mxu0
        %v4822 = vpack.c.bf16 %v4668, %v4664
        %v4823 = vpack.c.bf16 %v4670, %v4666
        %v4824 = vpack.c.bf16 %v4678, %v4674
        %v4825 = vpack.c.bf16 %v4680, %v4676
        %v4826 = vpack.c.bf16 %v4688, %v4684
        %v4827 = vpack.c.bf16 %v4690, %v4686
        %v4828 = vpack.c.bf16 %v4698, %v4694
        %v4829 = vpack.c.bf16 %v4700, %v4696
        %v4830 = vpack.c.bf16 %v4708, %v4704
        %v4831 = vpack.c.bf16 %v4710, %v4706
        %v4832 = vpack.c.bf16 %v4718, %v4714
        %v4833 = vpack.c.bf16 %v4720, %v4716
        %v4834 = vpack.c.bf16 %v4728, %v4724
        %v4835 = vpack.c.bf16 %v4730, %v4726
        %v4836 = vpack.c.bf16 %v4738, %v4734
        %v4837 = vpack.c.bf16 %v4740, %v4736
        %v4838 = vpack.c.bf16 %v4748, %v4744
        %v4839 = vpack.c.bf16 %v4750, %v4746
        %v4840 = vpack.c.bf16 %v4758, %v4754
        %v4841 = vpack.c.bf16 %v4760, %v4756
        %v4842 = vpack.c.bf16 %v4768, %v4764
        %v4843 = vpack.c.bf16 %v4770, %v4766
        %v4844 = vpack.c.bf16 %v4778, %v4774
        %v4845 = vpack.c.bf16 %v4780, %v4776
        %v4846 = vpack.c.bf16 %v4788, %v4784
        %v4847 = vpack.c.bf16 %v4790, %v4786
        %v4848 = vpack.c.bf16 %v4798, %v4794
        %v4849 = vpack.c.bf16 %v4800, %v4796
        %v4850 = vpack.c.bf16 %v4808, %v4804
        %v4851 = vpack.c.bf16 %v4810, %v4806
        %v4852 = vpack.c.bf16 %v4818, %v4814
        %v4853 = vpack.c.bf16 %v4820, %v4816
        %v4854 = vmax.bf16 %v4822, 0
        %v4855 = vmax.bf16 %v4823, 0
        %v4856 = vmax.bf16 %v4824, 0
        %v4857 = vmax.bf16 %v4825, 0
        %v4858 = vmax.bf16 %v4826, 0
        %v4859 = vmax.bf16 %v4827, 0
        %v4860 = vmax.bf16 %v4828, 0
        %v4861 = vmax.bf16 %v4829, 0
        %v4862 = vmax.bf16 %v4830, 0
        %v4863 = vmax.bf16 %v4831, 0
        %v4864 = vmax.bf16 %v4832, 0
        %v4865 = vmax.bf16 %v4833, 0
        %v4866 = vmax.bf16 %v4834, 0
        %v4867 = vmax.bf16 %v4835, 0
        %v4868 = vmax.bf16 %v4836, 0
        %v4869 = vmax.bf16 %v4837, 0
        %v4870 = vmax.bf16 %v4838, 0
        %v4871 = vmax.bf16 %v4839, 0
        %v4872 = vmax.bf16 %v4840, 0
        %v4873 = vmax.bf16 %v4841, 0
        %v4874 = vmax.bf16 %v4842, 0
        %v4875 = vmax.bf16 %v4843, 0
        %v4876 = vmax.bf16 %v4844, 0
        %v4877 = vmax.bf16 %v4845, 0
        %v4878 = vmax.bf16 %v4846, 0
        %v4879 = vmax.bf16 %v4847, 0
        %v4880 = vmax.bf16 %v4848, 0
        %v4881 = vmax.bf16 %v4849, 0
        %v4882 = vmax.bf16 %v4850, 0
        %v4883 = vmax.bf16 %v4851, 0
        %v4884 = vmax.bf16 %v4852, 0
        %v4885 = vmax.bf16 %v4853, 0
        %v4886 = vld [vmem:[%s4] sm:$0xf]
        %v4887 = vld [vmem:[%s4 + $0x4] sm:$0xf]
        %v4888 = vld [vmem:[%s4 + $0x8] sm:$0xf]
        %v4889 = vld [vmem:[%s4 + $0xc] sm:$0xf]
        %v4890 = vld [vmem:[%s4 + $0x10] sm:$0xf]
        %v4891 = vld [vmem:[%s4 + $0x14] sm:$0xf]
        %v4892 = vld [vmem:[%s4 + $0x18] sm:$0xf]
        %v4893 = vld [vmem:[%s4 + $0x1c] sm:$0xf]
        %v4894 = vld [vmem:[%s4 + $0x20] sm:$0xf]
        %v4895 = vld [vmem:[%s4 + $0x24] sm:$0xf]
        %v4896 = vld [vmem:[%s4 + $0x28] sm:$0xf]
        %v4897 = vld [vmem:[%s4 + $0x2c] sm:$0xf]
        %v4898 = vld [vmem:[%s4 + $0x30] sm:$0xf]
        %v4899 = vld [vmem:[%s4 + $0x34] sm:$0xf]
        %v4900 = vld [vmem:[%s4 + $0x38] sm:$0xf]
        %v4901 = vld [vmem:[%s4 + $0x3c] sm:$0xf]
        %v4902 = vld [vmem:[%s4 + $0x40] sm:$0xf]
        %v4903 = vld [vmem:[%s4 + $0x44] sm:$0xf]
        %v4904 = vld [vmem:[%s4 + $0x48] sm:$0xf]
        %v4905 = vld [vmem:[%s4 + $0x4c] sm:$0xf]
        %v4906 = vld [vmem:[%s4 + $0x50] sm:$0xf]
        %v4907 = vld [vmem:[%s4 + $0x54] sm:$0xf]
        %v4908 = vld [vmem:[%s4 + $0x58] sm:$0xf]
        %v4909 = vld [vmem:[%s4 + $0x5c] sm:$0xf]
        %v4910 = vld [vmem:[%s4 + $0x60] sm:$0xf]
        %v4911 = vld [vmem:[%s4 + $0x64] sm:$0xf]
        %v4912 = vld [vmem:[%s4 + $0x68] sm:$0xf]
        %v4913 = vld [vmem:[%s4 + $0x6c] sm:$0xf]
        %v4914 = vld [vmem:[%s4 + $0x70] sm:$0xf]
        %v4915 = vld [vmem:[%s4 + $0x74] sm:$0xf]
        %v4916 = vld [vmem:[%s4 + $0x78] sm:$0xf]
        %v4917 = vld [vmem:[%s4 + $0x7c] sm:$0xf]
        %v4919 = vlaneseq
        %v4920 = vshrl.u32 %v4919, 7
        %v4921 = vsub.s32 0, %v4920
        %v4922 = vrot.slane %v582, %v4921
        %v4956 = vunpack.c.l.b16 %v4886
        %v4957 = vunpack.c.l.b16 %v4887
        %v4958 = vunpack.c.l.b16 %v4888
        %v4959 = vunpack.c.l.b16 %v4889
        %v4960 = vunpack.c.l.b16 %v4890
        %v4961 = vunpack.c.l.b16 %v4891
        %v4962 = vunpack.c.l.b16 %v4892
        %v4963 = vunpack.c.l.b16 %v4893
        %v4964 = vunpack.c.l.b16 %v4894
        %v4965 = vunpack.c.l.b16 %v4895
        %v4966 = vunpack.c.l.b16 %v4896
        %v4967 = vunpack.c.l.b16 %v4897
        %v4968 = vunpack.c.l.b16 %v4898
        %v4969 = vunpack.c.l.b16 %v4899
        %v4970 = vunpack.c.l.b16 %v4900
        %v4971 = vunpack.c.l.b16 %v4901
        %v4972 = vunpack.c.l.b16 %v4902
        %v4973 = vunpack.c.l.b16 %v4903
        %v4974 = vunpack.c.l.b16 %v4904
        %v4975 = vunpack.c.l.b16 %v4905
        %v4976 = vunpack.c.l.b16 %v4906
        %v4977 = vunpack.c.l.b16 %v4907
        %v4978 = vunpack.c.l.b16 %v4908
        %v4979 = vunpack.c.l.b16 %v4909
        %v4980 = vunpack.c.l.b16 %v4910
        %v4981 = vunpack.c.l.b16 %v4911
        %v4982 = vunpack.c.l.b16 %v4912
        %v4983 = vunpack.c.l.b16 %v4913
        %v4984 = vunpack.c.l.b16 %v4914
        %v4985 = vunpack.c.l.b16 %v4915
        %v4986 = vunpack.c.l.b16 %v4916
        %v4987 = vunpack.c.l.b16 %v4917
        %v4988 = vpack.c.b16 %v4957, %v4956
        %v4989 = vpack.c.b16 %v4959, %v4958
        %v4990 = vpack.c.b16 %v4961, %v4960
        %v4991 = vpack.c.b16 %v4963, %v4962
        %v4992 = vpack.c.b16 %v4965, %v4964
        %v4993 = vpack.c.b16 %v4967, %v4966
        %v4994 = vpack.c.b16 %v4969, %v4968
        %v4995 = vpack.c.b16 %v4971, %v4970
        %v4996 = vpack.c.b16 %v4973, %v4972
        %v4997 = vpack.c.b16 %v4975, %v4974
        %v4998 = vpack.c.b16 %v4977, %v4976
        %v4999 = vpack.c.b16 %v4979, %v4978
        %v5000 = vpack.c.b16 %v4981, %v4980
        %v5001 = vpack.c.b16 %v4983, %v4982
        %v5002 = vpack.c.b16 %v4985, %v4984
        %v5003 = vpack.c.b16 %v4987, %v4986
        %5020 = vmatprep.subr.bf16.mxu0 0
        %5021 = vmatpush1.bf16.msra.mxu0 %v4988
        %5022 = vmatprep.subr.bf16.mxu0 0
        %5023 = vmatpush1.bf16.msra.mxu0 %v4989
        %5024 = vmatprep.subr.bf16.mxu0 0
        %5025 = vmatpush1.bf16.msra.mxu0 %v4990
        %5026 = vmatprep.subr.bf16.mxu0 0
        %5027 = vmatpush1.bf16.msra.mxu0 %v4991
        %5028 = vmatprep.subr.bf16.mxu0 0
        %5029 = vmatpush1.bf16.msra.mxu0 %v4992
        %5030 = vmatprep.subr.bf16.mxu0 0
        %5031 = vmatpush1.bf16.msra.mxu0 %v4993
        %5032 = vmatprep.subr.bf16.mxu0 0
        %5033 = vmatpush1.bf16.msra.mxu0 %v4994
        %5034 = vmatprep.subr.bf16.mxu0 0
        %5035 = vmatpush1.bf16.msra.mxu0 %v4995
        %5036 = vmatprep.subr.bf16.mxu0 0
        %5037 = vmatpush1.bf16.msra.mxu0 %v4996
        %5038 = vmatprep.subr.bf16.mxu0 0
        %5039 = vmatpush1.bf16.msra.mxu0 %v4997
        %5040 = vmatprep.subr.bf16.mxu0 0
        %5041 = vmatpush1.bf16.msra.mxu0 %v4998
        %5042 = vmatprep.subr.bf16.mxu0 0
        %5043 = vmatpush1.bf16.msra.mxu0 %v4999
        %5044 = vmatprep.subr.bf16.mxu0 0
        %5045 = vmatpush1.bf16.msra.mxu0 %v5000
        %5046 = vmatprep.subr.bf16.mxu0 0
        %5047 = vmatpush1.bf16.msra.mxu0 %v5001
        %5048 = vmatprep.subr.bf16.mxu0 0
        %5049 = vmatpush1.bf16.msra.mxu0 %v5002
        %5050 = vmatprep.subr.bf16.mxu0 0
        %5051 = vmatpush1.bf16.msra.mxu0 %v5003
        %5052 = vmatprep.mubr.bf16.mxu0 %v4855
        %5053 = vmatmul.mubr.bf16.gmra.mrb[0].mxu0 %v4854
        %v5054 = vpop.f32.mrb[0].mxu0
        %v5055 = vadd.f32 %v4922, %v5054
        %v5056 = vpop.f32.mrb[0].mxu0
        %v5057 = vpop.f32.mrb[0].mxu0
        %v5058 = vadd.f32 %v4922, %v5057
        %v5059 = vpop.f32.mrb[0].mxu0
        %5060 = vmatprep.mubr.bf16.mxu0 %v4857
        %5061 = vmatmul.mubr.bf16.gmra.mrb[0].mxu0 %v4856
        %v5062 = vpop.f32.mrb[0].mxu0
        %v5063 = vadd.f32 %v4922, %v5062
        %v5064 = vpop.f32.mrb[0].mxu0
        %v5065 = vpop.f32.mrb[0].mxu0
        %v5066 = vadd.f32 %v4922, %v5065
        %v5067 = vpop.f32.mrb[0].mxu0
        %5068 = vmatprep.mubr.bf16.mxu0 %v4859
        %5069 = vmatmul.mubr.bf16.gmra.mrb[0].mxu0 %v4858
        %v5070 = vpop.f32.mrb[0].mxu0
        %v5071 = vadd.f32 %v4922, %v5070
        %v5072 = vpop.f32.mrb[0].mxu0
        %v5073 = vpop.f32.mrb[0].mxu0
        %v5074 = vadd.f32 %v4922, %v5073
        %v5075 = vpop.f32.mrb[0].mxu0
        %5076 = vmatprep.mubr.bf16.mxu0 %v4861
        %5077 = vmatmul.mubr.bf16.gmra.mrb[0].mxu0 %v4860
        %v5078 = vpop.f32.mrb[0].mxu0
        %v5079 = vadd.f32 %v4922, %v5078
        %v5080 = vpop.f32.mrb[0].mxu0
        %v5081 = vpop.f32.mrb[0].mxu0
        %v5082 = vadd.f32 %v4922, %v5081
        %v5083 = vpop.f32.mrb[0].mxu0
        %5084 = vmatprep.mubr.bf16.mxu0 %v4863
        %5085 = vmatmul.mubr.bf16.gmra.mrb[0].mxu0 %v4862
        %v5086 = vpop.f32.mrb[0].mxu0
        %v5087 = vadd.f32 %v4922, %v5086
        %v5088 = vpop.f32.mrb[0].mxu0
        %v5089 = vpop.f32.mrb[0].mxu0
        %v5090 = vadd.f32 %v4922, %v5089
        %v5091 = vpop.f32.mrb[0].mxu0
        %5092 = vmatprep.mubr.bf16.mxu0 %v4865
        %5093 = vmatmul.mubr.bf16.gmra.mrb[0].mxu0 %v4864
        %v5094 = vpop.f32.mrb[0].mxu0
        %v5095 = vadd.f32 %v4922, %v5094
        %v5096 = vpop.f32.mrb[0].mxu0
        %v5097 = vpop.f32.mrb[0].mxu0
        %v5098 = vadd.f32 %v4922, %v5097
        %v5099 = vpop.f32.mrb[0].mxu0
        %5100 = vmatprep.mubr.bf16.mxu0 %v4867
        %5101 = vmatmul.mubr.bf16.gmra.mrb[0].mxu0 %v4866
        %v5102 = vpop.f32.mrb[0].mxu0
        %v5103 = vadd.f32 %v4922, %v5102
        %v5104 = vpop.f32.mrb[0].mxu0
        %v5105 = vpop.f32.mrb[0].mxu0
        %v5106 = vadd.f32 %v4922, %v5105
        %v5107 = vpop.f32.mrb[0].mxu0
        %5108 = vmatprep.mubr.bf16.mxu0 %v4869
        %5109 = vmatmul.mubr.bf16.gmra.mrb[0].mxu0 %v4868
        %v5110 = vpop.f32.mrb[0].mxu0
        %v5111 = vadd.f32 %v4922, %v5110
        %v5112 = vpop.f32.mrb[0].mxu0
        %v5113 = vpop.f32.mrb[0].mxu0
        %v5114 = vadd.f32 %v4922, %v5113
        %v5115 = vpop.f32.mrb[0].mxu0
        %5116 = vmatprep.mubr.bf16.mxu0 %v4871
        %5117 = vmatmul.mubr.bf16.gmra.mrb[0].mxu0 %v4870
        %v5118 = vpop.f32.mrb[0].mxu0
        %v5119 = vadd.f32 %v4922, %v5118
        %v5120 = vpop.f32.mrb[0].mxu0
        %v5121 = vpop.f32.mrb[0].mxu0
        %v5122 = vadd.f32 %v4922, %v5121
        %v5123 = vpop.f32.mrb[0].mxu0
        %5124 = vmatprep.mubr.bf16.mxu0 %v4873
        %5125 = vmatmul.mubr.bf16.gmra.mrb[0].mxu0 %v4872
        %v5126 = vpop.f32.mrb[0].mxu0
        %v5127 = vadd.f32 %v4922, %v5126
        %v5128 = vpop.f32.mrb[0].mxu0
        %v5129 = vpop.f32.mrb[0].mxu0
        %v5130 = vadd.f32 %v4922, %v5129
        %v5131 = vpop.f32.mrb[0].mxu0
        %5132 = vmatprep.mubr.bf16.mxu0 %v4875
        %5133 = vmatmul.mubr.bf16.gmra.mrb[0].mxu0 %v4874
        %v5134 = vpop.f32.mrb[0].mxu0
        %v5135 = vadd.f32 %v4922, %v5134
        %v5136 = vpop.f32.mrb[0].mxu0
        %v5137 = vpop.f32.mrb[0].mxu0
        %v5138 = vadd.f32 %v4922, %v5137
        %v5139 = vpop.f32.mrb[0].mxu0
        %5140 = vmatprep.mubr.bf16.mxu0 %v4877
        %5141 = vmatmul.mubr.bf16.gmra.mrb[0].mxu0 %v4876
        %v5142 = vpop.f32.mrb[0].mxu0
        %v5143 = vadd.f32 %v4922, %v5142
        %v5144 = vpop.f32.mrb[0].mxu0
        %v5145 = vpop.f32.mrb[0].mxu0
        %v5146 = vadd.f32 %v4922, %v5145
        %v5147 = vpop.f32.mrb[0].mxu0
        %5148 = vmatprep.mubr.bf16.mxu0 %v4879
        %5149 = vmatmul.mubr.bf16.gmra.mrb[0].mxu0 %v4878
        %v5150 = vpop.f32.mrb[0].mxu0
        %v5151 = vadd.f32 %v4922, %v5150
        %v5152 = vpop.f32.mrb[0].mxu0
        %v5153 = vpop.f32.mrb[0].mxu0
        %v5154 = vadd.f32 %v4922, %v5153
        %v5155 = vpop.f32.mrb[0].mxu0
        %5156 = vmatprep.mubr.bf16.mxu0 %v4881
        %5157 = vmatmul.mubr.bf16.gmra.mrb[0].mxu0 %v4880
        %v5158 = vpop.f32.mrb[0].mxu0
        %v5159 = vadd.f32 %v4922, %v5158
        %v5160 = vpop.f32.mrb[0].mxu0
        %v5161 = vpop.f32.mrb[0].mxu0
        %v5162 = vadd.f32 %v4922, %v5161
        %v5163 = vpop.f32.mrb[0].mxu0
        %5164 = vmatprep.mubr.bf16.mxu0 %v4883
        %5165 = vmatmul.mubr.bf16.gmra.mrb[0].mxu0 %v4882
        %v5166 = vpop.f32.mrb[0].mxu0
        %v5167 = vadd.f32 %v4922, %v5166
        %v5168 = vpop.f32.mrb[0].mxu0
        %v5169 = vpop.f32.mrb[0].mxu0
        %v5170 = vadd.f32 %v4922, %v5169
        %v5171 = vpop.f32.mrb[0].mxu0
        %5172 = vmatprep.mubr.bf16.mxu0 %v4885
        %5173 = vmatmul.mubr.bf16.gmra.mrb[0].mxu0 %v4884
        %v5174 = vpop.f32.mrb[0].mxu0
        %v5175 = vadd.f32 %v4922, %v5174
        %v5176 = vpop.f32.mrb[0].mxu0
        %v5177 = vpop.f32.mrb[0].mxu0
        %v5178 = vadd.f32 %v4922, %v5177
        %v5179 = vpop.f32.mrb[0].mxu0
        %5180 = vdwg.mxu0
        %v5181 = vpack.c.bf16 %v5058, %v5055
        %v5182 = vpack.c.bf16 %v5066, %v5063
        %v5183 = vpack.c.bf16 %v5074, %v5071
        %v5184 = vpack.c.bf16 %v5082, %v5079
        %v5185 = vpack.c.bf16 %v5090, %v5087
        %v5186 = vpack.c.bf16 %v5098, %v5095
        %v5187 = vpack.c.bf16 %v5106, %v5103
        %v5188 = vpack.c.bf16 %v5114, %v5111
        %v5189 = vpack.c.bf16 %v5122, %v5119
        %v5190 = vpack.c.bf16 %v5130, %v5127
        %v5191 = vpack.c.bf16 %v5138, %v5135
        %v5192 = vpack.c.bf16 %v5146, %v5143
        %v5193 = vpack.c.bf16 %v5154, %v5151
        %v5194 = vpack.c.bf16 %v5162, %v5159
        %v5195 = vpack.c.bf16 %v5170, %v5167
        %v5196 = vpack.c.bf16 %v5178, %v5175
        %v5213 = vunpack.c.l.b16 %v5181
        %v5214 = vunpack.c.h.b16 %v5181
        %v5215 = vunpack.c.l.b16 %v5182
        %v5216 = vunpack.c.h.b16 %v5182
        %v5217 = vunpack.c.l.b16 %v5183
        %v5218 = vunpack.c.h.b16 %v5183
        %v5219 = vunpack.c.l.b16 %v5184
        %v5220 = vunpack.c.h.b16 %v5184
        %v5221 = vunpack.c.l.b16 %v5185
        %v5222 = vunpack.c.h.b16 %v5185
        %v5223 = vunpack.c.l.b16 %v5186
        %v5224 = vunpack.c.h.b16 %v5186
        %v5225 = vunpack.c.l.b16 %v5187
        %v5226 = vunpack.c.h.b16 %v5187
        %v5227 = vunpack.c.l.b16 %v5188
        %v5228 = vunpack.c.h.b16 %v5188
        %v5229 = vunpack.c.l.b16 %v5189
        %v5230 = vunpack.c.h.b16 %v5189
        %v5231 = vunpack.c.l.b16 %v5190
        %v5232 = vunpack.c.h.b16 %v5190
        %v5233 = vunpack.c.l.b16 %v5191
        %v5234 = vunpack.c.h.b16 %v5191
        %v5235 = vunpack.c.l.b16 %v5192
        %v5236 = vunpack.c.h.b16 %v5192
        %v5237 = vunpack.c.l.b16 %v5193
        %v5238 = vunpack.c.h.b16 %v5193
        %v5239 = vunpack.c.l.b16 %v5194
        %v5240 = vunpack.c.h.b16 %v5194
        %v5241 = vunpack.c.l.b16 %v5195
        %v5242 = vunpack.c.h.b16 %v5195
        %v5243 = vunpack.c.l.b16 %v5196
        %v5244 = vunpack.c.h.b16 %v5196
        %v5245 = vpack.c.b16 %v5213, %v5213
        %v5246 = vpack.c.b16 %v5214, %v5214
        %v5247 = vpack.c.b16 %v5215, %v5215
        %v5248 = vpack.c.b16 %v5216, %v5216
        %v5249 = vpack.c.b16 %v5217, %v5217
        %v5250 = vpack.c.b16 %v5218, %v5218
        %v5251 = vpack.c.b16 %v5219, %v5219
        %v5252 = vpack.c.b16 %v5220, %v5220
        %v5253 = vpack.c.b16 %v5221, %v5221
        %v5254 = vpack.c.b16 %v5222, %v5222
        %v5255 = vpack.c.b16 %v5223, %v5223
        %v5256 = vpack.c.b16 %v5224, %v5224
        %v5257 = vpack.c.b16 %v5225, %v5225
        %v5258 = vpack.c.b16 %v5226, %v5226
        %v5259 = vpack.c.b16 %v5227, %v5227
        %v5260 = vpack.c.b16 %v5228, %v5228
        %v5261 = vpack.c.b16 %v5229, %v5229
        %v5262 = vpack.c.b16 %v5230, %v5230
        %v5263 = vpack.c.b16 %v5231, %v5231
        %v5264 = vpack.c.b16 %v5232, %v5232
        %v5265 = vpack.c.b16 %v5233, %v5233
        %v5266 = vpack.c.b16 %v5234, %v5234
        %v5267 = vpack.c.b16 %v5235, %v5235
        %v5268 = vpack.c.b16 %v5236, %v5236
        %v5269 = vpack.c.b16 %v5237, %v5237
        %v5270 = vpack.c.b16 %v5238, %v5238
        %v5271 = vpack.c.b16 %v5239, %v5239
        %v5272 = vpack.c.b16 %v5240, %v5240
        %v5273 = vpack.c.b16 %v5241, %v5241
        %v5274 = vpack.c.b16 %v5242, %v5242
        %v5275 = vpack.c.b16 %v5243, %v5243
        %v5276 = vpack.c.b16 %v5244, %v5244
        %5309 = vst [vmem:[%s260] sm:$0xf] %v5245
        %5310 = vst [vmem:[%s260 + $0x4] sm:$0xf] %v5246
        %5311 = vst [vmem:[%s260 + $0x8] sm:$0xf] %v5247
        %5312 = vst [vmem:[%s260 + $0xc] sm:$0xf] %v5248
        %5313 = vst [vmem:[%s260 + $0x10] sm:$0xf] %v5249
        %5314 = vst [vmem:[%s260 + $0x14] sm:$0xf] %v5250
        %5315 = vst [vmem:[%s260 + $0x18] sm:$0xf] %v5251
        %5316 = vst [vmem:[%s260 + $0x1c] sm:$0xf] %v5252
        %5317 = vst [vmem:[%s260 + $0x20] sm:$0xf] %v5253
        %5318 = vst [vmem:[%s260 + $0x24] sm:$0xf] %v5254
        %5319 = vst [vmem:[%s260 + $0x28] sm:$0xf] %v5255
        %5320 = vst [vmem:[%s260 + $0x2c] sm:$0xf] %v5256
        %5321 = vst [vmem:[%s260 + $0x30] sm:$0xf] %v5257
        %5322 = vst [vmem:[%s260 + $0x34] sm:$0xf] %v5258
        %5323 = vst [vmem:[%s260 + $0x38] sm:$0xf] %v5259
        %5324 = vst [vmem:[%s260 + $0x3c] sm:$0xf] %v5260
        %5325 = vst [vmem:[%s260 + $0x40] sm:$0xf] %v5261
        %5326 = vst [vmem:[%s260 + $0x44] sm:$0xf] %v5262
        %5327 = vst [vmem:[%s260 + $0x48] sm:$0xf] %v5263
        %5328 = vst [vmem:[%s260 + $0x4c] sm:$0xf] %v5264
        %5329 = vst [vmem:[%s260 + $0x50] sm:$0xf] %v5265
        %5330 = vst [vmem:[%s260 + $0x54] sm:$0xf] %v5266
        %5331 = vst [vmem:[%s260 + $0x58] sm:$0xf] %v5267
        %5332 = vst [vmem:[%s260 + $0x5c] sm:$0xf] %v5268
        %5333 = vst [vmem:[%s260 + $0x60] sm:$0xf] %v5269
        %5334 = vst [vmem:[%s260 + $0x64] sm:$0xf] %v5270
        %5335 = vst [vmem:[%s260 + $0x68] sm:$0xf] %v5271
        %5336 = vst [vmem:[%s260 + $0x6c] sm:$0xf] %v5272
        %5337 = vst [vmem:[%s260 + $0x70] sm:$0xf] %v5273
        %5338 = vst [vmem:[%s260 + $0x74] sm:$0xf] %v5274
        %5339 = vst [vmem:[%s260 + $0x78] sm:$0xf] %v5275
        %5340 = vst [vmem:[%s260 + $0x7c] sm:$0xf] %v5276
        %s5341 = sand.u32 %s160, 1
        %s5342 = scalar_lea.sflag [#allocation4], %s5341
        %s5343 = sand.u32 %s160, 1
        %s5344 = smul.addr %s5343, 128
        %s5345 = scalar_lea.vmem [#allocation5], %s5344
        // Predicated region
        $region49: #{tpu_custom_call.1} parent=43 // pred_check
          %p5346 = pneg %p170
        $region50: #{tpu_custom_call.1} parent=43 // pred_check_branch
          %5348 = sbr.rel (%p5346) target = $region52
        $region51: #{tpu_custom_call.1} parent=43 // pred_region
          %s5349 = smul.u32 32, %s21
          %s5351 = ssub.s32 2048, 2048
          %5352 = vsyncadd %s5342, %s5351
          %s5353 = smul.addr %s5349, 64
          %s5354 = scalar_lea.hbm %s6, %s5353
          %s5355 = sshll.u32 %s5345, 4
          %s5356 = int_to_ptr.vmem [resolvable:$true] %s5355
          %5361 = dma.vmem_to_hbm [thread:$0]  %s5356, 2048, %s5354, %s5342, 64, 64, 4
        $region52: #{tpu_custom_call.1} parent=43 // pred_fallthru
          _
      $region44: #{tpu_custom_call.1} parent=5 // pred_fallthru
        _
      %p5362 = scmp.le.s32.totalorder 2, %s16
      // Predicated region
      $region53: #{tpu_custom_call.1} parent=5 // pred_check
        %p5363 = pneg %p5362
      $region54: #{tpu_custom_call.1} parent=5 // pred_check_branch
        %5365 = sbr.rel (%p5363) target = $region56
      $region55: #{tpu_custom_call.1} parent=5 // pred_region
        %s5366 = ssub.s32 %s16, 2
        // Predicated region
        $region57: #{tpu_custom_call.1} parent=55 // pred_check
          %p5367 = pneg %p176
        $region58: #{tpu_custom_call.1} parent=55 // pred_check_branch
          %5369 = sbr.rel (%p5367) target = $region60
        $region59: #{tpu_custom_call.1} parent=55 // pred_region
          %s5370 = sand.u32 %s161, 1
          %s5371 = scalar_lea.sflag [#allocation4], %s5370
          %s5372 = sand.u32 %s161, 1
          %s5373 = smul.addr %s5372, 128
          %s5374 = scalar_lea.vmem [#allocation5], %s5373
          %5375 = dma.done %s5371, 2048
        $region60: #{tpu_custom_call.1} parent=55 // pred_fallthru
          _
      $region56: #{tpu_custom_call.1} parent=5 // pred_fallthru
        _
    $region6: #{tpu_custom_call.1} parent=1 // loop_footer
      %s20 = sadd.s32 1, %s16
    $region7: #{tpu_custom_call.1} parent=1 // loop_footer_branch
      %15 = sbr.rel target = $region3
    $region8: #{tpu_custom_call.1} parent=1 // loop_exit
      _
    %5376 = vsyncpa [#allocation3], 1
    %s5377 = scalar_lea.sflag [#allocation3], 1
    %5378 = vsyncpa %s5377, 1
    %5379 = vsyncpa [#allocation4], 1
    %s5380 = scalar_lea.sflag [#allocation4], 1
    %5381 = vsyncpa %s5380, 1

</llo_original>
